<compile_context>
chip_gen: v5e
topology: v5e:2x2
jax: 0.10.0
libtpu: 0.0.40
codegen_flags: <defaults>
</compile_context>

<pallas_src>
import functools

import jax
import jax.numpy as jnp
from jax.experimental import pallas as pl
from jax.experimental.pallas import tpu as pltpu


_VMEM = pl.BlockSpec(memory_space=pltpu.MemorySpace.VMEM)


# ----------------------------------------------------------------------------
# Kernel 1/2: conv (as im2col matmul) + bias + 2x2 max-pool + ReLU, fused
# ----------------------------------------------------------------------------
def _conv_pool_relu_kernel(p_ref, w_ref, b_ref, o_ref):
    # p_ref: (4, K, M) im2col patches, one leading slot per 2x2 pool-window position.
    # w_ref: (C_out, K); b_ref: (C_out, 1).  Output: relu(maxpool(conv + bias)) as (C_out, M).
    w = w_ref[...]
    y = jnp.dot(w, p_ref[0], preferred_element_type=jnp.float32)
    for q in range(1, 4):
        y = jnp.maximum(y, jnp.dot(w, p_ref[q], preferred_element_type=jnp.float32))
    o_ref[...] = jnp.maximum(y + b_ref[...], 0.0)


def conv_pool_relu(patches_t, w_mat, b):
    c_out = w_mat.shape[0]
    m = patches_t.shape[2]
    return pl.pallas_call(
        _conv_pool_relu_kernel,
        out_shape=jax.ShapeDtypeStruct((c_out, m), jnp.float32),
        in_specs=[_VMEM, _VMEM, _VMEM],
        out_specs=_VMEM,
    )(patches_t, w_mat, b.reshape(c_out, 1))


# ----------------------------------------------------------------------------
# Kernel 3: fc_loc + affine_grid + bilinear grid_sample (zeros padding, align_corners=False)
# ----------------------------------------------------------------------------
def _fc_grid_sample_kernel(featT_ref, w1_ref, b1_ref, w2_ref, b2_ref, imgT_ref,
                           out_ref, thetaT_ref, *, n_batch, height, width):
    H, W = height, width
    P = n_batch * H * W
    f32 = jnp.float32

    # ---- fc_loc: Linear(160,32) -> ReLU -> Linear(32,6), computed transposed ----
    h1 = jnp.dot(w1_ref[...], featT_ref[...], preferred_element_type=f32) + b1_ref[...]
    h1 = jnp.maximum(h1, 0.0)                                                   # (32, N)
    thetaT = jnp.dot(w2_ref[...], h1, preferred_element_type=f32) + b2_ref[...]  # (6, N)
    thetaT_ref[...] = thetaT

    # ---- output-pixel index decode in lane-major (1, P) layout ----
    p_idx = jax.lax.broadcasted_iota(jnp.int32, (1, P), 1)
    if (W & (W - 1)) == 0 and (H & (H - 1)) == 0:
        w_idx = jnp.bitwise_and(p_idx, W - 1)
        h_idx = jnp.bitwise_and(jnp.right_shift(p_idx, W.bit_length() - 1), H - 1)
        n_idx = jnp.right_shift(p_idx, (H * W).bit_length() - 1)
    else:  # general fallback (not hit for 32x32)
        n_idx = p_idx // (H * W)
        h_idx = (p_idx - n_idx * (H * W)) // W
        w_idx = p_idx - n_idx * (H * W) - h_idx * W

    # base affine_grid coordinates, align_corners=False
    xs = (2.0 * w_idx.astype(f32) + 1.0) / float(W) - 1.0                       # (1, P)
    ys = (2.0 * h_idx.astype(f32) + 1.0) / float(H) - 1.0

    # per-pixel theta rows via a one-hot batch-select matmul: (6, N) @ (N, P)
    one_n = (jax.lax.broadcasted_iota(jnp.int32, (n_batch, P), 0) == n_idx).astype(f32)
    T = jnp.dot(thetaT, one_n, preferred_element_type=f32)                      # (6, P)

    gx = T[0:1, :] * xs + T[1:2, :] * ys + T[2:3, :]
    gy = T[3:4, :] * xs + T[4:5, :] * ys + T[5:6, :]

    # unnormalize (align_corners=False) and split into taps + bilinear weights
    ix = ((gx + 1.0) * float(W) - 1.0) * 0.5
    iy = ((gy + 1.0) * float(H) - 1.0) * 0.5
    ix0f = jnp.floor(ix)
    iy0f = jnp.floor(iy)
    wx1 = ix - ix0f
    wx0 = 1.0 - wx1
    wy1 = iy - iy0f
    wy0 = 1.0 - wy1
    ix0 = ix0f.astype(jnp.int32)
    iy0 = iy0f.astype(jnp.int32)
    ix1 = ix0 + 1
    iy1 = iy0 + 1

    vx0 = ((ix0 >= 0) & (ix0 < W)).astype(f32)
    vx1 = ((ix1 >= 0) & (ix1 < W)).astype(f32)
    vy0 = ((iy0 >= 0) & (iy0 < H)).astype(f32)
    vy1 = ((iy1 >= 0) & (iy1 < H)).astype(f32)

    # Separable bilinear weights as two one-hot matrices (weights folded in; zeros padding comes
    # from the validity masks).  Ay^T is block-diagonal over the batch -> one matmul does all N.
    row_y = jax.lax.broadcasted_iota(jnp.int32, (n_batch * H, P), 0)
    ty0 = n_idx * H + iy0
    ty1 = n_idx * H + iy1
    ayT = ((row_y == ty0).astype(f32) * (wy0 * vy0)
           + (row_y == ty1).astype(f32) * (wy1 * vy1))                          # (N*H, P)

    row_x = jax.lax.broadcasted_iota(jnp.int32, (W, P), 0)
    axT = ((row_x == ix0).astype(f32) * (wx0 * vx0)
           + (row_x == ix1).astype(f32) * (wx1 * vx1))                          # (W, P)

    # row gather (all batches at once), x-direction combine, and a 32-deep reduce on the MXU.
    g = jnp.dot(imgT_ref[...], ayT, preferred_element_type=f32)                 # (W, P)
    out_ref[...] = jnp.dot(jnp.ones((1, W), f32), g * axT,
                           preferred_element_type=f32)                          # (1, P)


def fc_affine_grid_sample(featT, fc1_w, fc1_b, fc2_w, fc2_b, imgT, n_batch, H, W):
    kernel = functools.partial(_fc_grid_sample_kernel, n_batch=n_batch, height=H, width=W)
    return pl.pallas_call(
        kernel,
        out_shape=(jax.ShapeDtypeStruct((1, n_batch * H * W), jnp.float32),
                   jax.ShapeDtypeStruct((6, n_batch), jnp.float32)),
        in_specs=[_VMEM] * 6,
        out_specs=(_VMEM, _VMEM),
    )(featT, fc1_w, fc1_b.reshape(-1, 1), fc2_w, fc2_b.reshape(-1, 1), imgT)


# ----------------------------------------------------------------------------
# Plain-JAX glue: im2col with the 2x2 pool-window offset as a leading axis (layout only, no FLOPs)
# ----------------------------------------------------------------------------
def _im2col_pooled_T(inp_cnhw, kh, kw):
    """inp: (C_in, N, H, W).  Returns patches (4, C_in*kh*kw, N*PH*PW) where the leading 4 indexes
    the 2x2 max-pool window position and PH, PW are the pooled output dims (floor)."""
    c, n, h, w = inp_cnhw.shape
    oh, ow = h - kh + 1, w - kw + 1
    ph, pw = oh // 2, ow // 2
    m = n * ph * pw
    qs = []
    for qi in range(2):
        for qj in range(2):
            ks = []
            for dh in range(kh):
                for dw in range(kw):
                    s, t = qi + dh, qj + dw
                    sl = inp_cnhw[:, :, s:s + 2 * ph - 1:2, t:t + 2 * pw - 1:2]  # (C, N, ph, pw)
                    ks.append(sl.reshape(c, m))
            k_stack = jnp.stack(ks, axis=1)                                      # (C, kh*kw, M)
            qs.append(k_stack.reshape(c * kh * kw, m))
    return jnp.stack(qs, axis=0), (n, ph, pw)                                    # (4, K, M)


def spatial_transformer_forward(x, params):
    """x: (N, 1, H, W) float32 NCHW.  Returns (net(stn(x)), theta) with net == identity."""
    N, _, H, W = x.shape
    c1 = params["conv1_w"].shape[0]
    c2 = params["conv2_w"].shape[0]

    # --- localization: Conv2d(1,8,7) -> MaxPool2 -> ReLU  (one fused kernel) ---
    p1, (_, ph1, pw1) = _im2col_pooled_T(jnp.transpose(x, (1, 0, 2, 3)), 7, 7)
    z1 = conv_pool_relu(p1, params["conv1_w"].reshape(c1, -1), params["conv1_b"])   # (8, N*13*13)

    # --- localization: Conv2d(8,10,5) -> MaxPool2 -> ReLU  (one fused kernel) ---
    p2, (_, ph2, pw2) = _im2col_pooled_T(z1.reshape(c1, N, ph1, pw1), 5, 5)
    z2 = conv_pool_relu(p2, params["conv2_w"].reshape(c2, -1), params["conv2_b"])   # (10, N*4*4)

    # features, transposed, in PyTorch NCHW flatten order: featT[c*16 + i*4 + j, n]
    featT = jnp.transpose(z2.reshape(c2, N, ph2 * pw2), (0, 2, 1)).reshape(c2 * ph2 * pw2, N)

    # image transposed for the sampler's row gather: imgT[x, n*H + y] = x[n, 0, y, x]
    imgT = jnp.transpose(x[:, 0, :, :], (2, 0, 1)).reshape(W, N * H)

    # --- fc_loc + affine_grid + grid_sample (one fused kernel) ---
    out_flat, thetaT = fc_affine_grid_sample(
        featT, params["fc1_w"], params["fc1_b"], params["fc2_w"], params["fc2_b"],
        imgT, N, H, W)

    x_out = out_flat.reshape(N, 1, H, W)
    theta = jnp.transpose(thetaT, (1, 0))                                        # (N, 6)
    # TODO(synk): self.net is an externally supplied submodule (unknown here); applied as identity.
    return x_out, theta


# ----------------------------------------------------------------------------
# Pure-JAX/XLA reference (for the self-check only)
# ----------------------------------------------------------------------------
def _ref_forward(x, params):
    N, _, H, W = x.shape
    dn = ("NCHW", "OIHW", "NCHW")
    hp = jax.lax.Precision.HIGHEST
    y = jax.lax.conv_general_dilated(x, params["conv1_w"], (1, 1), "VALID",
                                     dimension_numbers=dn, precision=hp)
    y = y + params["conv1_b"].reshape(1, -1, 1, 1)
    y = jax.lax.reduce_window(y, -jnp.inf, jax.lax.max, (1, 1, 2, 2), (1, 1, 2, 2), "VALID")
    y = jnp.maximum(y, 0.0)
    y = jax.lax.conv_general_dilated(y, params["conv2_w"], (1, 1), "VALID",
                                     dimension_numbers=dn, precision=hp)
    y = y + params["conv2_b"].reshape(1, -1, 1, 1)
    y = jax.lax.reduce_window(y, -jnp.inf, jax.lax.max, (1, 1, 2, 2), (1, 1, 2, 2), "VALID")
    y = jnp.maximum(y, 0.0)
    feat = y.reshape(N, -1)
    h1 = jnp.maximum(jnp.dot(feat, params["fc1_w"].T, precision=hp) + params["fc1_b"], 0.0)
    theta = jnp.dot(h1, params["fc2_w"].T, precision=hp) + params["fc2_b"]

    xs = (2.0 * jnp.arange(W, dtype=jnp.float32) + 1.0) / W - 1.0
    ys = (2.0 * jnp.arange(H, dtype=jnp.float32) + 1.0) / H - 1.0
    gx = (theta[:, 0][:, None, None] * xs[None, None, :]
          + theta[:, 1][:, None, None] * ys[None, :, None] + theta[:, 2][:, None, None])
    gy = (theta[:, 3][:, None, None] * xs[None, None, :]
          + theta[:, 4][:, None, None] * ys[None, :, None] + theta[:, 5][:, None, None])
    ix = ((gx + 1.0) * W - 1.0) * 0.5
    iy = ((gy + 1.0) * H - 1.0) * 0.5
    ix0 = jnp.floor(ix)
    iy0 = jnp.floor(iy)
    wx1 = ix - ix0
    wy1 = iy - iy0
    img = x[:, 0]

    def tap(iyf, ixf, wgt):
        iyi = iyf.astype(jnp.int32)
        ixi = ixf.astype(jnp.int32)
        valid = ((iyi >= 0) & (iyi < H) & (ixi >= 0) & (ixi < W)).astype(jnp.float32)
        iyc = jnp.clip(iyi, 0, H - 1)
        ixc = jnp.clip(ixi, 0, W - 1)
        vals = jax.vmap(lambda im, yy, xx: im[yy, xx])(img, iyc, ixc)
        return wgt * valid * vals

    out = (tap(iy0, ix0, (1.0 - wy1) * (1.0 - wx1))
           + tap(iy0, ix0 + 1.0, (1.0 - wy1) * wx1)
           + tap(iy0 + 1.0, ix0, wy1 * (1.0 - wx1))
           + tap(iy0 + 1.0, ix0 + 1.0, wy1 * wx1))
    return out[:, None, :, :], theta


# ----------------------------------------------------------------------------
if __name__ == "__main__":
    key = jax.random.PRNGKey(0)
    k1, k2, k3, k4, k5, k6, k7, kx = jax.random.split(key, 8)
    params = {
        "conv1_w": 0.1 * jax.random.normal(k1, (8, 1, 7, 7), jnp.float32),
        "conv1_b": 0.1 * jax.random.normal(k2, (8,), jnp.float32),
        "conv2_w": 0.1 * jax.random.normal(k3, (10, 8, 5, 5), jnp.float32),
        "conv2_b": 0.1 * jax.random.normal(k4, (10,), jnp.float32),
        "fc1_w": 0.1 * jax.random.normal(k5, (32, 160), jnp.float32),
        "fc1_b": 0.1 * jax.random.normal(k6, (32,), jnp.float32),
        # fc_loc[2]: weight zeroed, bias = identity affine transform (as in the module __init__)
        "fc2_w": jnp.zeros((6, 32), jnp.float32),
        "fc2_b": jnp.array([1.0, 0.0, 0.0, 0.0, 1.0, 0.0], jnp.float32),
    }

    # Input: N=2, C=1, H=W=32 (32x32 -> conv7 -> pool -> conv5 -> pool gives the 10*4*4 flatten)
    x = jax.random.normal(kx, (2, 1, 32, 32), jnp.float32)

    fwd = jax.jit(spatial_transformer_forward)
    x_out, theta = fwd(x, params)
    jax.block_until_ready((x_out, theta))

    # Check 1: module-init fc_loc (zero weight, identity bias) -> theta == identity and the
    # grid_sample (align_corners=False) must reproduce the input exactly.
    ident = jnp.tile(jnp.array([1.0, 0.0, 0.0, 0.0, 1.0, 0.0], jnp.float32), (2, 1))
    assert jnp.allclose(theta, ident, atol=1e-5), "theta mismatch"
    assert jnp.allclose(x_out, x, atol=1e-4), "grid_sample(identity) mismatch"

    # Check 2: non-identity theta (random fc2 weight) against a pure-JAX reference
    # (exercises the bilinear interpolation + zeros-padding path).
    params2 = dict(params)
    params2["fc2_w"] = 0.05 * jax.random.normal(k7, (6, 32), jnp.float32)
    x_out2, theta2 = fwd(x, params2)
    x_ref2, theta_ref2 = jax.jit(_ref_forward)(x, params2)
    jax.block_until_ready((x_out2, theta2, x_ref2, theta_ref2))
    assert jnp.allclose(theta2, theta_ref2, atol=1e-3), "theta vs reference mismatch"
    assert jnp.allclose(x_out2, x_ref2, atol=1e-3), "grid_sample vs reference mismatch"

    print("KERNEL_OK")
</pallas_src>

<mosaic_0001>
module attributes {stable_mosaic.version = 11 : i64} {
  func.func @_conv_pool_relu_kernel(%arg0: memref<4x49x338xf32, #tpu.memory_space<vmem>>, %arg1: memref<8x49xf32, #tpu.memory_space<vmem>>, %arg2: memref<8x1xf32, #tpu.memory_space<vmem>>, %arg3: memref<8x338xf32, #tpu.memory_space<vmem>>) attributes {dimension_semantics = [], scalar_prefetch = 0 : i64, scratch_operands = 0 : i64, tpu.core_type = #tpu.core_type<tc>} {
    %c0 = arith.constant 0 : index
    %c0_0 = arith.constant 0 : index
    %0 = vector.load %arg1[%c0, %c0_0] : memref<8x49xf32, #tpu.memory_space<vmem>>, vector<8x49xf32>
    %c0_1 = arith.constant 0 : index
    %c0_2 = arith.constant 0 : index
    %c0_3 = arith.constant 0 : index
    %1 = vector.load %arg0[%c0_1, %c0_2, %c0_3] : memref<4x49x338xf32, #tpu.memory_space<vmem>>, vector<1x49x338xf32>
    %2 = vector.shape_cast %1 : vector<1x49x338xf32> to vector<49x338xf32>
    %cst = arith.constant dense<0.000000e+00> : vector<8x338xf32>
    %3 = tpu.matmul %0, %2, %cst {dimension_numbers = #tpu.dot_dimension_numbers<[1], [0], [0], [1], [0, 0, 1, 1], [], []>} : vector<8x49xf32>, vector<49x338xf32>, vector<8x338xf32> -> vector<8x338xf32>
    %c1 = arith.constant 1 : index
    %c0_4 = arith.constant 0 : index
    %c0_5 = arith.constant 0 : index
    %4 = vector.load %arg0[%c1, %c0_4, %c0_5] : memref<4x49x338xf32, #tpu.memory_space<vmem>>, vector<1x49x338xf32>
    %5 = vector.shape_cast %4 : vector<1x49x338xf32> to vector<49x338xf32>
    %cst_6 = arith.constant dense<0.000000e+00> : vector<8x338xf32>
    %6 = tpu.matmul %0, %5, %cst_6 {dimension_numbers = #tpu.dot_dimension_numbers<[1], [0], [0], [1], [0, 0, 1, 1], [], []>} : vector<8x49xf32>, vector<49x338xf32>, vector<8x338xf32> -> vector<8x338xf32>
    %7 = arith.maximumf %3, %6 : vector<8x338xf32>
    %c2 = arith.constant 2 : index
    %c0_7 = arith.constant 0 : index
    %c0_8 = arith.constant 0 : index
    %8 = vector.load %arg0[%c2, %c0_7, %c0_8] : memref<4x49x338xf32, #tpu.memory_space<vmem>>, vector<1x49x338xf32>
    %9 = vector.shape_cast %8 : vector<1x49x338xf32> to vector<49x338xf32>
    %cst_9 = arith.constant dense<0.000000e+00> : vector<8x338xf32>
    %10 = tpu.matmul %0, %9, %cst_9 {dimension_numbers = #tpu.dot_dimension_numbers<[1], [0], [0], [1], [0, 0, 1, 1], [], []>} : vector<8x49xf32>, vector<49x338xf32>, vector<8x338xf32> -> vector<8x338xf32>
    %11 = arith.maximumf %7, %10 : vector<8x338xf32>
    %c3 = arith.constant 3 : index
    %c0_10 = arith.constant 0 : index
    %c0_11 = arith.constant 0 : index
    %12 = vector.load %arg0[%c3, %c0_10, %c0_11] : memref<4x49x338xf32, #tpu.memory_space<vmem>>, vector<1x49x338xf32>
    %13 = vector.shape_cast %12 : vector<1x49x338xf32> to vector<49x338xf32>
    %cst_12 = arith.constant dense<0.000000e+00> : vector<8x338xf32>
    %14 = tpu.matmul %0, %13, %cst_12 {dimension_numbers = #tpu.dot_dimension_numbers<[1], [0], [0], [1], [0, 0, 1, 1], [], []>} : vector<8x49xf32>, vector<49x338xf32>, vector<8x338xf32> -> vector<8x338xf32>
    %15 = arith.maximumf %11, %14 : vector<8x338xf32>
    %c0_13 = arith.constant 0 : index
    %c0_14 = arith.constant 0 : index
    %16 = vector.load %arg2[%c0_13, %c0_14] : memref<8x1xf32, #tpu.memory_space<vmem>>, vector<8x1xf32>
    %17 = vector.broadcast %16 : vector<8x1xf32> to vector<8x338xf32>
    %18 = arith.addf %15, %17 : vector<8x338xf32>
    %cst_15 = arith.constant 0.000000e+00 : f32
    %19 = vector.broadcast %cst_15 : f32 to vector<8x338xf32>
    %20 = arith.maximumf %18, %19 : vector<8x338xf32>
    %c0_16 = arith.constant 0 : index
    %c0_17 = arith.constant 0 : index
    %21 = vector.load %arg3[%c0_16, %c0_17] : memref<8x338xf32, #tpu.memory_space<vmem>>, vector<8x338xf32>
    tpu.vector_store %arg3[%c0_16, %c0_17], %20 {strides = array<i32>} : memref<8x338xf32, #tpu.memory_space<vmem>>, vector<8x338xf32>,
    return
  }
}

module attributes {stable_mosaic.version = 11 : i64} {
  func.func @_conv_pool_relu_kernel(%arg0: memref<4x200x32xf32, #tpu.memory_space<vmem>>, %arg1: memref<10x200xf32, #tpu.memory_space<vmem>>, %arg2: memref<10x1xf32, #tpu.memory_space<vmem>>, %arg3: memref<10x32xf32, #tpu.memory_space<vmem>>) attributes {dimension_semantics = [], scalar_prefetch = 0 : i64, scratch_operands = 0 : i64, tpu.core_type = #tpu.core_type<tc>} {
    %c0 = arith.constant 0 : index
    %c0_0 = arith.constant 0 : index
    %0 = vector.load %arg1[%c0, %c0_0] : memref<10x200xf32, #tpu.memory_space<vmem>>, vector<10x200xf32>
    %c0_1 = arith.constant 0 : index
    %c0_2 = arith.constant 0 : index
    %c0_3 = arith.constant 0 : index
    %1 = vector.load %arg0[%c0_1, %c0_2, %c0_3] : memref<4x200x32xf32, #tpu.memory_space<vmem>>, vector<1x200x32xf32>
    %2 = vector.shape_cast %1 : vector<1x200x32xf32> to vector<200x32xf32>
    %cst = arith.constant dense<0.000000e+00> : vector<10x32xf32>
    %3 = tpu.matmul %0, %2, %cst {dimension_numbers = #tpu.dot_dimension_numbers<[1], [0], [0], [1], [0, 0, 1, 1], [], []>} : vector<10x200xf32>, vector<200x32xf32>, vector<10x32xf32> -> vector<10x32xf32>
    %c1 = arith.constant 1 : index
    %c0_4 = arith.constant 0 : index
    %c0_5 = arith.constant 0 : index
    %4 = vector.load %arg0[%c1, %c0_4, %c0_5] : memref<4x200x32xf32, #tpu.memory_space<vmem>>, vector<1x200x32xf32>
    %5 = vector.shape_cast %4 : vector<1x200x32xf32> to vector<200x32xf32>
    %cst_6 = arith.constant dense<0.000000e+00> : vector<10x32xf32>
    %6 = tpu.matmul %0, %5, %cst_6 {dimension_numbers = #tpu.dot_dimension_numbers<[1], [0], [0], [1], [0, 0, 1, 1], [], []>} : vector<10x200xf32>, vector<200x32xf32>, vector<10x32xf32> -> vector<10x32xf32>
    %7 = arith.maximumf %3, %6 : vector<10x32xf32>
    %c2 = arith.constant 2 : index
    %c0_7 = arith.constant 0 : index
    %c0_8 = arith.constant 0 : index
    %8 = vector.load %arg0[%c2, %c0_7, %c0_8] : memref<4x200x32xf32, #tpu.memory_space<vmem>>, vector<1x200x32xf32>
    %9 = vector.shape_cast %8 : vector<1x200x32xf32> to vector<200x32xf32>
    %cst_9 = arith.constant dense<0.000000e+00> : vector<10x32xf32>
    %10 = tpu.matmul %0, %9, %cst_9 {dimension_numbers = #tpu.dot_dimension_numbers<[1], [0], [0], [1], [0, 0, 1, 1], [], []>} : vector<10x200xf32>, vector<200x32xf32>, vector<10x32xf32> -> vector<10x32xf32>
    %11 = arith.maximumf %7, %10 : vector<10x32xf32>
    %c3 = arith.constant 3 : index
    %c0_10 = arith.constant 0 : index
    %c0_11 = arith.constant 0 : index
    %12 = vector.load %arg0[%c3, %c0_10, %c0_11] : memref<4x200x32xf32, #tpu.memory_space<vmem>>, vector<1x200x32xf32>
    %13 = vector.shape_cast %12 : vector<1x200x32xf32> to vector<200x32xf32>
    %cst_12 = arith.constant dense<0.000000e+00> : vector<10x32xf32>
    %14 = tpu.matmul %0, %13, %cst_12 {dimension_numbers = #tpu.dot_dimension_numbers<[1], [0], [0], [1], [0, 0, 1, 1], [], []>} : vector<10x200xf32>, vector<200x32xf32>, vector<10x32xf32> -> vector<10x32xf32>
    %15 = arith.maximumf %11, %14 : vector<10x32xf32>
    %c0_13 = arith.constant 0 : index
    %c0_14 = arith.constant 0 : index
    %16 = vector.load %arg2[%c0_13, %c0_14] : memref<10x1xf32, #tpu.memory_space<vmem>>, vector<10x1xf32>
    %17 = vector.broadcast %16 : vector<10x1xf32> to vector<10x32xf32>
    %18 = arith.addf %15, %17 : vector<10x32xf32>
    %cst_15 = arith.constant 0.000000e+00 : f32
    %19 = vector.broadcast %cst_15 : f32 to vector<10x32xf32>
    %20 = arith.maximumf %18, %19 : vector<10x32xf32>
    %c0_16 = arith.constant 0 : index
    %c0_17 = arith.constant 0 : index
    %21 = vector.load %arg3[%c0_16, %c0_17] : memref<10x32xf32, #tpu.memory_space<vmem>>, vector<10x32xf32>
    tpu.vector_store %arg3[%c0_16, %c0_17], %20 {strides = array<i32>} : memref<10x32xf32, #tpu.memory_space<vmem>>, vector<10x32xf32>,
    return
  }
}

module attributes {stable_mosaic.version = 11 : i64} {
  func.func @_fc_grid_sample_kernel(%arg0: memref<160x2xf32, #tpu.memory_space<vmem>>, %arg1: memref<32x160xf32, #tpu.memory_space<vmem>>, %arg2: memref<32x1xf32, #tpu.memory_space<vmem>>, %arg3: memref<6x32xf32, #tpu.memory_space<vmem>>, %arg4: memref<6x1xf32, #tpu.memory_space<vmem>>, %arg5: memref<32x64xf32, #tpu.memory_space<vmem>>, %arg6: memref<1x2048xf32, #tpu.memory_space<vmem>>, %arg7: memref<6x2xf32, #tpu.memory_space<vmem>>) attributes {dimension_semantics = [], scalar_prefetch = 0 : i64, scratch_operands = 0 : i64, tpu.core_type = #tpu.core_type<tc>} {
    %c0 = arith.constant 0 : index
    %c0_0 = arith.constant 0 : index
    %0 = vector.load %arg1[%c0, %c0_0] : memref<32x160xf32, #tpu.memory_space<vmem>>, vector<32x160xf32>
    %c0_1 = arith.constant 0 : index
    %c0_2 = arith.constant 0 : index
    %1 = vector.load %arg0[%c0_1, %c0_2] : memref<160x2xf32, #tpu.memory_space<vmem>>, vector<160x2xf32>
    %cst = arith.constant dense<0.000000e+00> : vector<32x2xf32>
    %2 = tpu.matmul %0, %1, %cst {dimension_numbers = #tpu.dot_dimension_numbers<[1], [0], [0], [1], [0, 0, 1, 1], [], []>} : vector<32x160xf32>, vector<160x2xf32>, vector<32x2xf32> -> vector<32x2xf32>
    %c0_3 = arith.constant 0 : index
    %c0_4 = arith.constant 0 : index
    %3 = vector.load %arg2[%c0_3, %c0_4] : memref<32x1xf32, #tpu.memory_space<vmem>>, vector<32x1xf32>
    %4 = vector.broadcast %3 : vector<32x1xf32> to vector<32x2xf32>
    %5 = arith.addf %2, %4 : vector<32x2xf32>
    %cst_5 = arith.constant 0.000000e+00 : f32
    %6 = vector.broadcast %cst_5 : f32 to vector<32x2xf32>
    %7 = arith.maximumf %5, %6 : vector<32x2xf32>
    %c0_6 = arith.constant 0 : index
    %c0_7 = arith.constant 0 : index
    %8 = vector.load %arg3[%c0_6, %c0_7] : memref<6x32xf32, #tpu.memory_space<vmem>>, vector<6x32xf32>
    %cst_8 = arith.constant dense<0.000000e+00> : vector<6x2xf32>
    %9 = tpu.matmul %8, %7, %cst_8 {dimension_numbers = #tpu.dot_dimension_numbers<[1], [0], [0], [1], [0, 0, 1, 1], [], []>} : vector<6x32xf32>, vector<32x2xf32>, vector<6x2xf32> -> vector<6x2xf32>
    %c0_9 = arith.constant 0 : index
    %c0_10 = arith.constant 0 : index
    %10 = vector.load %arg4[%c0_9, %c0_10] : memref<6x1xf32, #tpu.memory_space<vmem>>, vector<6x1xf32>
    %11 = vector.broadcast %10 : vector<6x1xf32> to vector<6x2xf32>
    %12 = arith.addf %9, %11 : vector<6x2xf32>
    %c0_11 = arith.constant 0 : index
    %c0_12 = arith.constant 0 : index
    %13 = vector.load %arg7[%c0_11, %c0_12] : memref<6x2xf32, #tpu.memory_space<vmem>>, vector<6x2xf32>
    tpu.vector_store %arg7[%c0_11, %c0_12], %12 {strides = array<i32>} : memref<6x2xf32, #tpu.memory_space<vmem>>, vector<6x2xf32>,
    %14 = tpu.iota {dimensions = array<i32: 1>} : vector<1x2048xi32>
    %c31_i32 = arith.constant 31 : i32
    %15 = vector.broadcast %c31_i32 : i32 to vector<1x2048xi32>
    %16 = arith.andi %14, %15 : vector<1x2048xi32>
    %c5_i32 = arith.constant 5 : i32
    %17 = vector.broadcast %c5_i32 : i32 to vector<1x2048xi32>
    %18 = arith.shrsi %14, %17 : vector<1x2048xi32>
    %c31_i32_13 = arith.constant 31 : i32
    %19 = vector.broadcast %c31_i32_13 : i32 to vector<1x2048xi32>
    %20 = arith.andi %18, %19 : vector<1x2048xi32>
    %c10_i32 = arith.constant 10 : i32
    %21 = vector.broadcast %c10_i32 : i32 to vector<1x2048xi32>
    %22 = arith.shrsi %14, %21 : vector<1x2048xi32>
    %23 = arith.sitofp %16 : vector<1x2048xi32> to vector<1x2048xf32>
    %cst_14 = arith.constant 2.000000e+00 : f32
    %24 = vector.broadcast %cst_14 : f32 to vector<1x2048xf32>
    %25 = arith.mulf %24, %23 : vector<1x2048xf32>
    %cst_15 = arith.constant 1.000000e+00 : f32
    %26 = vector.broadcast %cst_15 : f32 to vector<1x2048xf32>
    %27 = arith.addf %25, %26 : vector<1x2048xf32>
    %cst_16 = arith.constant 3.200000e+01 : f32
    %28 = vector.broadcast %cst_16 : f32 to vector<1x2048xf32>
    %29 = arith.divf %27, %28 : vector<1x2048xf32>
    %cst_17 = arith.constant 1.000000e+00 : f32
    %30 = vector.broadcast %cst_17 : f32 to vector<1x2048xf32>
    %31 = arith.subf %29, %30 : vector<1x2048xf32>
    %32 = arith.sitofp %20 : vector<1x2048xi32> to vector<1x2048xf32>
    %cst_18 = arith.constant 2.000000e+00 : f32
    %33 = vector.broadcast %cst_18 : f32 to vector<1x2048xf32>
    %34 = arith.mulf %33, %32 : vector<1x2048xf32>
    %cst_19 = arith.constant 1.000000e+00 : f32
    %35 = vector.broadcast %cst_19 : f32 to vector<1x2048xf32>
    %36 = arith.addf %34, %35 : vector<1x2048xf32>
    %cst_20 = arith.constant 3.200000e+01 : f32
    %37 = vector.broadcast %cst_20 : f32 to vector<1x2048xf32>
    %38 = arith.divf %36, %37 : vector<1x2048xf32>
    %cst_21 = arith.constant 1.000000e+00 : f32
    %39 = vector.broadcast %cst_21 : f32 to vector<1x2048xf32>
    %40 = arith.subf %38, %39 : vector<1x2048xf32>
    %41 = tpu.iota {dimensions = array<i32: 0>} : vector<2x2048xi32>
    %42 = vector.broadcast %22 : vector<1x2048xi32> to vector<2x2048xi32>
    %43 = arith.cmpi eq, %41, %42 : vector<2x2048xi32>
    %44 = arith.extui %43 : vector<2x2048xi1> to vector<2x2048xi32>
    %45 = arith.sitofp %44 : vector<2x2048xi32> to vector<2x2048xf32>
    %cst_22 = arith.constant dense<0.000000e+00> : vector<6x2048xf32>
    %46 = tpu.matmul %12, %45, %cst_22 {dimension_numbers = #tpu.dot_dimension_numbers<[1], [0], [0], [1], [0, 0, 1, 1], [], []>} : vector<6x2xf32>, vector<2x2048xf32>, vector<6x2048xf32> -> vector<6x2048xf32>
    %47 = vector.extract_strided_slice %46 {offsets = [0, 0], sizes = [1, 2048], strides = [1, 1]} : vector<6x2048xf32> to vector<1x2048xf32>
    %48 = arith.mulf %47, %31 : vector<1x2048xf32>
    %49 = vector.extract_strided_slice %46 {offsets = [1, 0], sizes = [1, 2048], strides = [1, 1]} : vector<6x2048xf32> to vector<1x2048xf32>
    %50 = arith.mulf %49, %40 : vector<1x2048xf32>
    %51 = arith.addf %48, %50 : vector<1x2048xf32>
    %52 = vector.extract_strided_slice %46 {offsets = [2, 0], sizes = [1, 2048], strides = [1, 1]} : vector<6x2048xf32> to vector<1x2048xf32>
    %53 = arith.addf %51, %52 : vector<1x2048xf32>
    %54 = vector.extract_strided_slice %46 {offsets = [3, 0], sizes = [1, 2048], strides = [1, 1]} : vector<6x2048xf32> to vector<1x2048xf32>
    %55 = arith.mulf %54, %31 : vector<1x2048xf32>
    %56 = vector.extract_strided_slice %46 {offsets = [4, 0], sizes = [1, 2048], strides = [1, 1]} : vector<6x2048xf32> to vector<1x2048xf32>
    %57 = arith.mulf %56, %40 : vector<1x2048xf32>
    %58 = arith.addf %55, %57 : vector<1x2048xf32>
    %59 = vector.extract_strided_slice %46 {offsets = [5, 0], sizes = [1, 2048], strides = [1, 1]} : vector<6x2048xf32> to vector<1x2048xf32>
    %60 = arith.addf %58, %59 : vector<1x2048xf32>
    %cst_23 = arith.constant 1.000000e+00 : f32
    %61 = vector.broadcast %cst_23 : f32 to vector<1x2048xf32>
    %62 = arith.addf %53, %61 : vector<1x2048xf32>
    %cst_24 = arith.constant 3.200000e+01 : f32
    %63 = vector.broadcast %cst_24 : f32 to vector<1x2048xf32>
    %64 = arith.mulf %62, %63 : vector<1x2048xf32>
    %cst_25 = arith.constant 1.000000e+00 : f32
    %65 = vector.broadcast %cst_25 : f32 to vector<1x2048xf32>
    %66 = arith.subf %64, %65 : vector<1x2048xf32>
    %cst_26 = arith.constant 5.000000e-01 : f32
    %67 = vector.broadcast %cst_26 : f32 to vector<1x2048xf32>
    %68 = arith.mulf %66, %67 : vector<1x2048xf32>
    %cst_27 = arith.constant 1.000000e+00 : f32
    %69 = vector.broadcast %cst_27 : f32 to vector<1x2048xf32>
    %70 = arith.addf %60, %69 : vector<1x2048xf32>
    %cst_28 = arith.constant 3.200000e+01 : f32
    %71 = vector.broadcast %cst_28 : f32 to vector<1x2048xf32>
    %72 = arith.mulf %70, %71 : vector<1x2048xf32>
    %cst_29 = arith.constant 1.000000e+00 : f32
    %73 = vector.broadcast %cst_29 : f32 to vector<1x2048xf32>
    %74 = arith.subf %72, %73 : vector<1x2048xf32>
    %cst_30 = arith.constant 5.000000e-01 : f32
    %75 = vector.broadcast %cst_30 : f32 to vector<1x2048xf32>
    %76 = arith.mulf %74, %75 : vector<1x2048xf32>
    %77 = math.floor %68 : vector<1x2048xf32>
    %78 = math.floor %76 : vector<1x2048xf32>
    %79 = arith.subf %68, %77 : vector<1x2048xf32>
    %cst_31 = arith.constant 1.000000e+00 : f32
    %80 = vector.broadcast %cst_31 : f32 to vector<1x2048xf32>
    %81 = arith.subf %80, %79 : vector<1x2048xf32>
    %82 = arith.subf %76, %78 : vector<1x2048xf32>
    %cst_32 = arith.constant 1.000000e+00 : f32
    %83 = vector.broadcast %cst_32 : f32 to vector<1x2048xf32>
    %84 = arith.subf %83, %82 : vector<1x2048xf32>
    %85 = arith.fptosi %77 : vector<1x2048xf32> to vector<1x2048xi32>
    %86 = arith.fptosi %78 : vector<1x2048xf32> to vector<1x2048xi32>
    %c1_i32 = arith.constant 1 : i32
    %87 = vector.broadcast %c1_i32 : i32 to vector<1x2048xi32>
    %88 = arith.addi %85, %87 : vector<1x2048xi32>
    %c1_i32_33 = arith.constant 1 : i32
    %89 = vector.broadcast %c1_i32_33 : i32 to vector<1x2048xi32>
    %90 = arith.addi %86, %89 : vector<1x2048xi32>
    %c0_i32 = arith.constant 0 : i32
    %91 = vector.broadcast %c0_i32 : i32 to vector<1x2048xi32>
    %92 = arith.cmpi sge, %85, %91 : vector<1x2048xi32>
    %c32_i32 = arith.constant 32 : i32
    %93 = vector.broadcast %c32_i32 : i32 to vector<1x2048xi32>
    %94 = arith.cmpi slt, %85, %93 : vector<1x2048xi32>
    %95 = arith.andi %92, %94 : vector<1x2048xi1>
    %96 = arith.extui %95 : vector<1x2048xi1> to vector<1x2048xi32>
    %97 = arith.sitofp %96 : vector<1x2048xi32> to vector<1x2048xf32>
    %c0_i32_34 = arith.constant 0 : i32
    %98 = vector.broadcast %c0_i32_34 : i32 to vector<1x2048xi32>
    %99 = arith.cmpi sge, %88, %98 : vector<1x2048xi32>
    %c32_i32_35 = arith.constant 32 : i32
    %100 = vector.broadcast %c32_i32_35 : i32 to vector<1x2048xi32>
    %101 = arith.cmpi slt, %88, %100 : vector<1x2048xi32>
    %102 = arith.andi %99, %101 : vector<1x2048xi1>
    %103 = arith.extui %102 : vector<1x2048xi1> to vector<1x2048xi32>
    %104 = arith.sitofp %103 : vector<1x2048xi32> to vector<1x2048xf32>
    %c0_i32_36 = arith.constant 0 : i32
    %105 = vector.broadcast %c0_i32_36 : i32 to vector<1x2048xi32>
    %106 = arith.cmpi sge, %86, %105 : vector<1x2048xi32>
    %c32_i32_37 = arith.constant 32 : i32
    %107 = vector.broadcast %c32_i32_37 : i32 to vector<1x2048xi32>
    %108 = arith.cmpi slt, %86, %107 : vector<1x2048xi32>
    %109 = arith.andi %106, %108 : vector<1x2048xi1>
    %110 = arith.extui %109 : vector<1x2048xi1> to vector<1x2048xi32>
    %111 = arith.sitofp %110 : vector<1x2048xi32> to vector<1x2048xf32>
    %c0_i32_38 = arith.constant 0 : i32
    %112 = vector.broadcast %c0_i32_38 : i32 to vector<1x2048xi32>
    %113 = arith.cmpi sge, %90, %112 : vector<1x2048xi32>
    %c32_i32_39 = arith.constant 32 : i32
    %114 = vector.broadcast %c32_i32_39 : i32 to vector<1x2048xi32>
    %115 = arith.cmpi slt, %90, %114 : vector<1x2048xi32>
    %116 = arith.andi %113, %115 : vector<1x2048xi1>
    %117 = arith.extui %116 : vector<1x2048xi1> to vector<1x2048xi32>
    %118 = arith.sitofp %117 : vector<1x2048xi32> to vector<1x2048xf32>
    %119 = tpu.iota {dimensions = array<i32: 0>} : vector<64x2048xi32>
    %c32_i32_40 = arith.constant 32 : i32
    %120 = vector.broadcast %c32_i32_40 : i32 to vector<1x2048xi32>
    %121 = arith.muli %22, %120 : vector<1x2048xi32>
    %122 = arith.addi %121, %86 : vector<1x2048xi32>
    %c32_i32_41 = arith.constant 32 : i32
    %123 = vector.broadcast %c32_i32_41 : i32 to vector<1x2048xi32>
    %124 = arith.muli %22, %123 : vector<1x2048xi32>
    %125 = arith.addi %124, %90 : vector<1x2048xi32>
    %126 = vector.broadcast %122 : vector<1x2048xi32> to vector<64x2048xi32>
    %127 = arith.cmpi eq, %119, %126 : vector<64x2048xi32>
    %128 = arith.extui %127 : vector<64x2048xi1> to vector<64x2048xi32>
    %129 = arith.sitofp %128 : vector<64x2048xi32> to vector<64x2048xf32>
    %130 = arith.mulf %84, %111 : vector<1x2048xf32>
    %131 = vector.broadcast %130 : vector<1x2048xf32> to vector<64x2048xf32>
    %132 = arith.mulf %129, %131 : vector<64x2048xf32>
    %133 = vector.broadcast %125 : vector<1x2048xi32> to vector<64x2048xi32>
    %134 = arith.cmpi eq, %119, %133 : vector<64x2048xi32>
    %135 = arith.extui %134 : vector<64x2048xi1> to vector<64x2048xi32>
    %136 = arith.sitofp %135 : vector<64x2048xi32> to vector<64x2048xf32>
    %137 = arith.mulf %82, %118 : vector<1x2048xf32>
    %138 = vector.broadcast %137 : vector<1x2048xf32> to vector<64x2048xf32>
    %139 = arith.mulf %136, %138 : vector<64x2048xf32>
    %140 = arith.addf %132, %139 : vector<64x2048xf32>
    %141 = tpu.iota {dimensions = array<i32: 0>} : vector<32x2048xi32>
    %142 = vector.broadcast %85 : vector<1x2048xi32> to vector<32x2048xi32>
    %143 = arith.cmpi eq, %141, %142 : vector<32x2048xi32>
    %144 = arith.extui %143 : vector<32x2048xi1> to vector<32x2048xi32>
    %145 = arith.sitofp %144 : vector<32x2048xi32> to vector<32x2048xf32>
    %146 = arith.mulf %81, %97 : vector<1x2048xf32>
    %147 = vector.broadcast %146 : vector<1x2048xf32> to vector<32x2048xf32>
    %148 = arith.mulf %145, %147 : vector<32x2048xf32>
    %149 = vector.broadcast %88 : vector<1x2048xi32> to vector<32x2048xi32>
    %150 = arith.cmpi eq, %141, %149 : vector<32x2048xi32>
    %151 = arith.extui %150 : vector<32x2048xi1> to vector<32x2048xi32>
    %152 = arith.sitofp %151 : vector<32x2048xi32> to vector<32x2048xf32>
    %153 = arith.mulf %79, %104 : vector<1x2048xf32>
    %154 = vector.broadcast %153 : vector<1x2048xf32> to vector<32x2048xf32>
    %155 = arith.mulf %152, %154 : vector<32x2048xf32>
    %156 = arith.addf %148, %155 : vector<32x2048xf32>
    %c0_42 = arith.constant 0 : index
    %c0_43 = arith.constant 0 : index
    %157 = vector.load %arg5[%c0_42, %c0_43] : memref<32x64xf32, #tpu.memory_space<vmem>>, vector<32x64xf32>
    %cst_44 = arith.constant dense<0.000000e+00> : vector<32x2048xf32>
    %158 = tpu.matmul %157, %140, %cst_44 {dimension_numbers = #tpu.dot_dimension_numbers<[1], [0], [0], [1], [0, 0, 1, 1], [], []>} : vector<32x64xf32>, vector<64x2048xf32>, vector<32x2048xf32> -> vector<32x2048xf32>
    %cst_45 = arith.constant 1.000000e+00 : f32
    %159 = vector.broadcast %cst_45 : f32 to vector<1x32xf32>
    %160 = arith.mulf %158, %156 : vector<32x2048xf32>
    %cst_46 = arith.constant dense<0.000000e+00> : vector<1x2048xf32>
    %161 = tpu.matmul %159, %160, %cst_46 {dimension_numbers = #tpu.dot_dimension_numbers<[1], [0], [0], [1], [0, 0, 1, 1], [], []>} : vector<1x32xf32>, vector<32x2048xf32>, vector<1x2048xf32> -> vector<1x2048xf32>
    %c0_47 = arith.constant 0 : index
    %c0_48 = arith.constant 0 : index
    %162 = vector.load %arg6[%c0_47, %c0_48] : memref<1x2048xf32, #tpu.memory_space<vmem>>, vector<1x2048xf32>
    tpu.vector_store %arg6[%c0_47, %c0_48], %161 {strides = array<i32>} : memref<1x2048xf32, #tpu.memory_space<vmem>>, vector<1x2048xf32>,
    return
  }
}

</mosaic_0001>

<llo_original>
// kernel: spatial_transformer_forward.3
$region0: #{spatial_transformer_forward.3}
  #allocation0 [shape = 'u32[]', space=smem, size = 0x4, offset = 0x4, fixed_abs, tag = 'smem constant byte address 0x4 - core index']
  #allocation1 [shape = 'u32[72,128]{1,0:T(1,128)}', space=vmem, size = 0x9000, scoped, tag = 'internal scratch']
  %s0 = inlined_call_operand.vmem [shape: f32[4,49,338], index: 0, kind: input, shape index: {}]
  %s1 = inlined_call_operand.vmem [shape: f32[8,49], index: 1, kind: input, shape index: {}]
  %s2 = inlined_call_operand.vmem [shape: f32[8,1], index: 2, kind: input, shape index: {}]
  %s3 = inlined_call_operand.vmem [shape: f32[8,338], index: 3, kind: output, shape index: {}]
  %s4 = sld [smem:[#allocation0]]
  $region22: #{spatial_transformer_forward.3} parent=0
    _
  %s6 = ssub.s32 1, %s4
  %s7 = scalar_select 0, %s6, %s4
  // Predicated region
  $region2: #{spatial_transformer_forward.3} parent=0 // pred_check
    _
  $region3: #{spatial_transformer_forward.3} parent=0 // pred_check_branch
    %9 = sbr.rel (0) target = $region5
  $region4: #{spatial_transformer_forward.3} parent=0 // pred_region
    _
  $region5: #{spatial_transformer_forward.3} parent=0 // pred_fallthru
    _
  // Predicated region
  $region6: #{spatial_transformer_forward.3} parent=0 // pred_check
    _
  $region7: #{spatial_transformer_forward.3} parent=0 // pred_check_branch
    %11 = sbr.rel (0) target = $region9
  $region8: #{spatial_transformer_forward.3} parent=0 // pred_region
    _
  $region9: #{spatial_transformer_forward.3} parent=0 // pred_fallthru
    _
  // Predicated region
  $region10: #{spatial_transformer_forward.3} parent=0 // pred_check
    _
  $region11: #{spatial_transformer_forward.3} parent=0 // pred_check_branch
    %13 = sbr.rel (0) target = $region13
  $region12: #{spatial_transformer_forward.3} parent=0 // pred_region
    _
  $region13: #{spatial_transformer_forward.3} parent=0 // pred_fallthru
    _
  %v14 = vld [vmem:[%s1] sm:$0xff]
  %v15 = vld [vmem:[%s0] sm:$0xff]
  %v16 = vld [vmem:[%s0 + $0x8] sm:$0xff]
  %v17 = vld [vmem:[%s0 + $0x10] sm:$0xff]
  %v18 = vld [vmem:[%s0 + $0x18] sm:$0xff]
  %v19 = vld [vmem:[%s0 + $0x20] sm:$0xff]
  %v20 = vld [vmem:[%s0 + $0x28] sm:$0xff]
  %v21 = vld [vmem:[%s0 + $0x30] sm:$0xff]
  %v22 = vld [vmem:[%s0 + $0x38] sm:$0xff]
  %v23 = vld [vmem:[%s0 + $0x40] sm:$0xff]
  %v24 = vld [vmem:[%s0 + $0x48] sm:$0xff]
  %v25 = vld [vmem:[%s0 + $0x50] sm:$0xff]
  %v26 = vld [vmem:[%s0 + $0x58] sm:$0xff]
  %v27 = vld [vmem:[%s0 + $0x60] sm:$0xff]
  %v28 = vld [vmem:[%s0 + $0x68] sm:$0xff]
  %v29 = vld [vmem:[%s0 + $0x70] sm:$0xff]
  %v30 = vld [vmem:[%s0 + $0x78] sm:$0xff]
  %v31 = vld [vmem:[%s0 + $0x80] sm:$0xff]
  %v32 = vld [vmem:[%s0 + $0x88] sm:$0xff]
  %v33 = vld [vmem:[%s0 + $0x90] sm:$0x1]
  %v34 = vld [vmem:[%s0 + $0x98] sm:$0x1]
  %v35 = vld [vmem:[%s0 + $0xa0] sm:$0x1]
  %vm36 = vcmask 400384
  %v38 = vsel %vm36, %v14, 0
  %vm40 = vcmask 1040384
  %v42 = vsel %vm40, %v33, 0
  %v45 = vsel %vm40, %v34, 0
  %v48 = vsel %vm40, %v35, 0
  %50 = vmatpush.msra.mxu0 0.0
  %51 = vmatpush.msra.mxu0 0.0
  %52 = vmatpush.msra.mxu0 0.0
  %53 = vmatpush.msra.mxu0 0.0
  %54 = vmatpush.msra.mxu0 0.0
  %55 = vmatpush.msra.mxu0 0.0
  %56 = vmatpush.msra.mxu0 0.0
  %57 = vmatpush.msra.mxu0 0.0
  %58 = vmatpush.msra.mxu0 0.0
  %59 = vmatpush.msra.mxu0 %v42
  %60 = vmatpush.msra.mxu0 %v30
  %61 = vmatpush.msra.mxu0 %v27
  %62 = vmatpush.msra.mxu0 %v24
  %63 = vmatpush.msra.mxu0 %v21
  %64 = vmatpush.msra.mxu0 %v18
  %65 = vmatpush.msra.mxu0 %v15
  %66 = vmatmul.f32.gmra.mxu0 %v38
  %v67 = vpop.f32.mrf.mxu0
  %v68 = vadd.f32 0.0, %v67
  %69 = vdwg.mxu0
  %70 = vmatpush.msra.mxu0 0.0
  %71 = vmatpush.msra.mxu0 0.0
  %72 = vmatpush.msra.mxu0 0.0
  %73 = vmatpush.msra.mxu0 0.0
  %74 = vmatpush.msra.mxu0 0.0
  %75 = vmatpush.msra.mxu0 0.0
  %76 = vmatpush.msra.mxu0 0.0
  %77 = vmatpush.msra.mxu0 0.0
  %78 = vmatpush.msra.mxu0 0.0
  %79 = vmatpush.msra.mxu0 %v45
  %80 = vmatpush.msra.mxu0 %v31
  %81 = vmatpush.msra.mxu0 %v28
  %82 = vmatpush.msra.mxu0 %v25
  %83 = vmatpush.msra.mxu0 %v22
  %84 = vmatpush.msra.mxu0 %v19
  %85 = vmatpush.msra.mxu0 %v16
  %86 = vmatmul.f32.gmra.mxu0 %v38
  %v87 = vpop.f32.mrf.mxu0
  %v88 = vadd.f32 0.0, %v87
  %89 = vdwg.mxu0
  %90 = vmatpush.msra.mxu0 0.0
  %91 = vmatpush.msra.mxu0 0.0
  %92 = vmatpush.msra.mxu0 0.0
  %93 = vmatpush.msra.mxu0 0.0
  %94 = vmatpush.msra.mxu0 0.0
  %95 = vmatpush.msra.mxu0 0.0
  %96 = vmatpush.msra.mxu0 0.0
  %97 = vmatpush.msra.mxu0 0.0
  %98 = vmatpush.msra.mxu0 0.0
  %99 = vmatpush.msra.mxu0 %v48
  %100 = vmatpush.msra.mxu0 %v32
  %101 = vmatpush.msra.mxu0 %v29
  %102 = vmatpush.msra.mxu0 %v26
  %103 = vmatpush.msra.mxu0 %v23
  %104 = vmatpush.msra.mxu0 %v20
  %105 = vmatpush.msra.mxu0 %v17
  %106 = vmatmul.f32.gmra.mxu0 %v38
  %v107 = vpop.f32.mrf.mxu0
  %v108 = vadd.f32 0.0, %v107
  %109 = vdwg.mxu0
  %s110 = scalar_lea.vmem %s0, 168
  %v111 = vld [vmem:[%s110] sm:$0xff]
  %v112 = vld [vmem:[%s110 + $0x8] sm:$0xff]
  %v113 = vld [vmem:[%s110 + $0x10] sm:$0xff]
  %v114 = vld [vmem:[%s110 + $0x18] sm:$0xff]
  %v115 = vld [vmem:[%s110 + $0x20] sm:$0xff]
  %v116 = vld [vmem:[%s110 + $0x28] sm:$0xff]
  %v117 = vld [vmem:[%s110 + $0x30] sm:$0xff]
  %v118 = vld [vmem:[%s110 + $0x38] sm:$0xff]
  %v119 = vld [vmem:[%s110 + $0x40] sm:$0xff]
  %v120 = vld [vmem:[%s110 + $0x48] sm:$0xff]
  %v121 = vld [vmem:[%s110 + $0x50] sm:$0xff]
  %v122 = vld [vmem:[%s110 + $0x58] sm:$0xff]
  %v123 = vld [vmem:[%s110 + $0x60] sm:$0xff]
  %v124 = vld [vmem:[%s110 + $0x68] sm:$0xff]
  %v125 = vld [vmem:[%s110 + $0x70] sm:$0xff]
  %v126 = vld [vmem:[%s110 + $0x78] sm:$0xff]
  %v127 = vld [vmem:[%s110 + $0x80] sm:$0xff]
  %v128 = vld [vmem:[%s110 + $0x88] sm:$0xff]
  %v129 = vld [vmem:[%s110 + $0x90] sm:$0x1]
  %v130 = vld [vmem:[%s110 + $0x98] sm:$0x1]
  %v131 = vld [vmem:[%s110 + $0xa0] sm:$0x1]
  %v133 = vsel %vm40, %v129, 0
  %v136 = vsel %vm40, %v130, 0
  %v139 = vsel %vm40, %v131, 0
  %141 = vmatpush.msra.mxu0 0.0
  %142 = vmatpush.msra.mxu0 0.0
  %143 = vmatpush.msra.mxu0 0.0
  %144 = vmatpush.msra.mxu0 0.0
  %145 = vmatpush.msra.mxu0 0.0
  %146 = vmatpush.msra.mxu0 0.0
  %147 = vmatpush.msra.mxu0 0.0
  %148 = vmatpush.msra.mxu0 0.0
  %149 = vmatpush.msra.mxu0 0.0
  %150 = vmatpush.msra.mxu0 %v133
  %151 = vmatpush.msra.mxu0 %v126
  %152 = vmatpush.msra.mxu0 %v123
  %153 = vmatpush.msra.mxu0 %v120
  %154 = vmatpush.msra.mxu0 %v117
  %155 = vmatpush.msra.mxu0 %v114
  %156 = vmatpush.msra.mxu0 %v111
  %157 = vmatmul.f32.gmra.mxu0 %v38
  %v158 = vpop.f32.mrf.mxu0
  %v159 = vadd.f32 0.0, %v158
  %160 = vdwg.mxu0
  %161 = vmatpush.msra.mxu0 0.0
  %162 = vmatpush.msra.mxu0 0.0
  %163 = vmatpush.msra.mxu0 0.0
  %164 = vmatpush.msra.mxu0 0.0
  %165 = vmatpush.msra.mxu0 0.0
  %166 = vmatpush.msra.mxu0 0.0
  %167 = vmatpush.msra.mxu0 0.0
  %168 = vmatpush.msra.mxu0 0.0
  %169 = vmatpush.msra.mxu0 0.0
  %170 = vmatpush.msra.mxu0 %v136
  %171 = vmatpush.msra.mxu0 %v127
  %172 = vmatpush.msra.mxu0 %v124
  %173 = vmatpush.msra.mxu0 %v121
  %174 = vmatpush.msra.mxu0 %v118
  %175 = vmatpush.msra.mxu0 %v115
  %176 = vmatpush.msra.mxu0 %v112
  %177 = vmatmul.f32.gmra.mxu0 %v38
  %v178 = vpop.f32.mrf.mxu0
  %v179 = vadd.f32 0.0, %v178
  %180 = vdwg.mxu0
  %181 = vmatpush.msra.mxu0 0.0
  %182 = vmatpush.msra.mxu0 0.0
  %183 = vmatpush.msra.mxu0 0.0
  %184 = vmatpush.msra.mxu0 0.0
  %185 = vmatpush.msra.mxu0 0.0
  %186 = vmatpush.msra.mxu0 0.0
  %187 = vmatpush.msra.mxu0 0.0
  %188 = vmatpush.msra.mxu0 0.0
  %189 = vmatpush.msra.mxu0 0.0
  %190 = vmatpush.msra.mxu0 %v139
  %191 = vmatpush.msra.mxu0 %v128
  %192 = vmatpush.msra.mxu0 %v125
  %193 = vmatpush.msra.mxu0 %v122
  %194 = vmatpush.msra.mxu0 %v119
  %195 = vmatpush.msra.mxu0 %v116
  %196 = vmatpush.msra.mxu0 %v113
  %197 = vmatmul.f32.gmra.mxu0 %v38
  %v198 = vpop.f32.mrf.mxu0
  %v199 = vadd.f32 0.0, %v198
  %200 = vdwg.mxu0
  %v201 = vmax.f32 %v68, %v159
  %v202 = vmax.f32 %v88, %v179
  %v203 = vmax.f32 %v108, %v199
  %s204 = scalar_lea.vmem %s0, 336
  %v205 = vld [vmem:[%s204] sm:$0xff]
  %v206 = vld [vmem:[%s204 + $0x8] sm:$0xff]
  %v207 = vld [vmem:[%s204 + $0x10] sm:$0xff]
  %v208 = vld [vmem:[%s204 + $0x18] sm:$0xff]
  %v209 = vld [vmem:[%s204 + $0x20] sm:$0xff]
  %v210 = vld [vmem:[%s204 + $0x28] sm:$0xff]
  %v211 = vld [vmem:[%s204 + $0x30] sm:$0xff]
  %v212 = vld [vmem:[%s204 + $0x38] sm:$0xff]
  %v213 = vld [vmem:[%s204 + $0x40] sm:$0xff]
  %v214 = vld [vmem:[%s204 + $0x48] sm:$0xff]
  %v215 = vld [vmem:[%s204 + $0x50] sm:$0xff]
  %v216 = vld [vmem:[%s204 + $0x58] sm:$0xff]
  %v217 = vld [vmem:[%s204 + $0x60] sm:$0xff]
  %v218 = vld [vmem:[%s204 + $0x68] sm:$0xff]
  %v219 = vld [vmem:[%s204 + $0x70] sm:$0xff]
  %v220 = vld [vmem:[%s204 + $0x78] sm:$0xff]
  %v221 = vld [vmem:[%s204 + $0x80] sm:$0xff]
  %v222 = vld [vmem:[%s204 + $0x88] sm:$0xff]
  %v223 = vld [vmem:[%s204 + $0x90] sm:$0x1]
  %v224 = vld [vmem:[%s204 + $0x98] sm:$0x1]
  %v225 = vld [vmem:[%s204 + $0xa0] sm:$0x1]
  %v227 = vsel %vm40, %v223, 0
  %v230 = vsel %vm40, %v224, 0
  %v233 = vsel %vm40, %v225, 0
  %235 = vmatpush.msra.mxu0 0.0
  %236 = vmatpush.msra.mxu0 0.0
  %237 = vmatpush.msra.mxu0 0.0
  %238 = vmatpush.msra.mxu0 0.0
  %239 = vmatpush.msra.mxu0 0.0
  %240 = vmatpush.msra.mxu0 0.0
  %241 = vmatpush.msra.mxu0 0.0
  %242 = vmatpush.msra.mxu0 0.0
  %243 = vmatpush.msra.mxu0 0.0
  %244 = vmatpush.msra.mxu0 %v227
  %245 = vmatpush.msra.mxu0 %v220
  %246 = vmatpush.msra.mxu0 %v217
  %247 = vmatpush.msra.mxu0 %v214
  %248 = vmatpush.msra.mxu0 %v211
  %249 = vmatpush.msra.mxu0 %v208
  %250 = vmatpush.msra.mxu0 %v205
  %251 = vmatmul.f32.gmra.mxu0 %v38
  %v252 = vpop.f32.mrf.mxu0
  %v253 = vadd.f32 0.0, %v252
  %254 = vdwg.mxu0
  %255 = vmatpush.msra.mxu0 0.0
  %256 = vmatpush.msra.mxu0 0.0
  %257 = vmatpush.msra.mxu0 0.0
  %258 = vmatpush.msra.mxu0 0.0
  %259 = vmatpush.msra.mxu0 0.0
  %260 = vmatpush.msra.mxu0 0.0
  %261 = vmatpush.msra.mxu0 0.0
  %262 = vmatpush.msra.mxu0 0.0
  %263 = vmatpush.msra.mxu0 0.0
  %264 = vmatpush.msra.mxu0 %v230
  %265 = vmatpush.msra.mxu0 %v221
  %266 = vmatpush.msra.mxu0 %v218
  %267 = vmatpush.msra.mxu0 %v215
  %268 = vmatpush.msra.mxu0 %v212
  %269 = vmatpush.msra.mxu0 %v209
  %270 = vmatpush.msra.mxu0 %v206
  %271 = vmatmul.f32.gmra.mxu0 %v38
  %v272 = vpop.f32.mrf.mxu0
  %v273 = vadd.f32 0.0, %v272
  %274 = vdwg.mxu0
  %275 = vmatpush.msra.mxu0 0.0
  %276 = vmatpush.msra.mxu0 0.0
  %277 = vmatpush.msra.mxu0 0.0
  %278 = vmatpush.msra.mxu0 0.0
  %279 = vmatpush.msra.mxu0 0.0
  %280 = vmatpush.msra.mxu0 0.0
  %281 = vmatpush.msra.mxu0 0.0
  %282 = vmatpush.msra.mxu0 0.0
  %283 = vmatpush.msra.mxu0 0.0
  %284 = vmatpush.msra.mxu0 %v233
  %285 = vmatpush.msra.mxu0 %v222
  %286 = vmatpush.msra.mxu0 %v219
  %287 = vmatpush.msra.mxu0 %v216
  %288 = vmatpush.msra.mxu0 %v213
  %289 = vmatpush.msra.mxu0 %v210
  %290 = vmatpush.msra.mxu0 %v207
  %291 = vmatmul.f32.gmra.mxu0 %v38
  %v292 = vpop.f32.mrf.mxu0
  %v293 = vadd.f32 0.0, %v292
  %294 = vdwg.mxu0
  %v295 = vmax.f32 %v201, %v253
  %v296 = vmax.f32 %v202, %v273
  %v297 = vmax.f32 %v203, %v293
  %s298 = scalar_lea.vmem %s0, 504
  %v299 = vld [vmem:[%s298] sm:$0xff]
  %v300 = vld [vmem:[%s298 + $0x8] sm:$0xff]
  %v301 = vld [vmem:[%s298 + $0x10] sm:$0xff]
  %v302 = vld [vmem:[%s298 + $0x18] sm:$0xff]
  %v303 = vld [vmem:[%s298 + $0x20] sm:$0xff]
  %v304 = vld [vmem:[%s298 + $0x28] sm:$0xff]
  %v305 = vld [vmem:[%s298 + $0x30] sm:$0xff]
  %v306 = vld [vmem:[%s298 + $0x38] sm:$0xff]
  %v307 = vld [vmem:[%s298 + $0x40] sm:$0xff]
  %v308 = vld [vmem:[%s298 + $0x48] sm:$0xff]
  %v309 = vld [vmem:[%s298 + $0x50] sm:$0xff]
  %v310 = vld [vmem:[%s298 + $0x58] sm:$0xff]
  %v311 = vld [vmem:[%s298 + $0x60] sm:$0xff]
  %v312 = vld [vmem:[%s298 + $0x68] sm:$0xff]
  %v313 = vld [vmem:[%s298 + $0x70] sm:$0xff]
  %v314 = vld [vmem:[%s298 + $0x78] sm:$0xff]
  %v315 = vld [vmem:[%s298 + $0x80] sm:$0xff]
  %v316 = vld [vmem:[%s298 + $0x88] sm:$0xff]
  %v317 = vld [vmem:[%s298 + $0x90] sm:$0x1]
  %v318 = vld [vmem:[%s298 + $0x98] sm:$0x1]
  %v319 = vld [vmem:[%s298 + $0xa0] sm:$0x1]
  %v321 = vsel %vm40, %v317, 0
  %v324 = vsel %vm40, %v318, 0
  %v327 = vsel %vm40, %v319, 0
  %329 = vmatpush.msra.mxu0 0.0
  %330 = vmatpush.msra.mxu0 0.0
  %331 = vmatpush.msra.mxu0 0.0
  %332 = vmatpush.msra.mxu0 0.0
  %333 = vmatpush.msra.mxu0 0.0
  %334 = vmatpush.msra.mxu0 0.0
  %335 = vmatpush.msra.mxu0 0.0
  %336 = vmatpush.msra.mxu0 0.0
  %337 = vmatpush.msra.mxu0 0.0
  %338 = vmatpush.msra.mxu0 %v321
  %339 = vmatpush.msra.mxu0 %v314
  %340 = vmatpush.msra.mxu0 %v311
  %341 = vmatpush.msra.mxu0 %v308
  %342 = vmatpush.msra.mxu0 %v305
  %343 = vmatpush.msra.mxu0 %v302
  %344 = vmatpush.msra.mxu0 %v299
  %345 = vmatmul.f32.gmra.mxu0 %v38
  %v346 = vpop.f32.mrf.mxu0
  %v347 = vadd.f32 0.0, %v346
  %348 = vdwg.mxu0
  %349 = vmatpush.msra.mxu0 0.0
  %350 = vmatpush.msra.mxu0 0.0
  %351 = vmatpush.msra.mxu0 0.0
  %352 = vmatpush.msra.mxu0 0.0
  %353 = vmatpush.msra.mxu0 0.0
  %354 = vmatpush.msra.mxu0 0.0
  %355 = vmatpush.msra.mxu0 0.0
  %356 = vmatpush.msra.mxu0 0.0
  %357 = vmatpush.msra.mxu0 0.0
  %358 = vmatpush.msra.mxu0 %v324
  %359 = vmatpush.msra.mxu0 %v315
  %360 = vmatpush.msra.mxu0 %v312
  %361 = vmatpush.msra.mxu0 %v309
  %362 = vmatpush.msra.mxu0 %v306
  %363 = vmatpush.msra.mxu0 %v303
  %364 = vmatpush.msra.mxu0 %v300
  %365 = vmatmul.f32.gmra.mxu0 %v38
  %v366 = vpop.f32.mrf.mxu0
  %v367 = vadd.f32 0.0, %v366
  %368 = vdwg.mxu0
  %369 = vmatpush.msra.mxu0 0.0
  %370 = vmatpush.msra.mxu0 0.0
  %371 = vmatpush.msra.mxu0 0.0
  %372 = vmatpush.msra.mxu0 0.0
  %373 = vmatpush.msra.mxu0 0.0
  %374 = vmatpush.msra.mxu0 0.0
  %375 = vmatpush.msra.mxu0 0.0
  %376 = vmatpush.msra.mxu0 0.0
  %377 = vmatpush.msra.mxu0 0.0
  %378 = vmatpush.msra.mxu0 %v327
  %379 = vmatpush.msra.mxu0 %v316
  %380 = vmatpush.msra.mxu0 %v313
  %381 = vmatpush.msra.mxu0 %v310
  %382 = vmatpush.msra.mxu0 %v307
  %383 = vmatpush.msra.mxu0 %v304
  %384 = vmatpush.msra.mxu0 %v301
  %385 = vmatmul.f32.gmra.mxu0 %v38
  %v386 = vpop.f32.mrf.mxu0
  %v387 = vadd.f32 0.0, %v386
  %388 = vdwg.mxu0
  %v389 = vmax.f32 %v295, %v347
  %v390 = vmax.f32 %v296, %v367
  %v391 = vmax.f32 %v297, %v387
  %v392 = vld [vmem:[%s2] sm:$0xff]
  %394 = vset.pattern.permute.xlu0 0
  %395 = vperm.xlu0 %394, %v392
  %v396 = vpop.permute.xlu0 %395
  %v398 = vadd.f32 %v389, %v396
  %v399 = vadd.f32 %v390, %v396
  %v400 = vadd.f32 %v391, %v396
  %v401 = vmax.f32 %v398, 0.0
  %v402 = vmax.f32 %v399, 0.0
  %v403 = vmax.f32 %v400, 0.0
  %404 = vst [vmem:[%s3] sm:$0xff] %v401
  %405 = vst [vmem:[%s3 + $0x8] sm:$0xff] %v402
  %vm406 = vcmask 670720
  %407 = vst.msk [vmem:[%s3 + $0x10] sm:$0xff] %vm406, %v403
  // Predicated region
  $region14: #{spatial_transformer_forward.3} parent=0 // pred_check
    _
  $region15: #{spatial_transformer_forward.3} parent=0 // pred_check_branch
    %409 = sbr.rel (0) target = $region17
  $region16: #{spatial_transformer_forward.3} parent=0 // pred_region
    _
  $region17: #{spatial_transformer_forward.3} parent=0 // pred_fallthru
    _
  // Predicated region
  $region18: #{spatial_transformer_forward.3} parent=0 // pred_check
    _
  $region19: #{spatial_transformer_forward.3} parent=0 // pred_check_branch
    %411 = sbr.rel (0) target = $region21
  $region20: #{spatial_transformer_forward.3} parent=0 // pred_region
    _
  $region21: #{spatial_transformer_forward.3} parent=0 // pred_fallthru
    _

// kernel: spatial_transformer_forward.4
$region0: #{spatial_transformer_forward.4}
  #allocation0 [shape = 'u32[]', space=smem, size = 0x4, offset = 0x4, fixed_abs, tag = 'smem constant byte address 0x4 - core index']
  #allocation1 [shape = 'u32[72,128]{1,0:T(1,128)}', space=vmem, size = 0x9000, scoped, tag = 'internal scratch']
  %s0 = inlined_call_operand.vmem [shape: f32[4,200,32], index: 0, kind: input, shape index: {}]
  %s1 = inlined_call_operand.vmem [shape: f32[10,200], index: 1, kind: input, shape index: {}]
  %s2 = inlined_call_operand.vmem [shape: f32[10,1], index: 2, kind: input, shape index: {}]
  %s3 = inlined_call_operand.vmem [shape: f32[10,32], index: 3, kind: output, shape index: {}]
  %s4 = sld [smem:[#allocation0]]
  $region22: #{spatial_transformer_forward.4} parent=0
    _
  %s6 = ssub.s32 1, %s4
  %s7 = scalar_select 0, %s6, %s4
  // Predicated region
  $region2: #{spatial_transformer_forward.4} parent=0 // pred_check
    _
  $region3: #{spatial_transformer_forward.4} parent=0 // pred_check_branch
    %9 = sbr.rel (0) target = $region5
  $region4: #{spatial_transformer_forward.4} parent=0 // pred_region
    _
  $region5: #{spatial_transformer_forward.4} parent=0 // pred_fallthru
    _
  // Predicated region
  $region6: #{spatial_transformer_forward.4} parent=0 // pred_check
    _
  $region7: #{spatial_transformer_forward.4} parent=0 // pred_check_branch
    %11 = sbr.rel (0) target = $region9
  $region8: #{spatial_transformer_forward.4} parent=0 // pred_region
    _
  $region9: #{spatial_transformer_forward.4} parent=0 // pred_fallthru
    _
  // Predicated region
  $region10: #{spatial_transformer_forward.4} parent=0 // pred_check
    _
  $region11: #{spatial_transformer_forward.4} parent=0 // pred_check_branch
    %13 = sbr.rel (0) target = $region13
  $region12: #{spatial_transformer_forward.4} parent=0 // pred_region
    _
  $region13: #{spatial_transformer_forward.4} parent=0 // pred_fallthru
    _
  %v14 = vld [vmem:[%s1] sm:$0xff]
  %v15 = vld [vmem:[%s1 + $0x8] sm:$0xff]
  %v16 = vld [vmem:[%s1 + $0x10] sm:$0x3]
  %v17 = vld [vmem:[%s1 + $0x18] sm:$0x3]
  %v18 = vld [vmem:[%s0] sm:$0xff]
  %v19 = vld [vmem:[%s0 + $0x8] sm:$0xff]
  %v20 = vld [vmem:[%s0 + $0x10] sm:$0xff]
  %v21 = vld [vmem:[%s0 + $0x18] sm:$0xff]
  %v22 = vld [vmem:[%s0 + $0x20] sm:$0xff]
  %v23 = vld [vmem:[%s0 + $0x28] sm:$0xff]
  %v24 = vld [vmem:[%s0 + $0x30] sm:$0xff]
  %v25 = vld [vmem:[%s0 + $0x38] sm:$0xff]
  %v26 = vld [vmem:[%s0 + $0x40] sm:$0xff]
  %v27 = vld [vmem:[%s0 + $0x48] sm:$0xff]
  %v28 = vld [vmem:[%s0 + $0x50] sm:$0xff]
  %v29 = vld [vmem:[%s0 + $0x58] sm:$0xff]
  %v30 = vld [vmem:[%s0 + $0x60] sm:$0xff]
  %v31 = vld [vmem:[%s0 + $0x68] sm:$0xff]
  %v32 = vld [vmem:[%s0 + $0x70] sm:$0xff]
  %v33 = vld [vmem:[%s0 + $0x78] sm:$0xff]
  %v34 = vld [vmem:[%s0 + $0x80] sm:$0xff]
  %v35 = vld [vmem:[%s0 + $0x88] sm:$0xff]
  %v36 = vld [vmem:[%s0 + $0x90] sm:$0xff]
  %v37 = vld [vmem:[%s0 + $0x98] sm:$0xff]
  %v38 = vld [vmem:[%s0 + $0xa0] sm:$0xff]
  %v39 = vld [vmem:[%s0 + $0xa8] sm:$0xff]
  %v40 = vld [vmem:[%s0 + $0xb0] sm:$0xff]
  %v41 = vld [vmem:[%s0 + $0xb8] sm:$0xff]
  %v42 = vld [vmem:[%s0 + $0xc0] sm:$0xff]
  %vm43 = vcmask 588800
  %v45 = vsel %vm43, %v15, 0
  %v48 = vsel %vm43, %v17, 0
  %50 = vmatpush.msra.mxu0 %v33
  %51 = vmatpush.msra.mxu0 %v32
  %52 = vmatpush.msra.mxu0 %v31
  %53 = vmatpush.msra.mxu0 %v30
  %54 = vmatpush.msra.mxu0 %v29
  %55 = vmatpush.msra.mxu0 %v28
  %56 = vmatpush.msra.mxu0 %v27
  %57 = vmatpush.msra.mxu0 %v26
  %58 = vmatpush.msra.mxu0 %v25
  %59 = vmatpush.msra.mxu0 %v24
  %60 = vmatpush.msra.mxu0 %v23
  %61 = vmatpush.msra.mxu0 %v22
  %62 = vmatpush.msra.mxu0 %v21
  %63 = vmatpush.msra.mxu0 %v20
  %64 = vmatpush.msra.mxu0 %v19
  %65 = vmatpush.msra.mxu0 %v18
  %66 = vmatmul.f32.gmra.mxu0 %v14
  %v67 = vpop.f32.mrf.mxu0
  %v68 = vadd.f32 0.0, %v67
  %69 = vmatmul.f32.gmra.mxu0 %v16
  %v70 = vpop.f32.mrf.mxu0
  %v71 = vadd.f32 0.0, %v70
  %72 = vdwg.mxu0
  %73 = vmatpush.msra.mxu0 0.0
  %74 = vmatpush.msra.mxu0 0.0
  %75 = vmatpush.msra.mxu0 0.0
  %76 = vmatpush.msra.mxu0 0.0
  %77 = vmatpush.msra.mxu0 0.0
  %78 = vmatpush.msra.mxu0 0.0
  %79 = vmatpush.msra.mxu0 0.0
  %80 = vmatpush.msra.mxu0 %v42
  %81 = vmatpush.msra.mxu0 %v41
  %82 = vmatpush.msra.mxu0 %v40
  %83 = vmatpush.msra.mxu0 %v39
  %84 = vmatpush.msra.mxu0 %v38
  %85 = vmatpush.msra.mxu0 %v37
  %86 = vmatpush.msra.mxu0 %v36
  %87 = vmatpush.msra.mxu0 %v35
  %88 = vmatpush.msra.mxu0 %v34
  %89 = vmatmul.f32.gmra.mxu0 %v45
  %v90 = vpop.f32.mrf.mxu0
  %v91 = vadd.f32 %v68, %v90
  %92 = vmatmul.f32.gmra.mxu0 %v48
  %v93 = vpop.f32.mrf.mxu0
  %v94 = vadd.f32 %v71, %v93
  %95 = vdwg.mxu0
  %s96 = scalar_lea.vmem %s0, 200
  %v97 = vld [vmem:[%s96] sm:$0xff]
  %v98 = vld [vmem:[%s96 + $0x8] sm:$0xff]
  %v99 = vld [vmem:[%s96 + $0x10] sm:$0xff]
  %v100 = vld [vmem:[%s96 + $0x18] sm:$0xff]
  %v101 = vld [vmem:[%s96 + $0x20] sm:$0xff]
  %v102 = vld [vmem:[%s96 + $0x28] sm:$0xff]
  %v103 = vld [vmem:[%s96 + $0x30] sm:$0xff]
  %v104 = vld [vmem:[%s96 + $0x38] sm:$0xff]
  %v105 = vld [vmem:[%s96 + $0x40] sm:$0xff]
  %v106 = vld [vmem:[%s96 + $0x48] sm:$0xff]
  %v107 = vld [vmem:[%s96 + $0x50] sm:$0xff]
  %v108 = vld [vmem:[%s96 + $0x58] sm:$0xff]
  %v109 = vld [vmem:[%s96 + $0x60] sm:$0xff]
  %v110 = vld [vmem:[%s96 + $0x68] sm:$0xff]
  %v111 = vld [vmem:[%s96 + $0x70] sm:$0xff]
  %v112 = vld [vmem:[%s96 + $0x78] sm:$0xff]
  %v113 = vld [vmem:[%s96 + $0x80] sm:$0xff]
  %v114 = vld [vmem:[%s96 + $0x88] sm:$0xff]
  %v115 = vld [vmem:[%s96 + $0x90] sm:$0xff]
  %v116 = vld [vmem:[%s96 + $0x98] sm:$0xff]
  %v117 = vld [vmem:[%s96 + $0xa0] sm:$0xff]
  %v118 = vld [vmem:[%s96 + $0xa8] sm:$0xff]
  %v119 = vld [vmem:[%s96 + $0xb0] sm:$0xff]
  %v120 = vld [vmem:[%s96 + $0xb8] sm:$0xff]
  %v121 = vld [vmem:[%s96 + $0xc0] sm:$0xff]
  %122 = vmatpush.msra.mxu0 %v112
  %123 = vmatpush.msra.mxu0 %v111
  %124 = vmatpush.msra.mxu0 %v110
  %125 = vmatpush.msra.mxu0 %v109
  %126 = vmatpush.msra.mxu0 %v108
  %127 = vmatpush.msra.mxu0 %v107
  %128 = vmatpush.msra.mxu0 %v106
  %129 = vmatpush.msra.mxu0 %v105
  %130 = vmatpush.msra.mxu0 %v104
  %131 = vmatpush.msra.mxu0 %v103
  %132 = vmatpush.msra.mxu0 %v102
  %133 = vmatpush.msra.mxu0 %v101
  %134 = vmatpush.msra.mxu0 %v100
  %135 = vmatpush.msra.mxu0 %v99
  %136 = vmatpush.msra.mxu0 %v98
  %137 = vmatpush.msra.mxu0 %v97
  %138 = vmatmul.f32.gmra.mxu0 %v14
  %v139 = vpop.f32.mrf.mxu0
  %v140 = vadd.f32 0.0, %v139
  %141 = vmatmul.f32.gmra.mxu0 %v16
  %v142 = vpop.f32.mrf.mxu0
  %v143 = vadd.f32 0.0, %v142
  %144 = vdwg.mxu0
  %145 = vmatpush.msra.mxu0 0.0
  %146 = vmatpush.msra.mxu0 0.0
  %147 = vmatpush.msra.mxu0 0.0
  %148 = vmatpush.msra.mxu0 0.0
  %149 = vmatpush.msra.mxu0 0.0
  %150 = vmatpush.msra.mxu0 0.0
  %151 = vmatpush.msra.mxu0 0.0
  %152 = vmatpush.msra.mxu0 %v121
  %153 = vmatpush.msra.mxu0 %v120
  %154 = vmatpush.msra.mxu0 %v119
  %155 = vmatpush.msra.mxu0 %v118
  %156 = vmatpush.msra.mxu0 %v117
  %157 = vmatpush.msra.mxu0 %v116
  %158 = vmatpush.msra.mxu0 %v115
  %159 = vmatpush.msra.mxu0 %v114
  %160 = vmatpush.msra.mxu0 %v113
  %161 = vmatmul.f32.gmra.mxu0 %v45
  %v162 = vpop.f32.mrf.mxu0
  %v163 = vadd.f32 %v140, %v162
  %164 = vmatmul.f32.gmra.mxu0 %v48
  %v165 = vpop.f32.mrf.mxu0
  %v166 = vadd.f32 %v143, %v165
  %167 = vdwg.mxu0
  %v168 = vmax.f32 %v91, %v163
  %v169 = vmax.f32 %v94, %v166
  %s170 = scalar_lea.vmem %s0, 400
  %v171 = vld [vmem:[%s170] sm:$0xff]
  %v172 = vld [vmem:[%s170 + $0x8] sm:$0xff]
  %v173 = vld [vmem:[%s170 + $0x10] sm:$0xff]
  %v174 = vld [vmem:[%s170 + $0x18] sm:$0xff]
  %v175 = vld [vmem:[%s170 + $0x20] sm:$0xff]
  %v176 = vld [vmem:[%s170 + $0x28] sm:$0xff]
  %v177 = vld [vmem:[%s170 + $0x30] sm:$0xff]
  %v178 = vld [vmem:[%s170 + $0x38] sm:$0xff]
  %v179 = vld [vmem:[%s170 + $0x40] sm:$0xff]
  %v180 = vld [vmem:[%s170 + $0x48] sm:$0xff]
  %v181 = vld [vmem:[%s170 + $0x50] sm:$0xff]
  %v182 = vld [vmem:[%s170 + $0x58] sm:$0xff]
  %v183 = vld [vmem:[%s170 + $0x60] sm:$0xff]
  %v184 = vld [vmem:[%s170 + $0x68] sm:$0xff]
  %v185 = vld [vmem:[%s170 + $0x70] sm:$0xff]
  %v186 = vld [vmem:[%s170 + $0x78] sm:$0xff]
  %v187 = vld [vmem:[%s170 + $0x80] sm:$0xff]
  %v188 = vld [vmem:[%s170 + $0x88] sm:$0xff]
  %v189 = vld [vmem:[%s170 + $0x90] sm:$0xff]
  %v190 = vld [vmem:[%s170 + $0x98] sm:$0xff]
  %v191 = vld [vmem:[%s170 + $0xa0] sm:$0xff]
  %v192 = vld [vmem:[%s170 + $0xa8] sm:$0xff]
  %v193 = vld [vmem:[%s170 + $0xb0] sm:$0xff]
  %v194 = vld [vmem:[%s170 + $0xb8] sm:$0xff]
  %v195 = vld [vmem:[%s170 + $0xc0] sm:$0xff]
  %196 = vmatpush.msra.mxu0 %v186
  %197 = vmatpush.msra.mxu0 %v185
  %198 = vmatpush.msra.mxu0 %v184
  %199 = vmatpush.msra.mxu0 %v183
  %200 = vmatpush.msra.mxu0 %v182
  %201 = vmatpush.msra.mxu0 %v181
  %202 = vmatpush.msra.mxu0 %v180
  %203 = vmatpush.msra.mxu0 %v179
  %204 = vmatpush.msra.mxu0 %v178
  %205 = vmatpush.msra.mxu0 %v177
  %206 = vmatpush.msra.mxu0 %v176
  %207 = vmatpush.msra.mxu0 %v175
  %208 = vmatpush.msra.mxu0 %v174
  %209 = vmatpush.msra.mxu0 %v173
  %210 = vmatpush.msra.mxu0 %v172
  %211 = vmatpush.msra.mxu0 %v171
  %212 = vmatmul.f32.gmra.mxu0 %v14
  %v213 = vpop.f32.mrf.mxu0
  %v214 = vadd.f32 0.0, %v213
  %215 = vmatmul.f32.gmra.mxu0 %v16
  %v216 = vpop.f32.mrf.mxu0
  %v217 = vadd.f32 0.0, %v216
  %218 = vdwg.mxu0
  %219 = vmatpush.msra.mxu0 0.0
  %220 = vmatpush.msra.mxu0 0.0
  %221 = vmatpush.msra.mxu0 0.0
  %222 = vmatpush.msra.mxu0 0.0
  %223 = vmatpush.msra.mxu0 0.0
  %224 = vmatpush.msra.mxu0 0.0
  %225 = vmatpush.msra.mxu0 0.0
  %226 = vmatpush.msra.mxu0 %v195
  %227 = vmatpush.msra.mxu0 %v194
  %228 = vmatpush.msra.mxu0 %v193
  %229 = vmatpush.msra.mxu0 %v192
  %230 = vmatpush.msra.mxu0 %v191
  %231 = vmatpush.msra.mxu0 %v190
  %232 = vmatpush.msra.mxu0 %v189
  %233 = vmatpush.msra.mxu0 %v188
  %234 = vmatpush.msra.mxu0 %v187
  %235 = vmatmul.f32.gmra.mxu0 %v45
  %v236 = vpop.f32.mrf.mxu0
  %v237 = vadd.f32 %v214, %v236
  %238 = vmatmul.f32.gmra.mxu0 %v48
  %v239 = vpop.f32.mrf.mxu0
  %v240 = vadd.f32 %v217, %v239
  %241 = vdwg.mxu0
  %v242 = vmax.f32 %v168, %v237
  %v243 = vmax.f32 %v169, %v240
  %s244 = scalar_lea.vmem %s0, 600
  %v245 = vld [vmem:[%s244] sm:$0xff]
  %v246 = vld [vmem:[%s244 + $0x8] sm:$0xff]
  %v247 = vld [vmem:[%s244 + $0x10] sm:$0xff]
  %v248 = vld [vmem:[%s244 + $0x18] sm:$0xff]
  %v249 = vld [vmem:[%s244 + $0x20] sm:$0xff]
  %v250 = vld [vmem:[%s244 + $0x28] sm:$0xff]
  %v251 = vld [vmem:[%s244 + $0x30] sm:$0xff]
  %v252 = vld [vmem:[%s244 + $0x38] sm:$0xff]
  %v253 = vld [vmem:[%s244 + $0x40] sm:$0xff]
  %v254 = vld [vmem:[%s244 + $0x48] sm:$0xff]
  %v255 = vld [vmem:[%s244 + $0x50] sm:$0xff]
  %v256 = vld [vmem:[%s244 + $0x58] sm:$0xff]
  %v257 = vld [vmem:[%s244 + $0x60] sm:$0xff]
  %v258 = vld [vmem:[%s244 + $0x68] sm:$0xff]
  %v259 = vld [vmem:[%s244 + $0x70] sm:$0xff]
  %v260 = vld [vmem:[%s244 + $0x78] sm:$0xff]
  %v261 = vld [vmem:[%s244 + $0x80] sm:$0xff]
  %v262 = vld [vmem:[%s244 + $0x88] sm:$0xff]
  %v263 = vld [vmem:[%s244 + $0x90] sm:$0xff]
  %v264 = vld [vmem:[%s244 + $0x98] sm:$0xff]
  %v265 = vld [vmem:[%s244 + $0xa0] sm:$0xff]
  %v266 = vld [vmem:[%s244 + $0xa8] sm:$0xff]
  %v267 = vld [vmem:[%s244 + $0xb0] sm:$0xff]
  %v268 = vld [vmem:[%s244 + $0xb8] sm:$0xff]
  %v269 = vld [vmem:[%s244 + $0xc0] sm:$0xff]
  %270 = vmatpush.msra.mxu0 %v260
  %271 = vmatpush.msra.mxu0 %v259
  %272 = vmatpush.msra.mxu0 %v258
  %273 = vmatpush.msra.mxu0 %v257
  %274 = vmatpush.msra.mxu0 %v256
  %275 = vmatpush.msra.mxu0 %v255
  %276 = vmatpush.msra.mxu0 %v254
  %277 = vmatpush.msra.mxu0 %v253
  %278 = vmatpush.msra.mxu0 %v252
  %279 = vmatpush.msra.mxu0 %v251
  %280 = vmatpush.msra.mxu0 %v250
  %281 = vmatpush.msra.mxu0 %v249
  %282 = vmatpush.msra.mxu0 %v248
  %283 = vmatpush.msra.mxu0 %v247
  %284 = vmatpush.msra.mxu0 %v246
  %285 = vmatpush.msra.mxu0 %v245
  %286 = vmatmul.f32.gmra.mxu0 %v14
  %v287 = vpop.f32.mrf.mxu0
  %v288 = vadd.f32 0.0, %v287
  %289 = vmatmul.f32.gmra.mxu0 %v16
  %v290 = vpop.f32.mrf.mxu0
  %v291 = vadd.f32 0.0, %v290
  %292 = vdwg.mxu0
  %293 = vmatpush.msra.mxu0 0.0
  %294 = vmatpush.msra.mxu0 0.0
  %295 = vmatpush.msra.mxu0 0.0
  %296 = vmatpush.msra.mxu0 0.0
  %297 = vmatpush.msra.mxu0 0.0
  %298 = vmatpush.msra.mxu0 0.0
  %299 = vmatpush.msra.mxu0 0.0
  %300 = vmatpush.msra.mxu0 %v269
  %301 = vmatpush.msra.mxu0 %v268
  %302 = vmatpush.msra.mxu0 %v267
  %303 = vmatpush.msra.mxu0 %v266
  %304 = vmatpush.msra.mxu0 %v265
  %305 = vmatpush.msra.mxu0 %v264
  %306 = vmatpush.msra.mxu0 %v263
  %307 = vmatpush.msra.mxu0 %v262
  %308 = vmatpush.msra.mxu0 %v261
  %309 = vmatmul.f32.gmra.mxu0 %v45
  %v310 = vpop.f32.mrf.mxu0
  %v311 = vadd.f32 %v288, %v310
  %312 = vmatmul.f32.gmra.mxu0 %v48
  %v313 = vpop.f32.mrf.mxu0
  %v314 = vadd.f32 %v291, %v313
  %315 = vdwg.mxu0
  %v316 = vmax.f32 %v242, %v311
  %v317 = vmax.f32 %v243, %v314
  %v318 = vld [vmem:[%s2] sm:$0xff]
  %v319 = vld [vmem:[%s2 + $0x8] sm:$0x3]
  %321 = vset.pattern.permute.xlu0 0
  %322 = vperm.xlu0 %321, %v318
  %v323 = vpop.permute.xlu0 %322
  %326 = vset.pattern.permute.xlu0 0
  %327 = vperm.xlu0 %326, %v319
  %v328 = vpop.permute.xlu0 %327
  %v330 = vadd.f32 %v316, %v323
  %v331 = vadd.f32 %v317, %v328
  %v332 = vmax.f32 %v330, 0.0
  %v333 = vmax.f32 %v331, 0.0
  %vm334 = vcmask 261120
  %335 = vst.msk [vmem:[%s3] sm:$0xff] %vm334, %v332
  %vm336 = vcmask 254976
  %337 = vst.msk [vmem:[%s3 + $0x8] sm:$0x3] %vm336, %v333
  // Predicated region
  $region14: #{spatial_transformer_forward.4} parent=0 // pred_check
    _
  $region15: #{spatial_transformer_forward.4} parent=0 // pred_check_branch
    %339 = sbr.rel (0) target = $region17
  $region16: #{spatial_transformer_forward.4} parent=0 // pred_region
    _
  $region17: #{spatial_transformer_forward.4} parent=0 // pred_fallthru
    _
  // Predicated region
  $region18: #{spatial_transformer_forward.4} parent=0 // pred_check
    _
  $region19: #{spatial_transformer_forward.4} parent=0 // pred_check_branch
    %341 = sbr.rel (0) target = $region21
  $region20: #{spatial_transformer_forward.4} parent=0 // pred_region
    _
  $region21: #{spatial_transformer_forward.4} parent=0 // pred_fallthru
    _

// kernel: spatial_transformer_forward.5
$region0: #{spatial_transformer_forward.5}
  #allocation0 [shape = 'u32[]', space=smem, size = 0x4, offset = 0x4, fixed_abs, tag = 'smem constant byte address 0x4 - core index']
  #allocation1 [shape = 'u32[72,128]{1,0:T(1,128)}', space=vmem, size = 0x9000, scoped, tag = 'internal scratch']
  %s0 = inlined_call_operand.vmem [shape: f32[160,2], index: 0, kind: input, shape index: {}]
  %s1 = inlined_call_operand.vmem [shape: f32[32,160], index: 1, kind: input, shape index: {}]
  %s2 = inlined_call_operand.vmem [shape: f32[32,1], index: 2, kind: input, shape index: {}]
  %s3 = inlined_call_operand.vmem [shape: f32[6,32], index: 3, kind: input, shape index: {}]
  %s4 = inlined_call_operand.vmem [shape: f32[6,1], index: 4, kind: input, shape index: {}]
  %s5 = inlined_call_operand.vmem [shape: f32[32,64], index: 5, kind: input, shape index: {}]
  %s6 = inlined_call_operand.vmem [shape: f32[1,2048], index: 6, kind: output, shape index: {0}]
  %s7 = inlined_call_operand.vmem [shape: f32[6,2], index: 7, kind: output, shape index: {1}]
  %8 = xla_tuple %s6, %s7
  %s9 = sld [smem:[#allocation0]]
  $region42: #{spatial_transformer_forward.5} parent=0
    _
  %s11 = ssub.s32 1, %s9
  %s12 = scalar_select 0, %s11, %s9
  // Predicated region
  $region2: #{spatial_transformer_forward.5} parent=0 // pred_check
    _
  $region3: #{spatial_transformer_forward.5} parent=0 // pred_check_branch
    %14 = sbr.rel (0) target = $region5
  $region4: #{spatial_transformer_forward.5} parent=0 // pred_region
    _
  $region5: #{spatial_transformer_forward.5} parent=0 // pred_fallthru
    _
  // Predicated region
  $region6: #{spatial_transformer_forward.5} parent=0 // pred_check
    _
  $region7: #{spatial_transformer_forward.5} parent=0 // pred_check_branch
    %16 = sbr.rel (0) target = $region9
  $region8: #{spatial_transformer_forward.5} parent=0 // pred_region
    _
  $region9: #{spatial_transformer_forward.5} parent=0 // pred_fallthru
    _
  // Predicated region
  $region10: #{spatial_transformer_forward.5} parent=0 // pred_check
    _
  $region11: #{spatial_transformer_forward.5} parent=0 // pred_check_branch
    %18 = sbr.rel (0) target = $region13
  $region12: #{spatial_transformer_forward.5} parent=0 // pred_region
    _
  $region13: #{spatial_transformer_forward.5} parent=0 // pred_fallthru
    _
  // Predicated region
  $region14: #{spatial_transformer_forward.5} parent=0 // pred_check
    _
  $region15: #{spatial_transformer_forward.5} parent=0 // pred_check_branch
    %20 = sbr.rel (0) target = $region17
  $region16: #{spatial_transformer_forward.5} parent=0 // pred_region
    _
  $region17: #{spatial_transformer_forward.5} parent=0 // pred_fallthru
    _
  // Predicated region
  $region18: #{spatial_transformer_forward.5} parent=0 // pred_check
    _
  $region19: #{spatial_transformer_forward.5} parent=0 // pred_check_branch
    %22 = sbr.rel (0) target = $region21
  $region20: #{spatial_transformer_forward.5} parent=0 // pred_region
    _
  $region21: #{spatial_transformer_forward.5} parent=0 // pred_fallthru
    _
  // Predicated region
  $region22: #{spatial_transformer_forward.5} parent=0 // pred_check
    _
  $region23: #{spatial_transformer_forward.5} parent=0 // pred_check_branch
    %24 = sbr.rel (0) target = $region25
  $region24: #{spatial_transformer_forward.5} parent=0 // pred_region
    _
  $region25: #{spatial_transformer_forward.5} parent=0 // pred_fallthru
    _
  %v25 = vld [vmem:[%s1] sm:$0xff]
  %v26 = vld [vmem:[%s1 + $0x8] sm:$0xff]
  %v27 = vld [vmem:[%s1 + $0x10] sm:$0xff]
  %v28 = vld [vmem:[%s1 + $0x18] sm:$0xff]
  %v29 = vld [vmem:[%s1 + $0x20] sm:$0xff]
  %v30 = vld [vmem:[%s1 + $0x28] sm:$0xff]
  %v31 = vld [vmem:[%s1 + $0x30] sm:$0xff]
  %v32 = vld [vmem:[%s1 + $0x38] sm:$0xff]
  %v33 = vld [vmem:[%s0] sm:$0xff]
  %v34 = vld [vmem:[%s0 + $0x8] sm:$0xff]
  %v35 = vld [vmem:[%s0 + $0x10] sm:$0xff]
  %v36 = vld [vmem:[%s0 + $0x18] sm:$0xff]
  %v37 = vld [vmem:[%s0 + $0x20] sm:$0xff]
  %v38 = vld [vmem:[%s0 + $0x28] sm:$0xff]
  %v39 = vld [vmem:[%s0 + $0x30] sm:$0xff]
  %v40 = vld [vmem:[%s0 + $0x38] sm:$0xff]
  %v41 = vld [vmem:[%s0 + $0x40] sm:$0xff]
  %v42 = vld [vmem:[%s0 + $0x48] sm:$0xff]
  %v43 = vld [vmem:[%s0 + $0x50] sm:$0xff]
  %v44 = vld [vmem:[%s0 + $0x58] sm:$0xff]
  %v45 = vld [vmem:[%s0 + $0x60] sm:$0xff]
  %v46 = vld [vmem:[%s0 + $0x68] sm:$0xff]
  %v47 = vld [vmem:[%s0 + $0x70] sm:$0xff]
  %v48 = vld [vmem:[%s0 + $0x78] sm:$0xff]
  %v49 = vld [vmem:[%s0 + $0x80] sm:$0xff]
  %v50 = vld [vmem:[%s0 + $0x88] sm:$0xff]
  %v51 = vld [vmem:[%s0 + $0x90] sm:$0xff]
  %v52 = vld [vmem:[%s0 + $0x98] sm:$0xff]
  %v53 = vld [vmem:[%s2] sm:$0xff]
  %v54 = vld [vmem:[%s2 + $0x8] sm:$0xff]
  %v55 = vld [vmem:[%s2 + $0x10] sm:$0xff]
  %v56 = vld [vmem:[%s2 + $0x18] sm:$0xff]
  %58 = vset.pattern.permute.xlu0 0
  %59 = vperm.xlu0 %58, %v53
  %v60 = vpop.permute.xlu0 %59
  %63 = vset.pattern.permute.xlu0 0
  %64 = vperm.xlu0 %63, %v54
  %v65 = vpop.permute.xlu0 %64
  %68 = vset.pattern.permute.xlu0 0
  %69 = vperm.xlu0 %68, %v55
  %v70 = vpop.permute.xlu0 %69
  %73 = vset.pattern.permute.xlu0 0
  %74 = vperm.xlu0 %73, %v56
  %v75 = vpop.permute.xlu0 %74
  %vm77 = vcmask 261120
  %v79 = vsel %vm77, %v26, 0
  %v82 = vsel %vm77, %v28, 0
  %v85 = vsel %vm77, %v30, 0
  %v88 = vsel %vm77, %v32, 0
  %90 = vmatpush.msra.mxu0 %v48
  %91 = vmatpush.msra.mxu0 %v47
  %92 = vmatpush.msra.mxu0 %v46
  %93 = vmatpush.msra.mxu0 %v45
  %94 = vmatpush.msra.mxu0 %v44
  %95 = vmatpush.msra.mxu0 %v43
  %96 = vmatpush.msra.mxu0 %v42
  %97 = vmatpush.msra.mxu0 %v41
  %98 = vmatpush.msra.mxu0 %v40
  %99 = vmatpush.msra.mxu0 %v39
  %100 = vmatpush.msra.mxu0 %v38
  %101 = vmatpush.msra.mxu0 %v37
  %102 = vmatpush.msra.mxu0 %v36
  %103 = vmatpush.msra.mxu0 %v35
  %104 = vmatpush.msra.mxu0 %v34
  %105 = vmatpush.msra.mxu0 %v33
  %106 = vmatmul.f32.gmra.mxu0 %v25
  %v107 = vpop.f32.mrf.mxu0
  %v108 = vadd.f32 %v60, %v107
  %109 = vmatmul.f32.gmra.mxu0 %v27
  %v110 = vpop.f32.mrf.mxu0
  %v111 = vadd.f32 %v65, %v110
  %112 = vmatmul.f32.gmra.mxu0 %v29
  %v113 = vpop.f32.mrf.mxu0
  %v114 = vadd.f32 %v70, %v113
  %115 = vmatmul.f32.gmra.mxu0 %v31
  %v116 = vpop.f32.mrf.mxu0
  %v117 = vadd.f32 %v75, %v116
  %118 = vdwg.mxu0
  %119 = vmatpush.msra.mxu0 0.0
  %120 = vmatpush.msra.mxu0 0.0
  %121 = vmatpush.msra.mxu0 0.0
  %122 = vmatpush.msra.mxu0 0.0
  %123 = vmatpush.msra.mxu0 0.0
  %124 = vmatpush.msra.mxu0 0.0
  %125 = vmatpush.msra.mxu0 0.0
  %126 = vmatpush.msra.mxu0 0.0
  %127 = vmatpush.msra.mxu0 0.0
  %128 = vmatpush.msra.mxu0 0.0
  %129 = vmatpush.msra.mxu0 0.0
  %130 = vmatpush.msra.mxu0 0.0
  %131 = vmatpush.msra.mxu0 %v52
  %132 = vmatpush.msra.mxu0 %v51
  %133 = vmatpush.msra.mxu0 %v50
  %134 = vmatpush.msra.mxu0 %v49
  %135 = vmatmul.f32.gmra.mxu0 %v79
  %v136 = vpop.f32.mrf.mxu0
  %v137 = vadd.f32 %v108, %v136
  %138 = vmatmul.f32.gmra.mxu0 %v82
  %v139 = vpop.f32.mrf.mxu0
  %v140 = vadd.f32 %v111, %v139
  %141 = vmatmul.f32.gmra.mxu0 %v85
  %v142 = vpop.f32.mrf.mxu0
  %v143 = vadd.f32 %v114, %v142
  %144 = vmatmul.f32.gmra.mxu0 %v88
  %v145 = vpop.f32.mrf.mxu0
  %v146 = vadd.f32 %v117, %v145
  %147 = vdwg.mxu0
  %v148 = vmax.f32 %v137, 0.0
  %v149 = vmax.f32 %v140, 0.0
  %v150 = vmax.f32 %v143, 0.0
  %v151 = vmax.f32 %v146, 0.0
  %v152 = vld [vmem:[%s3] sm:$0x3f]
  %v153 = vld [vmem:[%s4] sm:$0x3f]
  %155 = vset.pattern.permute.xlu0 0
  %156 = vperm.xlu0 %155, %v153
  %v157 = vpop.permute.xlu0 %156
  %v160 = vsel %vm77, %v152, 0
  %162 = vmatpush.msra.mxu0 0.0
  %163 = vmatpush.msra.mxu0 0.0
  %164 = vmatpush.msra.mxu0 0.0
  %165 = vmatpush.msra.mxu0 0.0
  %166 = vmatpush.msra.mxu0 0.0
  %167 = vmatpush.msra.mxu0 0.0
  %168 = vmatpush.msra.mxu0 0.0
  %169 = vmatpush.msra.mxu0 0.0
  %170 = vmatpush.msra.mxu0 0.0
  %171 = vmatpush.msra.mxu0 0.0
  %172 = vmatpush.msra.mxu0 0.0
  %173 = vmatpush.msra.mxu0 0.0
  %174 = vmatpush.msra.mxu0 %v151
  %175 = vmatpush.msra.mxu0 %v150
  %176 = vmatpush.msra.mxu0 %v149
  %177 = vmatpush.msra.mxu0 %v148
  %178 = vmatmul.f32.gmra.mxu0 %v160
  %v179 = vpop.f32.mrf.mxu0
  %v180 = vadd.f32 %v157, %v179
  %181 = vdwg.mxu0
  %vm182 = vcmask 13312
  %183 = vst.msk [vmem:[%s7] sm:$0x3f] %vm182, %v180
  %v184 = vlaneseq
  %v185 = vand.u32 %v184, 127
  %v186 = vadd.s32 %v185, 128
  %v187 = vadd.s32 %v185, 256
  %v188 = vadd.s32 %v185, 384
  %v189 = vadd.s32 %v185, 512
  %v190 = vadd.s32 %v185, 640
  %v191 = vadd.s32 %v185, 768
  %v192 = vadd.s32 %v185, 896
  %v193 = vadd.s32 %v185, 1024
  %v194 = vadd.s32 %v185, 1152
  %v195 = vadd.s32 %v185, 1280
  %v196 = vadd.s32 %v185, 1408
  %v197 = vadd.s32 %v185, 1536
  %v198 = vadd.s32 %v185, 1664
  %v199 = vadd.s32 %v185, 1792
  %v200 = vadd.s32 %v185, 1920
  %v201 = vand.u32 %v185, 31
  %v202 = vand.u32 %v186, 31
  %v203 = vand.u32 %v187, 31
  %v204 = vand.u32 %v188, 31
  %v205 = vand.u32 %v189, 31
  %v206 = vand.u32 %v190, 31
  %v207 = vand.u32 %v191, 31
  %v208 = vand.u32 %v192, 31
  %v209 = vand.u32 %v193, 31
  %v210 = vand.u32 %v194, 31
  %v211 = vand.u32 %v195, 31
  %v212 = vand.u32 %v196, 31
  %v213 = vand.u32 %v197, 31
  %v214 = vand.u32 %v198, 31
  %v215 = vand.u32 %v199, 31
  %v216 = vand.u32 %v200, 31
  %v217 = vshra.s32 %v185, 5
  %v218 = vshra.s32 %v186, 5
  %v219 = vshra.s32 %v187, 5
  %v220 = vshra.s32 %v188, 5
  %v221 = vshra.s32 %v189, 5
  %v222 = vshra.s32 %v190, 5
  %v223 = vshra.s32 %v191, 5
  %v224 = vshra.s32 %v192, 5
  %v225 = vshra.s32 %v193, 5
  %v226 = vshra.s32 %v194, 5
  %v227 = vshra.s32 %v195, 5
  %v228 = vshra.s32 %v196, 5
  %v229 = vshra.s32 %v197, 5
  %v230 = vshra.s32 %v198, 5
  %v231 = vshra.s32 %v199, 5
  %v232 = vshra.s32 %v200, 5
  %v233 = vand.u32 %v217, 31
  %v234 = vand.u32 %v218, 31
  %v235 = vand.u32 %v219, 31
  %v236 = vand.u32 %v220, 31
  %v237 = vand.u32 %v221, 31
  %v238 = vand.u32 %v222, 31
  %v239 = vand.u32 %v223, 31
  %v240 = vand.u32 %v224, 31
  %v241 = vand.u32 %v225, 31
  %v242 = vand.u32 %v226, 31
  %v243 = vand.u32 %v227, 31
  %v244 = vand.u32 %v228, 31
  %v245 = vand.u32 %v229, 31
  %v246 = vand.u32 %v230, 31
  %v247 = vand.u32 %v231, 31
  %v248 = vand.u32 %v232, 31
  %v249 = vshra.s32 %v185, 10
  %v250 = vshra.s32 %v186, 10
  %v251 = vshra.s32 %v187, 10
  %v252 = vshra.s32 %v188, 10
  %v253 = vshra.s32 %v189, 10
  %v254 = vshra.s32 %v190, 10
  %v255 = vshra.s32 %v191, 10
  %v256 = vshra.s32 %v192, 10
  %v257 = vshra.s32 %v193, 10
  %v258 = vshra.s32 %v194, 10
  %v259 = vshra.s32 %v195, 10
  %v260 = vshra.s32 %v196, 10
  %v261 = vshra.s32 %v197, 10
  %v262 = vshra.s32 %v198, 10
  %v263 = vshra.s32 %v199, 10
  %v264 = vshra.s32 %v200, 10
  %v265 = vcvt.s32.f32 %v201
  %v266 = vcvt.s32.f32 %v202
  %v267 = vcvt.s32.f32 %v203
  %v268 = vcvt.s32.f32 %v204
  %v269 = vcvt.s32.f32 %v205
  %v270 = vcvt.s32.f32 %v206
  %v271 = vcvt.s32.f32 %v207
  %v272 = vcvt.s32.f32 %v208
  %v273 = vcvt.s32.f32 %v209
  %v274 = vcvt.s32.f32 %v210
  %v275 = vcvt.s32.f32 %v211
  %v276 = vcvt.s32.f32 %v212
  %v277 = vcvt.s32.f32 %v213
  %v278 = vcvt.s32.f32 %v214
  %v279 = vcvt.s32.f32 %v215
  %v280 = vcvt.s32.f32 %v216
  %v281 = vmul.f32 %v265, 2.0
  %v282 = vmul.f32 %v266, 2.0
  %v283 = vmul.f32 %v267, 2.0
  %v284 = vmul.f32 %v268, 2.0
  %v285 = vmul.f32 %v269, 2.0
  %v286 = vmul.f32 %v270, 2.0
  %v287 = vmul.f32 %v271, 2.0
  %v288 = vmul.f32 %v272, 2.0
  %v289 = vmul.f32 %v273, 2.0
  %v290 = vmul.f32 %v274, 2.0
  %v291 = vmul.f32 %v275, 2.0
  %v292 = vmul.f32 %v276, 2.0
  %v293 = vmul.f32 %v277, 2.0
  %v294 = vmul.f32 %v278, 2.0
  %v295 = vmul.f32 %v279, 2.0
  %v296 = vmul.f32 %v280, 2.0
  %v297 = vadd.f32 %v281, 1.0
  %v298 = vadd.f32 %v282, 1.0
  %v299 = vadd.f32 %v283, 1.0
  %v300 = vadd.f32 %v284, 1.0
  %v301 = vadd.f32 %v285, 1.0
  %v302 = vadd.f32 %v286, 1.0
  %v303 = vadd.f32 %v287, 1.0
  %v304 = vadd.f32 %v288, 1.0
  %v305 = vadd.f32 %v289, 1.0
  %v306 = vadd.f32 %v290, 1.0
  %v307 = vadd.f32 %v291, 1.0
  %v308 = vadd.f32 %v292, 1.0
  %v309 = vadd.f32 %v293, 1.0
  %v310 = vadd.f32 %v294, 1.0
  %v311 = vadd.f32 %v295, 1.0
  %v312 = vadd.f32 %v296, 1.0
  %v313 = vrcp.pop 32.0
  %v314 = vmul.f32 32.0, %v313
  %v315 = vsub.f32 1.0, %v314
  %v316 = vmul.f32 %v313, %v315
  %v317 = vadd.f32 %v313, %v316
  %vm318 = vweird.f32 %v313
  %v319 = vsel %vm318, %v313, %v317
  %v320 = vmul.f32 %v297, %v319
  %v321 = vmul.f32 %v298, %v319
  %v322 = vmul.f32 %v299, %v319
  %v323 = vmul.f32 %v300, %v319
  %v324 = vmul.f32 %v301, %v319
  %v325 = vmul.f32 %v302, %v319
  %v326 = vmul.f32 %v303, %v319
  %v327 = vmul.f32 %v304, %v319
  %v328 = vmul.f32 %v305, %v319
  %v329 = vmul.f32 %v306, %v319
  %v330 = vmul.f32 %v307, %v319
  %v331 = vmul.f32 %v308, %v319
  %v332 = vmul.f32 %v309, %v319
  %v333 = vmul.f32 %v310, %v319
  %v334 = vmul.f32 %v311, %v319
  %v335 = vmul.f32 %v312, %v319
  %v336 = vsub.f32 %v320, 1.0
  %v337 = vsub.f32 %v321, 1.0
  %v338 = vsub.f32 %v322, 1.0
  %v339 = vsub.f32 %v323, 1.0
  %v340 = vsub.f32 %v324, 1.0
  %v341 = vsub.f32 %v325, 1.0
  %v342 = vsub.f32 %v326, 1.0
  %v343 = vsub.f32 %v327, 1.0
  %v344 = vsub.f32 %v328, 1.0
  %v345 = vsub.f32 %v329, 1.0
  %v346 = vsub.f32 %v330, 1.0
  %v347 = vsub.f32 %v331, 1.0
  %v348 = vsub.f32 %v332, 1.0
  %v349 = vsub.f32 %v333, 1.0
  %v350 = vsub.f32 %v334, 1.0
  %v351 = vsub.f32 %v335, 1.0
  %v352 = vcvt.s32.f32 %v233
  %v353 = vcvt.s32.f32 %v234
  %v354 = vcvt.s32.f32 %v235
  %v355 = vcvt.s32.f32 %v236
  %v356 = vcvt.s32.f32 %v237
  %v357 = vcvt.s32.f32 %v238
  %v358 = vcvt.s32.f32 %v239
  %v359 = vcvt.s32.f32 %v240
  %v360 = vcvt.s32.f32 %v241
  %v361 = vcvt.s32.f32 %v242
  %v362 = vcvt.s32.f32 %v243
  %v363 = vcvt.s32.f32 %v244
  %v364 = vcvt.s32.f32 %v245
  %v365 = vcvt.s32.f32 %v246
  %v366 = vcvt.s32.f32 %v247
  %v367 = vcvt.s32.f32 %v248
  %v368 = vmul.f32 %v352, 2.0
  %v369 = vmul.f32 %v353, 2.0
  %v370 = vmul.f32 %v354, 2.0
  %v371 = vmul.f32 %v355, 2.0
  %v372 = vmul.f32 %v356, 2.0
  %v373 = vmul.f32 %v357, 2.0
  %v374 = vmul.f32 %v358, 2.0
  %v375 = vmul.f32 %v359, 2.0
  %v376 = vmul.f32 %v360, 2.0
  %v377 = vmul.f32 %v361, 2.0
  %v378 = vmul.f32 %v362, 2.0
  %v379 = vmul.f32 %v363, 2.0
  %v380 = vmul.f32 %v364, 2.0
  %v381 = vmul.f32 %v365, 2.0
  %v382 = vmul.f32 %v366, 2.0
  %v383 = vmul.f32 %v367, 2.0
  %v384 = vadd.f32 %v368, 1.0
  %v385 = vadd.f32 %v369, 1.0
  %v386 = vadd.f32 %v370, 1.0
  %v387 = vadd.f32 %v371, 1.0
  %v388 = vadd.f32 %v372, 1.0
  %v389 = vadd.f32 %v373, 1.0
  %v390 = vadd.f32 %v374, 1.0
  %v391 = vadd.f32 %v375, 1.0
  %v392 = vadd.f32 %v376, 1.0
  %v393 = vadd.f32 %v377, 1.0
  %v394 = vadd.f32 %v378, 1.0
  %v395 = vadd.f32 %v379, 1.0
  %v396 = vadd.f32 %v380, 1.0
  %v397 = vadd.f32 %v381, 1.0
  %v398 = vadd.f32 %v382, 1.0
  %v399 = vadd.f32 %v383, 1.0
  %v400 = vmul.f32 %v384, %v319
  %v401 = vmul.f32 %v385, %v319
  %v402 = vmul.f32 %v386, %v319
  %v403 = vmul.f32 %v387, %v319
  %v404 = vmul.f32 %v388, %v319
  %v405 = vmul.f32 %v389, %v319
  %v406 = vmul.f32 %v390, %v319
  %v407 = vmul.f32 %v391, %v319
  %v408 = vmul.f32 %v392, %v319
  %v409 = vmul.f32 %v393, %v319
  %v410 = vmul.f32 %v394, %v319
  %v411 = vmul.f32 %v395, %v319
  %v412 = vmul.f32 %v396, %v319
  %v413 = vmul.f32 %v397, %v319
  %v414 = vmul.f32 %v398, %v319
  %v415 = vmul.f32 %v399, %v319
  %v416 = vsub.f32 %v400, 1.0
  %v417 = vsub.f32 %v401, 1.0
  %v418 = vsub.f32 %v402, 1.0
  %v419 = vsub.f32 %v403, 1.0
  %v420 = vsub.f32 %v404, 1.0
  %v421 = vsub.f32 %v405, 1.0
  %v422 = vsub.f32 %v406, 1.0
  %v423 = vsub.f32 %v407, 1.0
  %v424 = vsub.f32 %v408, 1.0
  %v425 = vsub.f32 %v409, 1.0
  %v426 = vsub.f32 %v410, 1.0
  %v427 = vsub.f32 %v411, 1.0
  %v428 = vsub.f32 %v412, 1.0
  %v429 = vsub.f32 %v413, 1.0
  %v430 = vsub.f32 %v414, 1.0
  %v431 = vsub.f32 %v415, 1.0
  %v432 = vlaneseq
  %v433 = vshrl.u32 %v432, 7
  %vm434 = vcmp.eq.s32.totalorder %v433, %v249
  %vm435 = vcmp.eq.s32.totalorder %v433, %v250
  %vm436 = vcmp.eq.s32.totalorder %v433, %v251
  %vm437 = vcmp.eq.s32.totalorder %v433, %v252
  %vm438 = vcmp.eq.s32.totalorder %v433, %v253
  %vm439 = vcmp.eq.s32.totalorder %v433, %v254
  %vm440 = vcmp.eq.s32.totalorder %v433, %v255
  %vm441 = vcmp.eq.s32.totalorder %v433, %v256
  %vm442 = vcmp.eq.s32.totalorder %v433, %v257
  %vm443 = vcmp.eq.s32.totalorder %v433, %v258
  %vm444 = vcmp.eq.s32.totalorder %v433, %v259
  %vm445 = vcmp.eq.s32.totalorder %v433, %v260
  %vm446 = vcmp.eq.s32.totalorder %v433, %v261
  %vm447 = vcmp.eq.s32.totalorder %v433, %v262
  %vm448 = vcmp.eq.s32.totalorder %v433, %v263
  %vm449 = vcmp.eq.s32.totalorder %v433, %v264
  %v450 = vsel %vm434, 1, 0
  %v451 = vsel %vm435, 1, 0
  %v452 = vsel %vm436, 1, 0
  %v453 = vsel %vm437, 1, 0
  %v454 = vsel %vm438, 1, 0
  %v455 = vsel %vm439, 1, 0
  %v456 = vsel %vm440, 1, 0
  %v457 = vsel %vm441, 1, 0
  %v458 = vsel %vm442, 1, 0
  %v459 = vsel %vm443, 1, 0
  %v460 = vsel %vm444, 1, 0
  %v461 = vsel %vm445, 1, 0
  %v462 = vsel %vm446, 1, 0
  %v463 = vsel %vm447, 1, 0
  %v464 = vsel %vm448, 1, 0
  %v465 = vsel %vm449, 1, 0
  %v466 = vcvt.s32.f32 %v450
  %v467 = vcvt.s32.f32 %v451
  %v468 = vcvt.s32.f32 %v452
  %v469 = vcvt.s32.f32 %v453
  %v470 = vcvt.s32.f32 %v454
  %v471 = vcvt.s32.f32 %v455
  %v472 = vcvt.s32.f32 %v456
  %v473 = vcvt.s32.f32 %v457
  %v474 = vcvt.s32.f32 %v458
  %v475 = vcvt.s32.f32 %v459
  %v476 = vcvt.s32.f32 %v460
  %v477 = vcvt.s32.f32 %v461
  %v478 = vcvt.s32.f32 %v462
  %v479 = vcvt.s32.f32 %v463
  %v480 = vcvt.s32.f32 %v464
  %v481 = vcvt.s32.f32 %v465
  %vm482 = vcmask 15360
  %v484 = vsel %vm482, %v180, 0
  %vm486 = vcmask 1041408
  %v488 = vsel %vm486, %v466, 0
  %v491 = vsel %vm486, %v467, 0
  %v494 = vsel %vm486, %v468, 0
  %v497 = vsel %vm486, %v469, 0
  %v500 = vsel %vm486, %v470, 0
  %v503 = vsel %vm486, %v471, 0
  %v506 = vsel %vm486, %v472, 0
  %v509 = vsel %vm486, %v473, 0
  %v512 = vsel %vm486, %v474, 0
  %v515 = vsel %vm486, %v475, 0
  %v518 = vsel %vm486, %v476, 0
  %v521 = vsel %vm486, %v477, 0
  %v524 = vsel %vm486, %v478, 0
  %v527 = vsel %vm486, %v479, 0
  %v530 = vsel %vm486, %v480, 0
  %v533 = vsel %vm486, %v481, 0
  %535 = vmatpush.msra.mxu0 0.0
  %536 = vmatpush.msra.mxu0 0.0
  %537 = vmatpush.msra.mxu0 0.0
  %538 = vmatpush.msra.mxu0 0.0
  %539 = vmatpush.msra.mxu0 0.0
  %540 = vmatpush.msra.mxu0 0.0
  %541 = vmatpush.msra.mxu0 0.0
  %542 = vmatpush.msra.mxu0 0.0
  %543 = vmatpush.msra.mxu0 0.0
  %544 = vmatpush.msra.mxu0 0.0
  %545 = vmatpush.msra.mxu0 0.0
  %546 = vmatpush.msra.mxu0 0.0
  %547 = vmatpush.msra.mxu0 0.0
  %548 = vmatpush.msra.mxu0 0.0
  %549 = vmatpush.msra.mxu0 0.0
  %550 = vmatpush.msra.mxu0 %v488
  %551 = vmatmul.f32.gmra.mxu0 %v484
  %v552 = vpop.f32.mrf.mxu0
  %v553 = vadd.f32 0.0, %v552
  %554 = vdwg.mxu0
  %555 = vmatpush.msra.mxu0 0.0
  %556 = vmatpush.msra.mxu0 0.0
  %557 = vmatpush.msra.mxu0 0.0
  %558 = vmatpush.msra.mxu0 0.0
  %559 = vmatpush.msra.mxu0 0.0
  %560 = vmatpush.msra.mxu0 0.0
  %561 = vmatpush.msra.mxu0 0.0
  %562 = vmatpush.msra.mxu0 0.0
  %563 = vmatpush.msra.mxu0 0.0
  %564 = vmatpush.msra.mxu0 0.0
  %565 = vmatpush.msra.mxu0 0.0
  %566 = vmatpush.msra.mxu0 0.0
  %567 = vmatpush.msra.mxu0 0.0
  %568 = vmatpush.msra.mxu0 0.0
  %569 = vmatpush.msra.mxu0 0.0
  %570 = vmatpush.msra.mxu0 %v491
  %571 = vmatmul.f32.gmra.mxu0 %v484
  %v572 = vpop.f32.mrf.mxu0
  %v573 = vadd.f32 0.0, %v572
  %574 = vdwg.mxu0
  %575 = vmatpush.msra.mxu0 0.0
  %576 = vmatpush.msra.mxu0 0.0
  %577 = vmatpush.msra.mxu0 0.0
  %578 = vmatpush.msra.mxu0 0.0
  %579 = vmatpush.msra.mxu0 0.0
  %580 = vmatpush.msra.mxu0 0.0
  %581 = vmatpush.msra.mxu0 0.0
  %582 = vmatpush.msra.mxu0 0.0
  %583 = vmatpush.msra.mxu0 0.0
  %584 = vmatpush.msra.mxu0 0.0
  %585 = vmatpush.msra.mxu0 0.0
  %586 = vmatpush.msra.mxu0 0.0
  %587 = vmatpush.msra.mxu0 0.0
  %588 = vmatpush.msra.mxu0 0.0
  %589 = vmatpush.msra.mxu0 0.0
  %590 = vmatpush.msra.mxu0 %v494
  %591 = vmatmul.f32.gmra.mxu0 %v484
  %v592 = vpop.f32.mrf.mxu0
  %v593 = vadd.f32 0.0, %v592
  %594 = vdwg.mxu0
  %595 = vmatpush.msra.mxu0 0.0
  %596 = vmatpush.msra.mxu0 0.0
  %597 = vmatpush.msra.mxu0 0.0
  %598 = vmatpush.msra.mxu0 0.0
  %599 = vmatpush.msra.mxu0 0.0
  %600 = vmatpush.msra.mxu0 0.0
  %601 = vmatpush.msra.mxu0 0.0
  %602 = vmatpush.msra.mxu0 0.0
  %603 = vmatpush.msra.mxu0 0.0
  %604 = vmatpush.msra.mxu0 0.0
  %605 = vmatpush.msra.mxu0 0.0
  %606 = vmatpush.msra.mxu0 0.0
  %607 = vmatpush.msra.mxu0 0.0
  %608 = vmatpush.msra.mxu0 0.0
  %609 = vmatpush.msra.mxu0 0.0
  %610 = vmatpush.msra.mxu0 %v497
  %611 = vmatmul.f32.gmra.mxu0 %v484
  %v612 = vpop.f32.mrf.mxu0
  %v613 = vadd.f32 0.0, %v612
  %614 = vdwg.mxu0
  %615 = vmatpush.msra.mxu0 0.0
  %616 = vmatpush.msra.mxu0 0.0
  %617 = vmatpush.msra.mxu0 0.0
  %618 = vmatpush.msra.mxu0 0.0
  %619 = vmatpush.msra.mxu0 0.0
  %620 = vmatpush.msra.mxu0 0.0
  %621 = vmatpush.msra.mxu0 0.0
  %622 = vmatpush.msra.mxu0 0.0
  %623 = vmatpush.msra.mxu0 0.0
  %624 = vmatpush.msra.mxu0 0.0
  %625 = vmatpush.msra.mxu0 0.0
  %626 = vmatpush.msra.mxu0 0.0
  %627 = vmatpush.msra.mxu0 0.0
  %628 = vmatpush.msra.mxu0 0.0
  %629 = vmatpush.msra.mxu0 0.0
  %630 = vmatpush.msra.mxu0 %v500
  %631 = vmatmul.f32.gmra.mxu0 %v484
  %v632 = vpop.f32.mrf.mxu0
  %v633 = vadd.f32 0.0, %v632
  %634 = vdwg.mxu0
  %635 = vmatpush.msra.mxu0 0.0
  %636 = vmatpush.msra.mxu0 0.0
  %637 = vmatpush.msra.mxu0 0.0
  %638 = vmatpush.msra.mxu0 0.0
  %639 = vmatpush.msra.mxu0 0.0
  %640 = vmatpush.msra.mxu0 0.0
  %641 = vmatpush.msra.mxu0 0.0
  %642 = vmatpush.msra.mxu0 0.0
  %643 = vmatpush.msra.mxu0 0.0
  %644 = vmatpush.msra.mxu0 0.0
  %645 = vmatpush.msra.mxu0 0.0
  %646 = vmatpush.msra.mxu0 0.0
  %647 = vmatpush.msra.mxu0 0.0
  %648 = vmatpush.msra.mxu0 0.0
  %649 = vmatpush.msra.mxu0 0.0
  %650 = vmatpush.msra.mxu0 %v503
  %651 = vmatmul.f32.gmra.mxu0 %v484
  %v652 = vpop.f32.mrf.mxu0
  %v653 = vadd.f32 0.0, %v652
  %654 = vdwg.mxu0
  %655 = vmatpush.msra.mxu0 0.0
  %656 = vmatpush.msra.mxu0 0.0
  %657 = vmatpush.msra.mxu0 0.0
  %658 = vmatpush.msra.mxu0 0.0
  %659 = vmatpush.msra.mxu0 0.0
  %660 = vmatpush.msra.mxu0 0.0
  %661 = vmatpush.msra.mxu0 0.0
  %662 = vmatpush.msra.mxu0 0.0
  %663 = vmatpush.msra.mxu0 0.0
  %664 = vmatpush.msra.mxu0 0.0
  %665 = vmatpush.msra.mxu0 0.0
  %666 = vmatpush.msra.mxu0 0.0
  %667 = vmatpush.msra.mxu0 0.0
  %668 = vmatpush.msra.mxu0 0.0
  %669 = vmatpush.msra.mxu0 0.0
  %670 = vmatpush.msra.mxu0 %v506
  %671 = vmatmul.f32.gmra.mxu0 %v484
  %v672 = vpop.f32.mrf.mxu0
  %v673 = vadd.f32 0.0, %v672
  %674 = vdwg.mxu0
  %675 = vmatpush.msra.mxu0 0.0
  %676 = vmatpush.msra.mxu0 0.0
  %677 = vmatpush.msra.mxu0 0.0
  %678 = vmatpush.msra.mxu0 0.0
  %679 = vmatpush.msra.mxu0 0.0
  %680 = vmatpush.msra.mxu0 0.0
  %681 = vmatpush.msra.mxu0 0.0
  %682 = vmatpush.msra.mxu0 0.0
  %683 = vmatpush.msra.mxu0 0.0
  %684 = vmatpush.msra.mxu0 0.0
  %685 = vmatpush.msra.mxu0 0.0
  %686 = vmatpush.msra.mxu0 0.0
  %687 = vmatpush.msra.mxu0 0.0
  %688 = vmatpush.msra.mxu0 0.0
  %689 = vmatpush.msra.mxu0 0.0
  %690 = vmatpush.msra.mxu0 %v509
  %691 = vmatmul.f32.gmra.mxu0 %v484
  %v692 = vpop.f32.mrf.mxu0
  %v693 = vadd.f32 0.0, %v692
  %694 = vdwg.mxu0
  %695 = vmatpush.msra.mxu0 0.0
  %696 = vmatpush.msra.mxu0 0.0
  %697 = vmatpush.msra.mxu0 0.0
  %698 = vmatpush.msra.mxu0 0.0
  %699 = vmatpush.msra.mxu0 0.0
  %700 = vmatpush.msra.mxu0 0.0
  %701 = vmatpush.msra.mxu0 0.0
  %702 = vmatpush.msra.mxu0 0.0
  %703 = vmatpush.msra.mxu0 0.0
  %704 = vmatpush.msra.mxu0 0.0
  %705 = vmatpush.msra.mxu0 0.0
  %706 = vmatpush.msra.mxu0 0.0
  %707 = vmatpush.msra.mxu0 0.0
  %708 = vmatpush.msra.mxu0 0.0
  %709 = vmatpush.msra.mxu0 0.0
  %710 = vmatpush.msra.mxu0 %v512
  %711 = vmatmul.f32.gmra.mxu0 %v484
  %v712 = vpop.f32.mrf.mxu0
  %v713 = vadd.f32 0.0, %v712
  %714 = vdwg.mxu0
  %715 = vmatpush.msra.mxu0 0.0
  %716 = vmatpush.msra.mxu0 0.0
  %717 = vmatpush.msra.mxu0 0.0
  %718 = vmatpush.msra.mxu0 0.0
  %719 = vmatpush.msra.mxu0 0.0
  %720 = vmatpush.msra.mxu0 0.0
  %721 = vmatpush.msra.mxu0 0.0
  %722 = vmatpush.msra.mxu0 0.0
  %723 = vmatpush.msra.mxu0 0.0
  %724 = vmatpush.msra.mxu0 0.0
  %725 = vmatpush.msra.mxu0 0.0
  %726 = vmatpush.msra.mxu0 0.0
  %727 = vmatpush.msra.mxu0 0.0
  %728 = vmatpush.msra.mxu0 0.0
  %729 = vmatpush.msra.mxu0 0.0
  %730 = vmatpush.msra.mxu0 %v515
  %731 = vmatmul.f32.gmra.mxu0 %v484
  %v732 = vpop.f32.mrf.mxu0
  %v733 = vadd.f32 0.0, %v732
  %734 = vdwg.mxu0
  %735 = vmatpush.msra.mxu0 0.0
  %736 = vmatpush.msra.mxu0 0.0
  %737 = vmatpush.msra.mxu0 0.0
  %738 = vmatpush.msra.mxu0 0.0
  %739 = vmatpush.msra.mxu0 0.0
  %740 = vmatpush.msra.mxu0 0.0
  %741 = vmatpush.msra.mxu0 0.0
  %742 = vmatpush.msra.mxu0 0.0
  %743 = vmatpush.msra.mxu0 0.0
  %744 = vmatpush.msra.mxu0 0.0
  %745 = vmatpush.msra.mxu0 0.0
  %746 = vmatpush.msra.mxu0 0.0
  %747 = vmatpush.msra.mxu0 0.0
  %748 = vmatpush.msra.mxu0 0.0
  %749 = vmatpush.msra.mxu0 0.0
  %750 = vmatpush.msra.mxu0 %v518
  %751 = vmatmul.f32.gmra.mxu0 %v484
  %v752 = vpop.f32.mrf.mxu0
  %v753 = vadd.f32 0.0, %v752
  %754 = vdwg.mxu0
  %755 = vmatpush.msra.mxu0 0.0
  %756 = vmatpush.msra.mxu0 0.0
  %757 = vmatpush.msra.mxu0 0.0
  %758 = vmatpush.msra.mxu0 0.0
  %759 = vmatpush.msra.mxu0 0.0
  %760 = vmatpush.msra.mxu0 0.0
  %761 = vmatpush.msra.mxu0 0.0
  %762 = vmatpush.msra.mxu0 0.0
  %763 = vmatpush.msra.mxu0 0.0
  %764 = vmatpush.msra.mxu0 0.0
  %765 = vmatpush.msra.mxu0 0.0
  %766 = vmatpush.msra.mxu0 0.0
  %767 = vmatpush.msra.mxu0 0.0
  %768 = vmatpush.msra.mxu0 0.0
  %769 = vmatpush.msra.mxu0 0.0
  %770 = vmatpush.msra.mxu0 %v521
  %771 = vmatmul.f32.gmra.mxu0 %v484
  %v772 = vpop.f32.mrf.mxu0
  %v773 = vadd.f32 0.0, %v772
  %774 = vdwg.mxu0
  %775 = vmatpush.msra.mxu0 0.0
  %776 = vmatpush.msra.mxu0 0.0
  %777 = vmatpush.msra.mxu0 0.0
  %778 = vmatpush.msra.mxu0 0.0
  %779 = vmatpush.msra.mxu0 0.0
  %780 = vmatpush.msra.mxu0 0.0
  %781 = vmatpush.msra.mxu0 0.0
  %782 = vmatpush.msra.mxu0 0.0
  %783 = vmatpush.msra.mxu0 0.0
  %784 = vmatpush.msra.mxu0 0.0
  %785 = vmatpush.msra.mxu0 0.0
  %786 = vmatpush.msra.mxu0 0.0
  %787 = vmatpush.msra.mxu0 0.0
  %788 = vmatpush.msra.mxu0 0.0
  %789 = vmatpush.msra.mxu0 0.0
  %790 = vmatpush.msra.mxu0 %v524
  %791 = vmatmul.f32.gmra.mxu0 %v484
  %v792 = vpop.f32.mrf.mxu0
  %v793 = vadd.f32 0.0, %v792
  %794 = vdwg.mxu0
  %795 = vmatpush.msra.mxu0 0.0
  %796 = vmatpush.msra.mxu0 0.0
  %797 = vmatpush.msra.mxu0 0.0
  %798 = vmatpush.msra.mxu0 0.0
  %799 = vmatpush.msra.mxu0 0.0
  %800 = vmatpush.msra.mxu0 0.0
  %801 = vmatpush.msra.mxu0 0.0
  %802 = vmatpush.msra.mxu0 0.0
  %803 = vmatpush.msra.mxu0 0.0
  %804 = vmatpush.msra.mxu0 0.0
  %805 = vmatpush.msra.mxu0 0.0
  %806 = vmatpush.msra.mxu0 0.0
  %807 = vmatpush.msra.mxu0 0.0
  %808 = vmatpush.msra.mxu0 0.0
  %809 = vmatpush.msra.mxu0 0.0
  %810 = vmatpush.msra.mxu0 %v527
  %811 = vmatmul.f32.gmra.mxu0 %v484
  %v812 = vpop.f32.mrf.mxu0
  %v813 = vadd.f32 0.0, %v812
  %814 = vdwg.mxu0
  %815 = vmatpush.msra.mxu0 0.0
  %816 = vmatpush.msra.mxu0 0.0
  %817 = vmatpush.msra.mxu0 0.0
  %818 = vmatpush.msra.mxu0 0.0
  %819 = vmatpush.msra.mxu0 0.0
  %820 = vmatpush.msra.mxu0 0.0
  %821 = vmatpush.msra.mxu0 0.0
  %822 = vmatpush.msra.mxu0 0.0
  %823 = vmatpush.msra.mxu0 0.0
  %824 = vmatpush.msra.mxu0 0.0
  %825 = vmatpush.msra.mxu0 0.0
  %826 = vmatpush.msra.mxu0 0.0
  %827 = vmatpush.msra.mxu0 0.0
  %828 = vmatpush.msra.mxu0 0.0
  %829 = vmatpush.msra.mxu0 0.0
  %830 = vmatpush.msra.mxu0 %v530
  %831 = vmatmul.f32.gmra.mxu0 %v484
  %v832 = vpop.f32.mrf.mxu0
  %v833 = vadd.f32 0.0, %v832
  %834 = vdwg.mxu0
  %835 = vmatpush.msra.mxu0 0.0
  %836 = vmatpush.msra.mxu0 0.0
  %837 = vmatpush.msra.mxu0 0.0
  %838 = vmatpush.msra.mxu0 0.0
  %839 = vmatpush.msra.mxu0 0.0
  %840 = vmatpush.msra.mxu0 0.0
  %841 = vmatpush.msra.mxu0 0.0
  %842 = vmatpush.msra.mxu0 0.0
  %843 = vmatpush.msra.mxu0 0.0
  %844 = vmatpush.msra.mxu0 0.0
  %845 = vmatpush.msra.mxu0 0.0
  %846 = vmatpush.msra.mxu0 0.0
  %847 = vmatpush.msra.mxu0 0.0
  %848 = vmatpush.msra.mxu0 0.0
  %849 = vmatpush.msra.mxu0 0.0
  %850 = vmatpush.msra.mxu0 %v533
  %851 = vmatmul.f32.gmra.mxu0 %v484
  %v852 = vpop.f32.mrf.mxu0
  %v853 = vadd.f32 0.0, %v852
  %854 = vdwg.mxu0
  %v855 = vmul.f32 %v553, %v336
  %v856 = vmul.f32 %v573, %v337
  %v857 = vmul.f32 %v593, %v338
  %v858 = vmul.f32 %v613, %v339
  %v859 = vmul.f32 %v633, %v340
  %v860 = vmul.f32 %v653, %v341
  %v861 = vmul.f32 %v673, %v342
  %v862 = vmul.f32 %v693, %v343
  %v863 = vmul.f32 %v713, %v344
  %v864 = vmul.f32 %v733, %v345
  %v865 = vmul.f32 %v753, %v346
  %v866 = vmul.f32 %v773, %v347
  %v867 = vmul.f32 %v793, %v348
  %v868 = vmul.f32 %v813, %v349
  %v869 = vmul.f32 %v833, %v350
  %v870 = vmul.f32 %v853, %v351
  %v871 = vmul.f32 %v553, %v416
  %v872 = vmul.f32 %v573, %v417
  %v873 = vmul.f32 %v593, %v418
  %v874 = vmul.f32 %v613, %v419
  %v875 = vmul.f32 %v633, %v420
  %v876 = vmul.f32 %v653, %v421
  %v877 = vmul.f32 %v673, %v422
  %v878 = vmul.f32 %v693, %v423
  %v879 = vmul.f32 %v713, %v424
  %v880 = vmul.f32 %v733, %v425
  %v881 = vmul.f32 %v753, %v426
  %v882 = vmul.f32 %v773, %v427
  %v883 = vmul.f32 %v793, %v428
  %v884 = vmul.f32 %v813, %v429
  %v885 = vmul.f32 %v833, %v430
  %v886 = vmul.f32 %v853, %v431
  %v903 = vrot.slane %v871, 1
  %v904 = vrot.slane %v872, 1
  %v905 = vrot.slane %v873, 1
  %v906 = vrot.slane %v874, 1
  %v907 = vrot.slane %v875, 1
  %v908 = vrot.slane %v876, 1
  %v909 = vrot.slane %v877, 1
  %v910 = vrot.slane %v878, 1
  %v911 = vrot.slane %v879, 1
  %v912 = vrot.slane %v880, 1
  %v913 = vrot.slane %v881, 1
  %v914 = vrot.slane %v882, 1
  %v915 = vrot.slane %v883, 1
  %v916 = vrot.slane %v884, 1
  %v917 = vrot.slane %v885, 1
  %v918 = vrot.slane %v886, 1
  %v935 = vadd.f32 %v855, %v903
  %v936 = vadd.f32 %v856, %v904
  %v937 = vadd.f32 %v857, %v905
  %v938 = vadd.f32 %v858, %v906
  %v939 = vadd.f32 %v859, %v907
  %v940 = vadd.f32 %v860, %v908
  %v941 = vadd.f32 %v861, %v909
  %v942 = vadd.f32 %v862, %v910
  %v943 = vadd.f32 %v863, %v911
  %v944 = vadd.f32 %v864, %v912
  %v945 = vadd.f32 %v865, %v913
  %v946 = vadd.f32 %v866, %v914
  %v947 = vadd.f32 %v867, %v915
  %v948 = vadd.f32 %v868, %v916
  %v949 = vadd.f32 %v869, %v917
  %v950 = vadd.f32 %v870, %v918
  %v967 = vrot.slane %v553, 2
  %v968 = vrot.slane %v573, 2
  %v969 = vrot.slane %v593, 2
  %v970 = vrot.slane %v613, 2
  %v971 = vrot.slane %v633, 2
  %v972 = vrot.slane %v653, 2
  %v973 = vrot.slane %v673, 2
  %v974 = vrot.slane %v693, 2
  %v975 = vrot.slane %v713, 2
  %v976 = vrot.slane %v733, 2
  %v977 = vrot.slane %v753, 2
  %v978 = vrot.slane %v773, 2
  %v979 = vrot.slane %v793, 2
  %v980 = vrot.slane %v813, 2
  %v981 = vrot.slane %v833, 2
  %v982 = vrot.slane %v853, 2
  %v999 = vadd.f32 %v935, %v967
  %v1000 = vadd.f32 %v936, %v968
  %v1001 = vadd.f32 %v937, %v969
  %v1002 = vadd.f32 %v938, %v970
  %v1003 = vadd.f32 %v939, %v971
  %v1004 = vadd.f32 %v940, %v972
  %v1005 = vadd.f32 %v941, %v973
  %v1006 = vadd.f32 %v942, %v974
  %v1007 = vadd.f32 %v943, %v975
  %v1008 = vadd.f32 %v944, %v976
  %v1009 = vadd.f32 %v945, %v977
  %v1010 = vadd.f32 %v946, %v978
  %v1011 = vadd.f32 %v947, %v979
  %v1012 = vadd.f32 %v948, %v980
  %v1013 = vadd.f32 %v949, %v981
  %v1014 = vadd.f32 %v950, %v982
  %v1015 = vadd.f32 %v999, 1.0
  %v1016 = vadd.f32 %v1000, 1.0
  %v1017 = vadd.f32 %v1001, 1.0
  %v1018 = vadd.f32 %v1002, 1.0
  %v1019 = vadd.f32 %v1003, 1.0
  %v1020 = vadd.f32 %v1004, 1.0
  %v1021 = vadd.f32 %v1005, 1.0
  %v1022 = vadd.f32 %v1006, 1.0
  %v1023 = vadd.f32 %v1007, 1.0
  %v1024 = vadd.f32 %v1008, 1.0
  %v1025 = vadd.f32 %v1009, 1.0
  %v1026 = vadd.f32 %v1010, 1.0
  %v1027 = vadd.f32 %v1011, 1.0
  %v1028 = vadd.f32 %v1012, 1.0
  %v1029 = vadd.f32 %v1013, 1.0
  %v1030 = vadd.f32 %v1014, 1.0
  %v1031 = vmul.f32 %v1015, 32.0
  %v1032 = vmul.f32 %v1016, 32.0
  %v1033 = vmul.f32 %v1017, 32.0
  %v1034 = vmul.f32 %v1018, 32.0
  %v1035 = vmul.f32 %v1019, 32.0
  %v1036 = vmul.f32 %v1020, 32.0
  %v1037 = vmul.f32 %v1021, 32.0
  %v1038 = vmul.f32 %v1022, 32.0
  %v1039 = vmul.f32 %v1023, 32.0
  %v1040 = vmul.f32 %v1024, 32.0
  %v1041 = vmul.f32 %v1025, 32.0
  %v1042 = vmul.f32 %v1026, 32.0
  %v1043 = vmul.f32 %v1027, 32.0
  %v1044 = vmul.f32 %v1028, 32.0
  %v1045 = vmul.f32 %v1029, 32.0
  %v1046 = vmul.f32 %v1030, 32.0
  %v1047 = vsub.f32 %v1031, 1.0
  %v1048 = vsub.f32 %v1032, 1.0
  %v1049 = vsub.f32 %v1033, 1.0
  %v1050 = vsub.f32 %v1034, 1.0
  %v1051 = vsub.f32 %v1035, 1.0
  %v1052 = vsub.f32 %v1036, 1.0
  %v1053 = vsub.f32 %v1037, 1.0
  %v1054 = vsub.f32 %v1038, 1.0
  %v1055 = vsub.f32 %v1039, 1.0
  %v1056 = vsub.f32 %v1040, 1.0
  %v1057 = vsub.f32 %v1041, 1.0
  %v1058 = vsub.f32 %v1042, 1.0
  %v1059 = vsub.f32 %v1043, 1.0
  %v1060 = vsub.f32 %v1044, 1.0
  %v1061 = vsub.f32 %v1045, 1.0
  %v1062 = vsub.f32 %v1046, 1.0
  %v1063 = vmul.f32 %v1047, 0.5
  %v1064 = vmul.f32 %v1048, 0.5
  %v1065 = vmul.f32 %v1049, 0.5
  %v1066 = vmul.f32 %v1050, 0.5
  %v1067 = vmul.f32 %v1051, 0.5
  %v1068 = vmul.f32 %v1052, 0.5
  %v1069 = vmul.f32 %v1053, 0.5
  %v1070 = vmul.f32 %v1054, 0.5
  %v1071 = vmul.f32 %v1055, 0.5
  %v1072 = vmul.f32 %v1056, 0.5
  %v1073 = vmul.f32 %v1057, 0.5
  %v1074 = vmul.f32 %v1058, 0.5
  %v1075 = vmul.f32 %v1059, 0.5
  %v1076 = vmul.f32 %v1060, 0.5
  %v1077 = vmul.f32 %v1061, 0.5
  %v1078 = vmul.f32 %v1062, 0.5
  %v1079 = vfloor.f32 %v1063
  %v1080 = vfloor.f32 %v1064
  %v1081 = vfloor.f32 %v1065
  %v1082 = vfloor.f32 %v1066
  %v1083 = vfloor.f32 %v1067
  %v1084 = vfloor.f32 %v1068
  %v1085 = vfloor.f32 %v1069
  %v1086 = vfloor.f32 %v1070
  %v1087 = vfloor.f32 %v1071
  %v1088 = vfloor.f32 %v1072
  %v1089 = vfloor.f32 %v1073
  %v1090 = vfloor.f32 %v1074
  %v1091 = vfloor.f32 %v1075
  %v1092 = vfloor.f32 %v1076
  %v1093 = vfloor.f32 %v1077
  %v1094 = vfloor.f32 %v1078
  %v1095 = vsub.f32 %v1063, %v1079
  %v1096 = vsub.f32 %v1064, %v1080
  %v1097 = vsub.f32 %v1065, %v1081
  %v1098 = vsub.f32 %v1066, %v1082
  %v1099 = vsub.f32 %v1067, %v1083
  %v1100 = vsub.f32 %v1068, %v1084
  %v1101 = vsub.f32 %v1069, %v1085
  %v1102 = vsub.f32 %v1070, %v1086
  %v1103 = vsub.f32 %v1071, %v1087
  %v1104 = vsub.f32 %v1072, %v1088
  %v1105 = vsub.f32 %v1073, %v1089
  %v1106 = vsub.f32 %v1074, %v1090
  %v1107 = vsub.f32 %v1075, %v1091
  %v1108 = vsub.f32 %v1076, %v1092
  %v1109 = vsub.f32 %v1077, %v1093
  %v1110 = vsub.f32 %v1078, %v1094
  %v1111 = vsub.f32 1.0, %v1095
  %v1112 = vsub.f32 1.0, %v1096
  %v1113 = vsub.f32 1.0, %v1097
  %v1114 = vsub.f32 1.0, %v1098
  %v1115 = vsub.f32 1.0, %v1099
  %v1116 = vsub.f32 1.0, %v1100
  %v1117 = vsub.f32 1.0, %v1101
  %v1118 = vsub.f32 1.0, %v1102
  %v1119 = vsub.f32 1.0, %v1103
  %v1120 = vsub.f32 1.0, %v1104
  %v1121 = vsub.f32 1.0, %v1105
  %v1122 = vsub.f32 1.0, %v1106
  %v1123 = vsub.f32 1.0, %v1107
  %v1124 = vsub.f32 1.0, %v1108
  %v1125 = vsub.f32 1.0, %v1109
  %v1126 = vsub.f32 1.0, %v1110
  %v1127 = vcvt.f32.s32.to.zero.pseudo %v1079
  %v1128 = vcvt.f32.s32.to.zero.pseudo %v1080
  %v1129 = vcvt.f32.s32.to.zero.pseudo %v1081
  %v1130 = vcvt.f32.s32.to.zero.pseudo %v1082
  %v1131 = vcvt.f32.s32.to.zero.pseudo %v1083
  %v1132 = vcvt.f32.s32.to.zero.pseudo %v1084
  %v1133 = vcvt.f32.s32.to.zero.pseudo %v1085
  %v1134 = vcvt.f32.s32.to.zero.pseudo %v1086
  %v1135 = vcvt.f32.s32.to.zero.pseudo %v1087
  %v1136 = vcvt.f32.s32.to.zero.pseudo %v1088
  %v1137 = vcvt.f32.s32.to.zero.pseudo %v1089
  %v1138 = vcvt.f32.s32.to.zero.pseudo %v1090
  %v1139 = vcvt.f32.s32.to.zero.pseudo %v1091
  %v1140 = vcvt.f32.s32.to.zero.pseudo %v1092
  %v1141 = vcvt.f32.s32.to.zero.pseudo %v1093
  %v1142 = vcvt.f32.s32.to.zero.pseudo %v1094
  %v1143 = vadd.s32 %v1127, 1
  %v1144 = vadd.s32 %v1128, 1
  %v1145 = vadd.s32 %v1129, 1
  %v1146 = vadd.s32 %v1130, 1
  %v1147 = vadd.s32 %v1131, 1
  %v1148 = vadd.s32 %v1132, 1
  %v1149 = vadd.s32 %v1133, 1
  %v1150 = vadd.s32 %v1134, 1
  %v1151 = vadd.s32 %v1135, 1
  %v1152 = vadd.s32 %v1136, 1
  %v1153 = vadd.s32 %v1137, 1
  %v1154 = vadd.s32 %v1138, 1
  %v1155 = vadd.s32 %v1139, 1
  %v1156 = vadd.s32 %v1140, 1
  %v1157 = vadd.s32 %v1141, 1
  %v1158 = vadd.s32 %v1142, 1
  %vm1159 = vcmp.ge.s32.totalorder %v1127, 0
  %vm1160 = vcmp.ge.s32.totalorder %v1128, 0
  %vm1161 = vcmp.ge.s32.totalorder %v1129, 0
  %vm1162 = vcmp.ge.s32.totalorder %v1130, 0
  %vm1163 = vcmp.ge.s32.totalorder %v1131, 0
  %vm1164 = vcmp.ge.s32.totalorder %v1132, 0
  %vm1165 = vcmp.ge.s32.totalorder %v1133, 0
  %vm1166 = vcmp.ge.s32.totalorder %v1134, 0
  %vm1167 = vcmp.ge.s32.totalorder %v1135, 0
  %vm1168 = vcmp.ge.s32.totalorder %v1136, 0
  %vm1169 = vcmp.ge.s32.totalorder %v1137, 0
  %vm1170 = vcmp.ge.s32.totalorder %v1138, 0
  %vm1171 = vcmp.ge.s32.totalorder %v1139, 0
  %vm1172 = vcmp.ge.s32.totalorder %v1140, 0
  %vm1173 = vcmp.ge.s32.totalorder %v1141, 0
  %vm1174 = vcmp.ge.s32.totalorder %v1142, 0
  %vm1175 = vcmp.lt.s32.totalorder %v1127, 32
  %vm1176 = vcmp.lt.s32.totalorder %v1128, 32
  %vm1177 = vcmp.lt.s32.totalorder %v1129, 32
  %vm1178 = vcmp.lt.s32.totalorder %v1130, 32
  %vm1179 = vcmp.lt.s32.totalorder %v1131, 32
  %vm1180 = vcmp.lt.s32.totalorder %v1132, 32
  %vm1181 = vcmp.lt.s32.totalorder %v1133, 32
  %vm1182 = vcmp.lt.s32.totalorder %v1134, 32
  %vm1183 = vcmp.lt.s32.totalorder %v1135, 32
  %vm1184 = vcmp.lt.s32.totalorder %v1136, 32
  %vm1185 = vcmp.lt.s32.totalorder %v1137, 32
  %vm1186 = vcmp.lt.s32.totalorder %v1138, 32
  %vm1187 = vcmp.lt.s32.totalorder %v1139, 32
  %vm1188 = vcmp.lt.s32.totalorder %v1140, 32
  %vm1189 = vcmp.lt.s32.totalorder %v1141, 32
  %vm1190 = vcmp.lt.s32.totalorder %v1142, 32
  %vm1191 = vmand %vm1159, %vm1175
  %vm1192 = vmand %vm1160, %vm1176
  %vm1193 = vmand %vm1161, %vm1177
  %vm1194 = vmand %vm1162, %vm1178
  %vm1195 = vmand %vm1163, %vm1179
  %vm1196 = vmand %vm1164, %vm1180
  %vm1197 = vmand %vm1165, %vm1181
  %vm1198 = vmand %vm1166, %vm1182
  %vm1199 = vmand %vm1167, %vm1183
  %vm1200 = vmand %vm1168, %vm1184
  %vm1201 = vmand %vm1169, %vm1185
  %vm1202 = vmand %vm1170, %vm1186
  %vm1203 = vmand %vm1171, %vm1187
  %vm1204 = vmand %vm1172, %vm1188
  %vm1205 = vmand %vm1173, %vm1189
  %vm1206 = vmand %vm1174, %vm1190
  %v1207 = vsel %vm1191, 1, 0
  %v1208 = vsel %vm1192, 1, 0
  %v1209 = vsel %vm1193, 1, 0
  %v1210 = vsel %vm1194, 1, 0
  %v1211 = vsel %vm1195, 1, 0
  %v1212 = vsel %vm1196, 1, 0
  %v1213 = vsel %vm1197, 1, 0
  %v1214 = vsel %vm1198, 1, 0
  %v1215 = vsel %vm1199, 1, 0
  %v1216 = vsel %vm1200, 1, 0
  %v1217 = vsel %vm1201, 1, 0
  %v1218 = vsel %vm1202, 1, 0
  %v1219 = vsel %vm1203, 1, 0
  %v1220 = vsel %vm1204, 1, 0
  %v1221 = vsel %vm1205, 1, 0
  %v1222 = vsel %vm1206, 1, 0
  %v1223 = vcvt.s32.f32 %v1207
  %v1224 = vcvt.s32.f32 %v1208
  %v1225 = vcvt.s32.f32 %v1209
  %v1226 = vcvt.s32.f32 %v1210
  %v1227 = vcvt.s32.f32 %v1211
  %v1228 = vcvt.s32.f32 %v1212
  %v1229 = vcvt.s32.f32 %v1213
  %v1230 = vcvt.s32.f32 %v1214
  %v1231 = vcvt.s32.f32 %v1215
  %v1232 = vcvt.s32.f32 %v1216
  %v1233 = vcvt.s32.f32 %v1217
  %v1234 = vcvt.s32.f32 %v1218
  %v1235 = vcvt.s32.f32 %v1219
  %v1236 = vcvt.s32.f32 %v1220
  %v1237 = vcvt.s32.f32 %v1221
  %v1238 = vcvt.s32.f32 %v1222
  %vm1239 = vcmp.ge.s32.totalorder %v1143, 0
  %vm1240 = vcmp.ge.s32.totalorder %v1144, 0
  %vm1241 = vcmp.ge.s32.totalorder %v1145, 0
  %vm1242 = vcmp.ge.s32.totalorder %v1146, 0
  %vm1243 = vcmp.ge.s32.totalorder %v1147, 0
  %vm1244 = vcmp.ge.s32.totalorder %v1148, 0
  %vm1245 = vcmp.ge.s32.totalorder %v1149, 0
  %vm1246 = vcmp.ge.s32.totalorder %v1150, 0
  %vm1247 = vcmp.ge.s32.totalorder %v1151, 0
  %vm1248 = vcmp.ge.s32.totalorder %v1152, 0
  %vm1249 = vcmp.ge.s32.totalorder %v1153, 0
  %vm1250 = vcmp.ge.s32.totalorder %v1154, 0
  %vm1251 = vcmp.ge.s32.totalorder %v1155, 0
  %vm1252 = vcmp.ge.s32.totalorder %v1156, 0
  %vm1253 = vcmp.ge.s32.totalorder %v1157, 0
  %vm1254 = vcmp.ge.s32.totalorder %v1158, 0
  %vm1255 = vcmp.lt.s32.totalorder %v1143, 32
  %vm1256 = vcmp.lt.s32.totalorder %v1144, 32
  %vm1257 = vcmp.lt.s32.totalorder %v1145, 32
  %vm1258 = vcmp.lt.s32.totalorder %v1146, 32
  %vm1259 = vcmp.lt.s32.totalorder %v1147, 32
  %vm1260 = vcmp.lt.s32.totalorder %v1148, 32
  %vm1261 = vcmp.lt.s32.totalorder %v1149, 32
  %vm1262 = vcmp.lt.s32.totalorder %v1150, 32
  %vm1263 = vcmp.lt.s32.totalorder %v1151, 32
  %vm1264 = vcmp.lt.s32.totalorder %v1152, 32
  %vm1265 = vcmp.lt.s32.totalorder %v1153, 32
  %vm1266 = vcmp.lt.s32.totalorder %v1154, 32
  %vm1267 = vcmp.lt.s32.totalorder %v1155, 32
  %vm1268 = vcmp.lt.s32.totalorder %v1156, 32
  %vm1269 = vcmp.lt.s32.totalorder %v1157, 32
  %vm1270 = vcmp.lt.s32.totalorder %v1158, 32
  %vm1271 = vmand %vm1239, %vm1255
  %vm1272 = vmand %vm1240, %vm1256
  %vm1273 = vmand %vm1241, %vm1257
  %vm1274 = vmand %vm1242, %vm1258
  %vm1275 = vmand %vm1243, %vm1259
  %vm1276 = vmand %vm1244, %vm1260
  %vm1277 = vmand %vm1245, %vm1261
  %vm1278 = vmand %vm1246, %vm1262
  %vm1279 = vmand %vm1247, %vm1263
  %vm1280 = vmand %vm1248, %vm1264
  %vm1281 = vmand %vm1249, %vm1265
  %vm1282 = vmand %vm1250, %vm1266
  %vm1283 = vmand %vm1251, %vm1267
  %vm1284 = vmand %vm1252, %vm1268
  %vm1285 = vmand %vm1253, %vm1269
  %vm1286 = vmand %vm1254, %vm1270
  %v1287 = vsel %vm1271, 1, 0
  %v1288 = vsel %vm1272, 1, 0
  %v1289 = vsel %vm1273, 1, 0
  %v1290 = vsel %vm1274, 1, 0
  %v1291 = vsel %vm1275, 1, 0
  %v1292 = vsel %vm1276, 1, 0
  %v1293 = vsel %vm1277, 1, 0
  %v1294 = vsel %vm1278, 1, 0
  %v1295 = vsel %vm1279, 1, 0
  %v1296 = vsel %vm1280, 1, 0
  %v1297 = vsel %vm1281, 1, 0
  %v1298 = vsel %vm1282, 1, 0
  %v1299 = vsel %vm1283, 1, 0
  %v1300 = vsel %vm1284, 1, 0
  %v1301 = vsel %vm1285, 1, 0
  %v1302 = vsel %vm1286, 1, 0
  %v1303 = vcvt.s32.f32 %v1287
  %v1304 = vcvt.s32.f32 %v1288
  %v1305 = vcvt.s32.f32 %v1289
  %v1306 = vcvt.s32.f32 %v1290
  %v1307 = vcvt.s32.f32 %v1291
  %v1308 = vcvt.s32.f32 %v1292
  %v1309 = vcvt.s32.f32 %v1293
  %v1310 = vcvt.s32.f32 %v1294
  %v1311 = vcvt.s32.f32 %v1295
  %v1312 = vcvt.s32.f32 %v1296
  %v1313 = vcvt.s32.f32 %v1297
  %v1314 = vcvt.s32.f32 %v1298
  %v1315 = vcvt.s32.f32 %v1299
  %v1316 = vcvt.s32.f32 %v1300
  %v1317 = vcvt.s32.f32 %v1301
  %v1318 = vcvt.s32.f32 %v1302
  %v1319 = vadd.s32 %v433, 8
  %v1320 = vadd.s32 %v433, 16
  %v1321 = vadd.s32 %v433, 24
  %v1322 = vadd.s32 %v433, 32
  %v1323 = vadd.s32 %v433, 40
  %v1324 = vadd.s32 %v433, 48
  %v1325 = vadd.s32 %v433, 56
  %v1326 = vmul.u32 %v249, 32
  %v1327 = vmul.u32 %v250, 32
  %v1328 = vmul.u32 %v251, 32
  %v1329 = vmul.u32 %v252, 32
  %v1330 = vmul.u32 %v253, 32
  %v1331 = vmul.u32 %v254, 32
  %v1332 = vmul.u32 %v255, 32
  %v1333 = vmul.u32 %v256, 32
  %v1334 = vmul.u32 %v257, 32
  %v1335 = vmul.u32 %v258, 32
  %v1336 = vmul.u32 %v259, 32
  %v1337 = vmul.u32 %v260, 32
  %v1338 = vmul.u32 %v261, 32
  %v1339 = vmul.u32 %v262, 32
  %v1340 = vmul.u32 %v263, 32
  %v1341 = vmul.u32 %v264, 32
  %v1342 = vadd.s32 %v1326, %v1127
  %v1343 = vadd.s32 %v1327, %v1128
  %v1344 = vadd.s32 %v1328, %v1129
  %v1345 = vadd.s32 %v1329, %v1130
  %v1346 = vadd.s32 %v1330, %v1131
  %v1347 = vadd.s32 %v1331, %v1132
  %v1348 = vadd.s32 %v1332, %v1133
  %v1349 = vadd.s32 %v1333, %v1134
  %v1350 = vadd.s32 %v1334, %v1135
  %v1351 = vadd.s32 %v1335, %v1136
  %v1352 = vadd.s32 %v1336, %v1137
  %v1353 = vadd.s32 %v1337, %v1138
  %v1354 = vadd.s32 %v1338, %v1139
  %v1355 = vadd.s32 %v1339, %v1140
  %v1356 = vadd.s32 %v1340, %v1141
  %v1357 = vadd.s32 %v1341, %v1142
  %v1358 = vadd.s32 %v1326, %v1143
  %v1359 = vadd.s32 %v1327, %v1144
  %v1360 = vadd.s32 %v1328, %v1145
  %v1361 = vadd.s32 %v1329, %v1146
  %v1362 = vadd.s32 %v1330, %v1147
  %v1363 = vadd.s32 %v1331, %v1148
  %v1364 = vadd.s32 %v1332, %v1149
  %v1365 = vadd.s32 %v1333, %v1150
  %v1366 = vadd.s32 %v1334, %v1151
  %v1367 = vadd.s32 %v1335, %v1152
  %v1368 = vadd.s32 %v1336, %v1153
  %v1369 = vadd.s32 %v1337, %v1154
  %v1370 = vadd.s32 %v1338, %v1155
  %v1371 = vadd.s32 %v1339, %v1156
  %v1372 = vadd.s32 %v1340, %v1157
  %v1373 = vadd.s32 %v1341, %v1158
  %v1374 = vperm.slane %v1342, 3
  %v1375 = vperm.slane %v1343, 3
  %v1376 = vperm.slane %v1344, 3
  %v1377 = vperm.slane %v1345, 3
  %v1378 = vperm.slane %v1346, 3
  %v1379 = vperm.slane %v1347, 3
  %v1380 = vperm.slane %v1348, 3
  %v1381 = vperm.slane %v1349, 3
  %v1382 = vperm.slane %v1350, 3
  %v1383 = vperm.slane %v1351, 3
  %v1384 = vperm.slane %v1352, 3
  %v1385 = vperm.slane %v1353, 3
  %v1386 = vperm.slane %v1354, 3
  %v1387 = vperm.slane %v1355, 3
  %v1388 = vperm.slane %v1356, 3
  %v1389 = vperm.slane %v1357, 3
  %vm1390 = vcmp.eq.s32.totalorder %v433, %v1374
  %vm1391 = vcmp.eq.s32.totalorder %v433, %v1375
  %vm1392 = vcmp.eq.s32.totalorder %v433, %v1376
  %vm1393 = vcmp.eq.s32.totalorder %v433, %v1377
  %vm1394 = vcmp.eq.s32.totalorder %v433, %v1378
  %vm1395 = vcmp.eq.s32.totalorder %v433, %v1379
  %vm1396 = vcmp.eq.s32.totalorder %v433, %v1380
  %vm1397 = vcmp.eq.s32.totalorder %v433, %v1381
  %vm1398 = vcmp.eq.s32.totalorder %v433, %v1382
  %vm1399 = vcmp.eq.s32.totalorder %v433, %v1383
  %vm1400 = vcmp.eq.s32.totalorder %v433, %v1384
  %vm1401 = vcmp.eq.s32.totalorder %v433, %v1385
  %vm1402 = vcmp.eq.s32.totalorder %v433, %v1386
  %vm1403 = vcmp.eq.s32.totalorder %v433, %v1387
  %vm1404 = vcmp.eq.s32.totalorder %v433, %v1388
  %vm1405 = vcmp.eq.s32.totalorder %v433, %v1389
  %vm1406 = vcmp.eq.s32.totalorder %v1319, %v1374
  %vm1407 = vcmp.eq.s32.totalorder %v1319, %v1375
  %vm1408 = vcmp.eq.s32.totalorder %v1319, %v1376
  %vm1409 = vcmp.eq.s32.totalorder %v1319, %v1377
  %vm1410 = vcmp.eq.s32.totalorder %v1319, %v1378
  %vm1411 = vcmp.eq.s32.totalorder %v1319, %v1379
  %vm1412 = vcmp.eq.s32.totalorder %v1319, %v1380
  %vm1413 = vcmp.eq.s32.totalorder %v1319, %v1381
  %vm1414 = vcmp.eq.s32.totalorder %v1319, %v1382
  %vm1415 = vcmp.eq.s32.totalorder %v1319, %v1383
  %vm1416 = vcmp.eq.s32.totalorder %v1319, %v1384
  %vm1417 = vcmp.eq.s32.totalorder %v1319, %v1385
  %vm1418 = vcmp.eq.s32.totalorder %v1319, %v1386
  %vm1419 = vcmp.eq.s32.totalorder %v1319, %v1387
  %vm1420 = vcmp.eq.s32.totalorder %v1319, %v1388
  %vm1421 = vcmp.eq.s32.totalorder %v1319, %v1389
  %vm1422 = vcmp.eq.s32.totalorder %v1320, %v1374
  %vm1423 = vcmp.eq.s32.totalorder %v1320, %v1375
  %vm1424 = vcmp.eq.s32.totalorder %v1320, %v1376
  %vm1425 = vcmp.eq.s32.totalorder %v1320, %v1377
  %vm1426 = vcmp.eq.s32.totalorder %v1320, %v1378
  %vm1427 = vcmp.eq.s32.totalorder %v1320, %v1379
  %vm1428 = vcmp.eq.s32.totalorder %v1320, %v1380
  %vm1429 = vcmp.eq.s32.totalorder %v1320, %v1381
  %vm1430 = vcmp.eq.s32.totalorder %v1320, %v1382
  %vm1431 = vcmp.eq.s32.totalorder %v1320, %v1383
  %vm1432 = vcmp.eq.s32.totalorder %v1320, %v1384
  %vm1433 = vcmp.eq.s32.totalorder %v1320, %v1385
  %vm1434 = vcmp.eq.s32.totalorder %v1320, %v1386
  %vm1435 = vcmp.eq.s32.totalorder %v1320, %v1387
  %vm1436 = vcmp.eq.s32.totalorder %v1320, %v1388
  %vm1437 = vcmp.eq.s32.totalorder %v1320, %v1389
  %vm1438 = vcmp.eq.s32.totalorder %v1321, %v1374
  %vm1439 = vcmp.eq.s32.totalorder %v1321, %v1375
  %vm1440 = vcmp.eq.s32.totalorder %v1321, %v1376
  %vm1441 = vcmp.eq.s32.totalorder %v1321, %v1377
  %vm1442 = vcmp.eq.s32.totalorder %v1321, %v1378
  %vm1443 = vcmp.eq.s32.totalorder %v1321, %v1379
  %vm1444 = vcmp.eq.s32.totalorder %v1321, %v1380
  %vm1445 = vcmp.eq.s32.totalorder %v1321, %v1381
  %vm1446 = vcmp.eq.s32.totalorder %v1321, %v1382
  %vm1447 = vcmp.eq.s32.totalorder %v1321, %v1383
  %vm1448 = vcmp.eq.s32.totalorder %v1321, %v1384
  %vm1449 = vcmp.eq.s32.totalorder %v1321, %v1385
  %vm1450 = vcmp.eq.s32.totalorder %v1321, %v1386
  %vm1451 = vcmp.eq.s32.totalorder %v1321, %v1387
  %vm1452 = vcmp.eq.s32.totalorder %v1321, %v1388
  %vm1453 = vcmp.eq.s32.totalorder %v1321, %v1389
  %vm1454 = vcmp.eq.s32.totalorder %v1322, %v1374
  %vm1455 = vcmp.eq.s32.totalorder %v1322, %v1375
  %vm1456 = vcmp.eq.s32.totalorder %v1322, %v1376
  %vm1457 = vcmp.eq.s32.totalorder %v1322, %v1377
  %vm1458 = vcmp.eq.s32.totalorder %v1322, %v1378
  %vm1459 = vcmp.eq.s32.totalorder %v1322, %v1379
  %vm1460 = vcmp.eq.s32.totalorder %v1322, %v1380
  %vm1461 = vcmp.eq.s32.totalorder %v1322, %v1381
  %vm1462 = vcmp.eq.s32.totalorder %v1322, %v1382
  %vm1463 = vcmp.eq.s32.totalorder %v1322, %v1383
  %vm1464 = vcmp.eq.s32.totalorder %v1322, %v1384
  %vm1465 = vcmp.eq.s32.totalorder %v1322, %v1385
  %vm1466 = vcmp.eq.s32.totalorder %v1322, %v1386
  %vm1467 = vcmp.eq.s32.totalorder %v1322, %v1387
  %vm1468 = vcmp.eq.s32.totalorder %v1322, %v1388
  %vm1469 = vcmp.eq.s32.totalorder %v1322, %v1389
  %vm1470 = vcmp.eq.s32.totalorder %v1323, %v1374
  %vm1471 = vcmp.eq.s32.totalorder %v1323, %v1375
  %vm1472 = vcmp.eq.s32.totalorder %v1323, %v1376
  %vm1473 = vcmp.eq.s32.totalorder %v1323, %v1377
  %vm1474 = vcmp.eq.s32.totalorder %v1323, %v1378
  %vm1475 = vcmp.eq.s32.totalorder %v1323, %v1379
  %vm1476 = vcmp.eq.s32.totalorder %v1323, %v1380
  %vm1477 = vcmp.eq.s32.totalorder %v1323, %v1381
  %vm1478 = vcmp.eq.s32.totalorder %v1323, %v1382
  %vm1479 = vcmp.eq.s32.totalorder %v1323, %v1383
  %vm1480 = vcmp.eq.s32.totalorder %v1323, %v1384
  %vm1481 = vcmp.eq.s32.totalorder %v1323, %v1385
  %vm1482 = vcmp.eq.s32.totalorder %v1323, %v1386
  %vm1483 = vcmp.eq.s32.totalorder %v1323, %v1387
  %vm1484 = vcmp.eq.s32.totalorder %v1323, %v1388
  %vm1485 = vcmp.eq.s32.totalorder %v1323, %v1389
  %vm1486 = vcmp.eq.s32.totalorder %v1324, %v1374
  %vm1487 = vcmp.eq.s32.totalorder %v1324, %v1375
  %vm1488 = vcmp.eq.s32.totalorder %v1324, %v1376
  %vm1489 = vcmp.eq.s32.totalorder %v1324, %v1377
  %vm1490 = vcmp.eq.s32.totalorder %v1324, %v1378
  %vm1491 = vcmp.eq.s32.totalorder %v1324, %v1379
  %vm1492 = vcmp.eq.s32.totalorder %v1324, %v1380
  %vm1493 = vcmp.eq.s32.totalorder %v1324, %v1381
  %vm1494 = vcmp.eq.s32.totalorder %v1324, %v1382
  %vm1495 = vcmp.eq.s32.totalorder %v1324, %v1383
  %vm1496 = vcmp.eq.s32.totalorder %v1324, %v1384
  %vm1497 = vcmp.eq.s32.totalorder %v1324, %v1385
  %vm1498 = vcmp.eq.s32.totalorder %v1324, %v1386
  %vm1499 = vcmp.eq.s32.totalorder %v1324, %v1387
  %vm1500 = vcmp.eq.s32.totalorder %v1324, %v1388
  %vm1501 = vcmp.eq.s32.totalorder %v1324, %v1389
  %vm1502 = vcmp.eq.s32.totalorder %v1325, %v1374
  %vm1503 = vcmp.eq.s32.totalorder %v1325, %v1375
  %vm1504 = vcmp.eq.s32.totalorder %v1325, %v1376
  %vm1505 = vcmp.eq.s32.totalorder %v1325, %v1377
  %vm1506 = vcmp.eq.s32.totalorder %v1325, %v1378
  %vm1507 = vcmp.eq.s32.totalorder %v1325, %v1379
  %vm1508 = vcmp.eq.s32.totalorder %v1325, %v1380
  %vm1509 = vcmp.eq.s32.totalorder %v1325, %v1381
  %vm1510 = vcmp.eq.s32.totalorder %v1325, %v1382
  %vm1511 = vcmp.eq.s32.totalorder %v1325, %v1383
  %vm1512 = vcmp.eq.s32.totalorder %v1325, %v1384
  %vm1513 = vcmp.eq.s32.totalorder %v1325, %v1385
  %vm1514 = vcmp.eq.s32.totalorder %v1325, %v1386
  %vm1515 = vcmp.eq.s32.totalorder %v1325, %v1387
  %vm1516 = vcmp.eq.s32.totalorder %v1325, %v1388
  %vm1517 = vcmp.eq.s32.totalorder %v1325, %v1389
  %v1518 = vsel %vm1390, 1, 0
  %v1519 = vsel %vm1391, 1, 0
  %v1520 = vsel %vm1392, 1, 0
  %v1521 = vsel %vm1393, 1, 0
  %v1522 = vsel %vm1394, 1, 0
  %v1523 = vsel %vm1395, 1, 0
  %v1524 = vsel %vm1396, 1, 0
  %v1525 = vsel %vm1397, 1, 0
  %v1526 = vsel %vm1398, 1, 0
  %v1527 = vsel %vm1399, 1, 0
  %v1528 = vsel %vm1400, 1, 0
  %v1529 = vsel %vm1401, 1, 0
  %v1530 = vsel %vm1402, 1, 0
  %v1531 = vsel %vm1403, 1, 0
  %v1532 = vsel %vm1404, 1, 0
  %v1533 = vsel %vm1405, 1, 0
  %v1534 = vsel %vm1406, 1, 0
  %v1535 = vsel %vm1407, 1, 0
  %v1536 = vsel %vm1408, 1, 0
  %v1537 = vsel %vm1409, 1, 0
  %v1538 = vsel %vm1410, 1, 0
  %v1539 = vsel %vm1411, 1, 0
  %v1540 = vsel %vm1412, 1, 0
  %v1541 = vsel %vm1413, 1, 0
  %v1542 = vsel %vm1414, 1, 0
  %v1543 = vsel %vm1415, 1, 0
  %v1544 = vsel %vm1416, 1, 0
  %v1545 = vsel %vm1417, 1, 0
  %v1546 = vsel %vm1418, 1, 0
  %v1547 = vsel %vm1419, 1, 0
  %v1548 = vsel %vm1420, 1, 0
  %v1549 = vsel %vm1421, 1, 0
  %v1550 = vsel %vm1422, 1, 0
  %v1551 = vsel %vm1423, 1, 0
  %v1552 = vsel %vm1424, 1, 0
  %v1553 = vsel %vm1425, 1, 0
  %v1554 = vsel %vm1426, 1, 0
  %v1555 = vsel %vm1427, 1, 0
  %v1556 = vsel %vm1428, 1, 0
  %v1557 = vsel %vm1429, 1, 0
  %v1558 = vsel %vm1430, 1, 0
  %v1559 = vsel %vm1431, 1, 0
  %v1560 = vsel %vm1432, 1, 0
  %v1561 = vsel %vm1433, 1, 0
  %v1562 = vsel %vm1434, 1, 0
  %v1563 = vsel %vm1435, 1, 0
  %v1564 = vsel %vm1436, 1, 0
  %v1565 = vsel %vm1437, 1, 0
  %v1566 = vsel %vm1438, 1, 0
  %v1567 = vsel %vm1439, 1, 0
  %v1568 = vsel %vm1440, 1, 0
  %v1569 = vsel %vm1441, 1, 0
  %v1570 = vsel %vm1442, 1, 0
  %v1571 = vsel %vm1443, 1, 0
  %v1572 = vsel %vm1444, 1, 0
  %v1573 = vsel %vm1445, 1, 0
  %v1574 = vsel %vm1446, 1, 0
  %v1575 = vsel %vm1447, 1, 0
  %v1576 = vsel %vm1448, 1, 0
  %v1577 = vsel %vm1449, 1, 0
  %v1578 = vsel %vm1450, 1, 0
  %v1579 = vsel %vm1451, 1, 0
  %v1580 = vsel %vm1452, 1, 0
  %v1581 = vsel %vm1453, 1, 0
  %v1582 = vsel %vm1454, 1, 0
  %v1583 = vsel %vm1455, 1, 0
  %v1584 = vsel %vm1456, 1, 0
  %v1585 = vsel %vm1457, 1, 0
  %v1586 = vsel %vm1458, 1, 0
  %v1587 = vsel %vm1459, 1, 0
  %v1588 = vsel %vm1460, 1, 0
  %v1589 = vsel %vm1461, 1, 0
  %v1590 = vsel %vm1462, 1, 0
  %v1591 = vsel %vm1463, 1, 0
  %v1592 = vsel %vm1464, 1, 0
  %v1593 = vsel %vm1465, 1, 0
  %v1594 = vsel %vm1466, 1, 0
  %v1595 = vsel %vm1467, 1, 0
  %v1596 = vsel %vm1468, 1, 0
  %v1597 = vsel %vm1469, 1, 0
  %v1598 = vsel %vm1470, 1, 0
  %v1599 = vsel %vm1471, 1, 0
  %v1600 = vsel %vm1472, 1, 0
  %v1601 = vsel %vm1473, 1, 0
  %v1602 = vsel %vm1474, 1, 0
  %v1603 = vsel %vm1475, 1, 0
  %v1604 = vsel %vm1476, 1, 0
  %v1605 = vsel %vm1477, 1, 0
  %v1606 = vsel %vm1478, 1, 0
  %v1607 = vsel %vm1479, 1, 0
  %v1608 = vsel %vm1480, 1, 0
  %v1609 = vsel %vm1481, 1, 0
  %v1610 = vsel %vm1482, 1, 0
  %v1611 = vsel %vm1483, 1, 0
  %v1612 = vsel %vm1484, 1, 0
  %v1613 = vsel %vm1485, 1, 0
  %v1614 = vsel %vm1486, 1, 0
  %v1615 = vsel %vm1487, 1, 0
  %v1616 = vsel %vm1488, 1, 0
  %v1617 = vsel %vm1489, 1, 0
  %v1618 = vsel %vm1490, 1, 0
  %v1619 = vsel %vm1491, 1, 0
  %v1620 = vsel %vm1492, 1, 0
  %v1621 = vsel %vm1493, 1, 0
  %v1622 = vsel %vm1494, 1, 0
  %v1623 = vsel %vm1495, 1, 0
  %v1624 = vsel %vm1496, 1, 0
  %v1625 = vsel %vm1497, 1, 0
  %v1626 = vsel %vm1498, 1, 0
  %v1627 = vsel %vm1499, 1, 0
  %v1628 = vsel %vm1500, 1, 0
  %v1629 = vsel %vm1501, 1, 0
  %v1630 = vsel %vm1502, 1, 0
  %v1631 = vsel %vm1503, 1, 0
  %v1632 = vsel %vm1504, 1, 0
  %v1633 = vsel %vm1505, 1, 0
  %v1634 = vsel %vm1506, 1, 0
  %v1635 = vsel %vm1507, 1, 0
  %v1636 = vsel %vm1508, 1, 0
  %v1637 = vsel %vm1509, 1, 0
  %v1638 = vsel %vm1510, 1, 0
  %v1639 = vsel %vm1511, 1, 0
  %v1640 = vsel %vm1512, 1, 0
  %v1641 = vsel %vm1513, 1, 0
  %v1642 = vsel %vm1514, 1, 0
  %v1643 = vsel %vm1515, 1, 0
  %v1644 = vsel %vm1516, 1, 0
  %v1645 = vsel %vm1517, 1, 0
  %v1646 = vcvt.s32.f32 %v1518
  %v1647 = vcvt.s32.f32 %v1519
  %v1648 = vcvt.s32.f32 %v1520
  %v1649 = vcvt.s32.f32 %v1521
  %v1650 = vcvt.s32.f32 %v1522
  %v1651 = vcvt.s32.f32 %v1523
  %v1652 = vcvt.s32.f32 %v1524
  %v1653 = vcvt.s32.f32 %v1525
  %v1654 = vcvt.s32.f32 %v1526
  %v1655 = vcvt.s32.f32 %v1527
  %v1656 = vcvt.s32.f32 %v1528
  %v1657 = vcvt.s32.f32 %v1529
  %v1658 = vcvt.s32.f32 %v1530
  %v1659 = vcvt.s32.f32 %v1531
  %v1660 = vcvt.s32.f32 %v1532
  %v1661 = vcvt.s32.f32 %v1533
  %v1662 = vcvt.s32.f32 %v1534
  %v1663 = vcvt.s32.f32 %v1535
  %v1664 = vcvt.s32.f32 %v1536
  %v1665 = vcvt.s32.f32 %v1537
  %v1666 = vcvt.s32.f32 %v1538
  %v1667 = vcvt.s32.f32 %v1539
  %v1668 = vcvt.s32.f32 %v1540
  %v1669 = vcvt.s32.f32 %v1541
  %v1670 = vcvt.s32.f32 %v1542
  %v1671 = vcvt.s32.f32 %v1543
  %v1672 = vcvt.s32.f32 %v1544
  %v1673 = vcvt.s32.f32 %v1545
  %v1674 = vcvt.s32.f32 %v1546
  %v1675 = vcvt.s32.f32 %v1547
  %v1676 = vcvt.s32.f32 %v1548
  %v1677 = vcvt.s32.f32 %v1549
  %v1678 = vcvt.s32.f32 %v1550
  %v1679 = vcvt.s32.f32 %v1551
  %v1680 = vcvt.s32.f32 %v1552
  %v1681 = vcvt.s32.f32 %v1553
  %v1682 = vcvt.s32.f32 %v1554
  %v1683 = vcvt.s32.f32 %v1555
  %v1684 = vcvt.s32.f32 %v1556
  %v1685 = vcvt.s32.f32 %v1557
  %v1686 = vcvt.s32.f32 %v1558
  %v1687 = vcvt.s32.f32 %v1559
  %v1688 = vcvt.s32.f32 %v1560
  %v1689 = vcvt.s32.f32 %v1561
  %v1690 = vcvt.s32.f32 %v1562
  %v1691 = vcvt.s32.f32 %v1563
  %v1692 = vcvt.s32.f32 %v1564
  %v1693 = vcvt.s32.f32 %v1565
  %v1694 = vcvt.s32.f32 %v1566
  %v1695 = vcvt.s32.f32 %v1567
  %v1696 = vcvt.s32.f32 %v1568
  %v1697 = vcvt.s32.f32 %v1569
  %v1698 = vcvt.s32.f32 %v1570
  %v1699 = vcvt.s32.f32 %v1571
  %v1700 = vcvt.s32.f32 %v1572
  %v1701 = vcvt.s32.f32 %v1573
  %v1702 = vcvt.s32.f32 %v1574
  %v1703 = vcvt.s32.f32 %v1575
  %v1704 = vcvt.s32.f32 %v1576
  %v1705 = vcvt.s32.f32 %v1577
  %v1706 = vcvt.s32.f32 %v1578
  %v1707 = vcvt.s32.f32 %v1579
  %v1708 = vcvt.s32.f32 %v1580
  %v1709 = vcvt.s32.f32 %v1581
  %v1710 = vcvt.s32.f32 %v1582
  %v1711 = vcvt.s32.f32 %v1583
  %v1712 = vcvt.s32.f32 %v1584
  %v1713 = vcvt.s32.f32 %v1585
  %v1714 = vcvt.s32.f32 %v1586
  %v1715 = vcvt.s32.f32 %v1587
  %v1716 = vcvt.s32.f32 %v1588
  %v1717 = vcvt.s32.f32 %v1589
  %v1718 = vcvt.s32.f32 %v1590
  %v1719 = vcvt.s32.f32 %v1591
  %v1720 = vcvt.s32.f32 %v1592
  %v1721 = vcvt.s32.f32 %v1593
  %v1722 = vcvt.s32.f32 %v1594
  %v1723 = vcvt.s32.f32 %v1595
  %v1724 = vcvt.s32.f32 %v1596
  %v1725 = vcvt.s32.f32 %v1597
  %v1726 = vcvt.s32.f32 %v1598
  %v1727 = vcvt.s32.f32 %v1599
  %v1728 = vcvt.s32.f32 %v1600
  %v1729 = vcvt.s32.f32 %v1601
  %v1730 = vcvt.s32.f32 %v1602
  %v1731 = vcvt.s32.f32 %v1603
  %v1732 = vcvt.s32.f32 %v1604
  %v1733 = vcvt.s32.f32 %v1605
  %v1734 = vcvt.s32.f32 %v1606
  %v1735 = vcvt.s32.f32 %v1607
  %v1736 = vcvt.s32.f32 %v1608
  %v1737 = vcvt.s32.f32 %v1609
  %v1738 = vcvt.s32.f32 %v1610
  %v1739 = vcvt.s32.f32 %v1611
  %v1740 = vcvt.s32.f32 %v1612
  %v1741 = vcvt.s32.f32 %v1613
  %v1742 = vcvt.s32.f32 %v1614
  %v1743 = vcvt.s32.f32 %v1615
  %v1744 = vcvt.s32.f32 %v1616
  %v1745 = vcvt.s32.f32 %v1617
  %v1746 = vcvt.s32.f32 %v1618
  %v1747 = vcvt.s32.f32 %v1619
  %v1748 = vcvt.s32.f32 %v1620
  %v1749 = vcvt.s32.f32 %v1621
  %v1750 = vcvt.s32.f32 %v1622
  %v1751 = vcvt.s32.f32 %v1623
  %v1752 = vcvt.s32.f32 %v1624
  %v1753 = vcvt.s32.f32 %v1625
  %v1754 = vcvt.s32.f32 %v1626
  %v1755 = vcvt.s32.f32 %v1627
  %v1756 = vcvt.s32.f32 %v1628
  %v1757 = vcvt.s32.f32 %v1629
  %v1758 = vcvt.s32.f32 %v1630
  %v1759 = vcvt.s32.f32 %v1631
  %v1760 = vcvt.s32.f32 %v1632
  %v1761 = vcvt.s32.f32 %v1633
  %v1762 = vcvt.s32.f32 %v1634
  %v1763 = vcvt.s32.f32 %v1635
  %v1764 = vcvt.s32.f32 %v1636
  %v1765 = vcvt.s32.f32 %v1637
  %v1766 = vcvt.s32.f32 %v1638
  %v1767 = vcvt.s32.f32 %v1639
  %v1768 = vcvt.s32.f32 %v1640
  %v1769 = vcvt.s32.f32 %v1641
  %v1770 = vcvt.s32.f32 %v1642
  %v1771 = vcvt.s32.f32 %v1643
  %v1772 = vcvt.s32.f32 %v1644
  %v1773 = vcvt.s32.f32 %v1645
  %v1774 = vmul.f32 %v1111, %v1223
  %v1775 = vmul.f32 %v1112, %v1224
  %v1776 = vmul.f32 %v1113, %v1225
  %v1777 = vmul.f32 %v1114, %v1226
  %v1778 = vmul.f32 %v1115, %v1227
  %v1779 = vmul.f32 %v1116, %v1228
  %v1780 = vmul.f32 %v1117, %v1229
  %v1781 = vmul.f32 %v1118, %v1230
  %v1782 = vmul.f32 %v1119, %v1231
  %v1783 = vmul.f32 %v1120, %v1232
  %v1784 = vmul.f32 %v1121, %v1233
  %v1785 = vmul.f32 %v1122, %v1234
  %v1786 = vmul.f32 %v1123, %v1235
  %v1787 = vmul.f32 %v1124, %v1236
  %v1788 = vmul.f32 %v1125, %v1237
  %v1789 = vmul.f32 %v1126, %v1238
  %v1790 = vperm.slane %v1774, 3
  %v1791 = vperm.slane %v1775, 3
  %v1792 = vperm.slane %v1776, 3
  %v1793 = vperm.slane %v1777, 3
  %v1794 = vperm.slane %v1778, 3
  %v1795 = vperm.slane %v1779, 3
  %v1796 = vperm.slane %v1780, 3
  %v1797 = vperm.slane %v1781, 3
  %v1798 = vperm.slane %v1782, 3
  %v1799 = vperm.slane %v1783, 3
  %v1800 = vperm.slane %v1784, 3
  %v1801 = vperm.slane %v1785, 3
  %v1802 = vperm.slane %v1786, 3
  %v1803 = vperm.slane %v1787, 3
  %v1804 = vperm.slane %v1788, 3
  %v1805 = vperm.slane %v1789, 3
  %v1806 = vmul.f32 %v1646, %v1790
  %v1807 = vmul.f32 %v1647, %v1791
  %v1808 = vmul.f32 %v1648, %v1792
  %v1809 = vmul.f32 %v1649, %v1793
  %v1810 = vmul.f32 %v1650, %v1794
  %v1811 = vmul.f32 %v1651, %v1795
  %v1812 = vmul.f32 %v1652, %v1796
  %v1813 = vmul.f32 %v1653, %v1797
  %v1814 = vmul.f32 %v1654, %v1798
  %v1815 = vmul.f32 %v1655, %v1799
  %v1816 = vmul.f32 %v1656, %v1800
  %v1817 = vmul.f32 %v1657, %v1801
  %v1818 = vmul.f32 %v1658, %v1802
  %v1819 = vmul.f32 %v1659, %v1803
  %v1820 = vmul.f32 %v1660, %v1804
  %v1821 = vmul.f32 %v1661, %v1805
  %v1822 = vmul.f32 %v1662, %v1790
  %v1823 = vmul.f32 %v1663, %v1791
  %v1824 = vmul.f32 %v1664, %v1792
  %v1825 = vmul.f32 %v1665, %v1793
  %v1826 = vmul.f32 %v1666, %v1794
  %v1827 = vmul.f32 %v1667, %v1795
  %v1828 = vmul.f32 %v1668, %v1796
  %v1829 = vmul.f32 %v1669, %v1797
  %v1830 = vmul.f32 %v1670, %v1798
  %v1831 = vmul.f32 %v1671, %v1799
  %v1832 = vmul.f32 %v1672, %v1800
  %v1833 = vmul.f32 %v1673, %v1801
  %v1834 = vmul.f32 %v1674, %v1802
  %v1835 = vmul.f32 %v1675, %v1803
  %v1836 = vmul.f32 %v1676, %v1804
  %v1837 = vmul.f32 %v1677, %v1805
  %v1838 = vmul.f32 %v1678, %v1790
  %v1839 = vmul.f32 %v1679, %v1791
  %v1840 = vmul.f32 %v1680, %v1792
  %v1841 = vmul.f32 %v1681, %v1793
  %v1842 = vmul.f32 %v1682, %v1794
  %v1843 = vmul.f32 %v1683, %v1795
  %v1844 = vmul.f32 %v1684, %v1796
  %v1845 = vmul.f32 %v1685, %v1797
  %v1846 = vmul.f32 %v1686, %v1798
  %v1847 = vmul.f32 %v1687, %v1799
  %v1848 = vmul.f32 %v1688, %v1800
  %v1849 = vmul.f32 %v1689, %v1801
  %v1850 = vmul.f32 %v1690, %v1802
  %v1851 = vmul.f32 %v1691, %v1803
  %v1852 = vmul.f32 %v1692, %v1804
  %v1853 = vmul.f32 %v1693, %v1805
  %v1854 = vmul.f32 %v1694, %v1790
  %v1855 = vmul.f32 %v1695, %v1791
  %v1856 = vmul.f32 %v1696, %v1792
  %v1857 = vmul.f32 %v1697, %v1793
  %v1858 = vmul.f32 %v1698, %v1794
  %v1859 = vmul.f32 %v1699, %v1795
  %v1860 = vmul.f32 %v1700, %v1796
  %v1861 = vmul.f32 %v1701, %v1797
  %v1862 = vmul.f32 %v1702, %v1798
  %v1863 = vmul.f32 %v1703, %v1799
  %v1864 = vmul.f32 %v1704, %v1800
  %v1865 = vmul.f32 %v1705, %v1801
  %v1866 = vmul.f32 %v1706, %v1802
  %v1867 = vmul.f32 %v1707, %v1803
  %v1868 = vmul.f32 %v1708, %v1804
  %v1869 = vmul.f32 %v1709, %v1805
  %v1870 = vmul.f32 %v1710, %v1790
  %v1871 = vmul.f32 %v1711, %v1791
  %v1872 = vmul.f32 %v1712, %v1792
  %v1873 = vmul.f32 %v1713, %v1793
  %v1874 = vmul.f32 %v1714, %v1794
  %v1875 = vmul.f32 %v1715, %v1795
  %v1876 = vmul.f32 %v1716, %v1796
  %v1877 = vmul.f32 %v1717, %v1797
  %v1878 = vmul.f32 %v1718, %v1798
  %v1879 = vmul.f32 %v1719, %v1799
  %v1880 = vmul.f32 %v1720, %v1800
  %v1881 = vmul.f32 %v1721, %v1801
  %v1882 = vmul.f32 %v1722, %v1802
  %v1883 = vmul.f32 %v1723, %v1803
  %v1884 = vmul.f32 %v1724, %v1804
  %v1885 = vmul.f32 %v1725, %v1805
  %v1886 = vmul.f32 %v1726, %v1790
  %v1887 = vmul.f32 %v1727, %v1791
  %v1888 = vmul.f32 %v1728, %v1792
  %v1889 = vmul.f32 %v1729, %v1793
  %v1890 = vmul.f32 %v1730, %v1794
  %v1891 = vmul.f32 %v1731, %v1795
  %v1892 = vmul.f32 %v1732, %v1796
  %v1893 = vmul.f32 %v1733, %v1797
  %v1894 = vmul.f32 %v1734, %v1798
  %v1895 = vmul.f32 %v1735, %v1799
  %v1896 = vmul.f32 %v1736, %v1800
  %v1897 = vmul.f32 %v1737, %v1801
  %v1898 = vmul.f32 %v1738, %v1802
  %v1899 = vmul.f32 %v1739, %v1803
  %v1900 = vmul.f32 %v1740, %v1804
  %v1901 = vmul.f32 %v1741, %v1805
  %v1902 = vmul.f32 %v1742, %v1790
  %v1903 = vmul.f32 %v1743, %v1791
  %v1904 = vmul.f32 %v1744, %v1792
  %v1905 = vmul.f32 %v1745, %v1793
  %v1906 = vmul.f32 %v1746, %v1794
  %v1907 = vmul.f32 %v1747, %v1795
  %v1908 = vmul.f32 %v1748, %v1796
  %v1909 = vmul.f32 %v1749, %v1797
  %v1910 = vmul.f32 %v1750, %v1798
  %v1911 = vmul.f32 %v1751, %v1799
  %v1912 = vmul.f32 %v1752, %v1800
  %v1913 = vmul.f32 %v1753, %v1801
  %v1914 = vmul.f32 %v1754, %v1802
  %v1915 = vmul.f32 %v1755, %v1803
  %v1916 = vmul.f32 %v1756, %v1804
  %v1917 = vmul.f32 %v1757, %v1805
  %v1918 = vmul.f32 %v1758, %v1790
  %v1919 = vmul.f32 %v1759, %v1791
  %v1920 = vmul.f32 %v1760, %v1792
  %v1921 = vmul.f32 %v1761, %v1793
  %v1922 = vmul.f32 %v1762, %v1794
  %v1923 = vmul.f32 %v1763, %v1795
  %v1924 = vmul.f32 %v1764, %v1796
  %v1925 = vmul.f32 %v1765, %v1797
  %v1926 = vmul.f32 %v1766, %v1798
  %v1927 = vmul.f32 %v1767, %v1799
  %v1928 = vmul.f32 %v1768, %v1800
  %v1929 = vmul.f32 %v1769, %v1801
  %v1930 = vmul.f32 %v1770, %v1802
  %v1931 = vmul.f32 %v1771, %v1803
  %v1932 = vmul.f32 %v1772, %v1804
  %v1933 = vmul.f32 %v1773, %v1805
  %v1934 = vperm.slane %v1358, 3
  %v1935 = vperm.slane %v1359, 3
  %v1936 = vperm.slane %v1360, 3
  %v1937 = vperm.slane %v1361, 3
  %v1938 = vperm.slane %v1362, 3
  %v1939 = vperm.slane %v1363, 3
  %v1940 = vperm.slane %v1364, 3
  %v1941 = vperm.slane %v1365, 3
  %v1942 = vperm.slane %v1366, 3
  %v1943 = vperm.slane %v1367, 3
  %v1944 = vperm.slane %v1368, 3
  %v1945 = vperm.slane %v1369, 3
  %v1946 = vperm.slane %v1370, 3
  %v1947 = vperm.slane %v1371, 3
  %v1948 = vperm.slane %v1372, 3
  %v1949 = vperm.slane %v1373, 3
  %vm1950 = vcmp.eq.s32.totalorder %v433, %v1934
  %vm1951 = vcmp.eq.s32.totalorder %v433, %v1935
  %vm1952 = vcmp.eq.s32.totalorder %v433, %v1936
  %vm1953 = vcmp.eq.s32.totalorder %v433, %v1937
  %vm1954 = vcmp.eq.s32.totalorder %v433, %v1938
  %vm1955 = vcmp.eq.s32.totalorder %v433, %v1939
  %vm1956 = vcmp.eq.s32.totalorder %v433, %v1940
  %vm1957 = vcmp.eq.s32.totalorder %v433, %v1941
  %vm1958 = vcmp.eq.s32.totalorder %v433, %v1942
  %vm1959 = vcmp.eq.s32.totalorder %v433, %v1943
  %vm1960 = vcmp.eq.s32.totalorder %v433, %v1944
  %vm1961 = vcmp.eq.s32.totalorder %v433, %v1945
  %vm1962 = vcmp.eq.s32.totalorder %v433, %v1946
  %vm1963 = vcmp.eq.s32.totalorder %v433, %v1947
  %vm1964 = vcmp.eq.s32.totalorder %v433, %v1948
  %vm1965 = vcmp.eq.s32.totalorder %v433, %v1949
  %vm1966 = vcmp.eq.s32.totalorder %v1319, %v1934
  %vm1967 = vcmp.eq.s32.totalorder %v1319, %v1935
  %vm1968 = vcmp.eq.s32.totalorder %v1319, %v1936
  %vm1969 = vcmp.eq.s32.totalorder %v1319, %v1937
  %vm1970 = vcmp.eq.s32.totalorder %v1319, %v1938
  %vm1971 = vcmp.eq.s32.totalorder %v1319, %v1939
  %vm1972 = vcmp.eq.s32.totalorder %v1319, %v1940
  %vm1973 = vcmp.eq.s32.totalorder %v1319, %v1941
  %vm1974 = vcmp.eq.s32.totalorder %v1319, %v1942
  %vm1975 = vcmp.eq.s32.totalorder %v1319, %v1943
  %vm1976 = vcmp.eq.s32.totalorder %v1319, %v1944
  %vm1977 = vcmp.eq.s32.totalorder %v1319, %v1945
  %vm1978 = vcmp.eq.s32.totalorder %v1319, %v1946
  %vm1979 = vcmp.eq.s32.totalorder %v1319, %v1947
  %vm1980 = vcmp.eq.s32.totalorder %v1319, %v1948
  %vm1981 = vcmp.eq.s32.totalorder %v1319, %v1949
  %vm1982 = vcmp.eq.s32.totalorder %v1320, %v1934
  %vm1983 = vcmp.eq.s32.totalorder %v1320, %v1935
  %vm1984 = vcmp.eq.s32.totalorder %v1320, %v1936
  %vm1985 = vcmp.eq.s32.totalorder %v1320, %v1937
  %vm1986 = vcmp.eq.s32.totalorder %v1320, %v1938
  %vm1987 = vcmp.eq.s32.totalorder %v1320, %v1939
  %vm1988 = vcmp.eq.s32.totalorder %v1320, %v1940
  %vm1989 = vcmp.eq.s32.totalorder %v1320, %v1941
  %vm1990 = vcmp.eq.s32.totalorder %v1320, %v1942
  %vm1991 = vcmp.eq.s32.totalorder %v1320, %v1943
  %vm1992 = vcmp.eq.s32.totalorder %v1320, %v1944
  %vm1993 = vcmp.eq.s32.totalorder %v1320, %v1945
  %vm1994 = vcmp.eq.s32.totalorder %v1320, %v1946
  %vm1995 = vcmp.eq.s32.totalorder %v1320, %v1947
  %vm1996 = vcmp.eq.s32.totalorder %v1320, %v1948
  %vm1997 = vcmp.eq.s32.totalorder %v1320, %v1949
  %vm1998 = vcmp.eq.s32.totalorder %v1321, %v1934
  %vm1999 = vcmp.eq.s32.totalorder %v1321, %v1935
  %vm2000 = vcmp.eq.s32.totalorder %v1321, %v1936
  %vm2001 = vcmp.eq.s32.totalorder %v1321, %v1937
  %vm2002 = vcmp.eq.s32.totalorder %v1321, %v1938
  %vm2003 = vcmp.eq.s32.totalorder %v1321, %v1939
  %vm2004 = vcmp.eq.s32.totalorder %v1321, %v1940
  %vm2005 = vcmp.eq.s32.totalorder %v1321, %v1941
  %vm2006 = vcmp.eq.s32.totalorder %v1321, %v1942
  %vm2007 = vcmp.eq.s32.totalorder %v1321, %v1943
  %vm2008 = vcmp.eq.s32.totalorder %v1321, %v1944
  %vm2009 = vcmp.eq.s32.totalorder %v1321, %v1945
  %vm2010 = vcmp.eq.s32.totalorder %v1321, %v1946
  %vm2011 = vcmp.eq.s32.totalorder %v1321, %v1947
  %vm2012 = vcmp.eq.s32.totalorder %v1321, %v1948
  %vm2013 = vcmp.eq.s32.totalorder %v1321, %v1949
  %vm2014 = vcmp.eq.s32.totalorder %v1322, %v1934
  %vm2015 = vcmp.eq.s32.totalorder %v1322, %v1935
  %vm2016 = vcmp.eq.s32.totalorder %v1322, %v1936
  %vm2017 = vcmp.eq.s32.totalorder %v1322, %v1937
  %vm2018 = vcmp.eq.s32.totalorder %v1322, %v1938
  %vm2019 = vcmp.eq.s32.totalorder %v1322, %v1939
  %vm2020 = vcmp.eq.s32.totalorder %v1322, %v1940
  %vm2021 = vcmp.eq.s32.totalorder %v1322, %v1941
  %vm2022 = vcmp.eq.s32.totalorder %v1322, %v1942
  %vm2023 = vcmp.eq.s32.totalorder %v1322, %v1943
  %vm2024 = vcmp.eq.s32.totalorder %v1322, %v1944
  %vm2025 = vcmp.eq.s32.totalorder %v1322, %v1945
  %vm2026 = vcmp.eq.s32.totalorder %v1322, %v1946
  %vm2027 = vcmp.eq.s32.totalorder %v1322, %v1947
  %vm2028 = vcmp.eq.s32.totalorder %v1322, %v1948
  %vm2029 = vcmp.eq.s32.totalorder %v1322, %v1949
  %vm2030 = vcmp.eq.s32.totalorder %v1323, %v1934
  %vm2031 = vcmp.eq.s32.totalorder %v1323, %v1935
  %vm2032 = vcmp.eq.s32.totalorder %v1323, %v1936
  %vm2033 = vcmp.eq.s32.totalorder %v1323, %v1937
  %vm2034 = vcmp.eq.s32.totalorder %v1323, %v1938
  %vm2035 = vcmp.eq.s32.totalorder %v1323, %v1939
  %vm2036 = vcmp.eq.s32.totalorder %v1323, %v1940
  %vm2037 = vcmp.eq.s32.totalorder %v1323, %v1941
  %vm2038 = vcmp.eq.s32.totalorder %v1323, %v1942
  %vm2039 = vcmp.eq.s32.totalorder %v1323, %v1943
  %vm2040 = vcmp.eq.s32.totalorder %v1323, %v1944
  %vm2041 = vcmp.eq.s32.totalorder %v1323, %v1945
  %vm2042 = vcmp.eq.s32.totalorder %v1323, %v1946
  %vm2043 = vcmp.eq.s32.totalorder %v1323, %v1947
  %vm2044 = vcmp.eq.s32.totalorder %v1323, %v1948
  %vm2045 = vcmp.eq.s32.totalorder %v1323, %v1949
  %vm2046 = vcmp.eq.s32.totalorder %v1324, %v1934
  %vm2047 = vcmp.eq.s32.totalorder %v1324, %v1935
  %vm2048 = vcmp.eq.s32.totalorder %v1324, %v1936
  %vm2049 = vcmp.eq.s32.totalorder %v1324, %v1937
  %vm2050 = vcmp.eq.s32.totalorder %v1324, %v1938
  %vm2051 = vcmp.eq.s32.totalorder %v1324, %v1939
  %vm2052 = vcmp.eq.s32.totalorder %v1324, %v1940
  %vm2053 = vcmp.eq.s32.totalorder %v1324, %v1941
  %vm2054 = vcmp.eq.s32.totalorder %v1324, %v1942
  %vm2055 = vcmp.eq.s32.totalorder %v1324, %v1943
  %vm2056 = vcmp.eq.s32.totalorder %v1324, %v1944
  %vm2057 = vcmp.eq.s32.totalorder %v1324, %v1945
  %vm2058 = vcmp.eq.s32.totalorder %v1324, %v1946
  %vm2059 = vcmp.eq.s32.totalorder %v1324, %v1947
  %vm2060 = vcmp.eq.s32.totalorder %v1324, %v1948
  %vm2061 = vcmp.eq.s32.totalorder %v1324, %v1949
  %vm2062 = vcmp.eq.s32.totalorder %v1325, %v1934
  %vm2063 = vcmp.eq.s32.totalorder %v1325, %v1935
  %vm2064 = vcmp.eq.s32.totalorder %v1325, %v1936
  %vm2065 = vcmp.eq.s32.totalorder %v1325, %v1937
  %vm2066 = vcmp.eq.s32.totalorder %v1325, %v1938
  %vm2067 = vcmp.eq.s32.totalorder %v1325, %v1939
  %vm2068 = vcmp.eq.s32.totalorder %v1325, %v1940
  %vm2069 = vcmp.eq.s32.totalorder %v1325, %v1941
  %vm2070 = vcmp.eq.s32.totalorder %v1325, %v1942
  %vm2071 = vcmp.eq.s32.totalorder %v1325, %v1943
  %vm2072 = vcmp.eq.s32.totalorder %v1325, %v1944
  %vm2073 = vcmp.eq.s32.totalorder %v1325, %v1945
  %vm2074 = vcmp.eq.s32.totalorder %v1325, %v1946
  %vm2075 = vcmp.eq.s32.totalorder %v1325, %v1947
  %vm2076 = vcmp.eq.s32.totalorder %v1325, %v1948
  %vm2077 = vcmp.eq.s32.totalorder %v1325, %v1949
  %v2078 = vsel %vm1950, 1, 0
  %v2079 = vsel %vm1951, 1, 0
  %v2080 = vsel %vm1952, 1, 0
  %v2081 = vsel %vm1953, 1, 0
  %v2082 = vsel %vm1954, 1, 0
  %v2083 = vsel %vm1955, 1, 0
  %v2084 = vsel %vm1956, 1, 0
  %v2085 = vsel %vm1957, 1, 0
  %v2086 = vsel %vm1958, 1, 0
  %v2087 = vsel %vm1959, 1, 0
  %v2088 = vsel %vm1960, 1, 0
  %v2089 = vsel %vm1961, 1, 0
  %v2090 = vsel %vm1962, 1, 0
  %v2091 = vsel %vm1963, 1, 0
  %v2092 = vsel %vm1964, 1, 0
  %v2093 = vsel %vm1965, 1, 0
  %v2094 = vsel %vm1966, 1, 0
  %v2095 = vsel %vm1967, 1, 0
  %v2096 = vsel %vm1968, 1, 0
  %v2097 = vsel %vm1969, 1, 0
  %v2098 = vsel %vm1970, 1, 0
  %v2099 = vsel %vm1971, 1, 0
  %v2100 = vsel %vm1972, 1, 0
  %v2101 = vsel %vm1973, 1, 0
  %v2102 = vsel %vm1974, 1, 0
  %v2103 = vsel %vm1975, 1, 0
  %v2104 = vsel %vm1976, 1, 0
  %v2105 = vsel %vm1977, 1, 0
  %v2106 = vsel %vm1978, 1, 0
  %v2107 = vsel %vm1979, 1, 0
  %v2108 = vsel %vm1980, 1, 0
  %v2109 = vsel %vm1981, 1, 0
  %v2110 = vsel %vm1982, 1, 0
  %v2111 = vsel %vm1983, 1, 0
  %v2112 = vsel %vm1984, 1, 0
  %v2113 = vsel %vm1985, 1, 0
  %v2114 = vsel %vm1986, 1, 0
  %v2115 = vsel %vm1987, 1, 0
  %v2116 = vsel %vm1988, 1, 0
  %v2117 = vsel %vm1989, 1, 0
  %v2118 = vsel %vm1990, 1, 0
  %v2119 = vsel %vm1991, 1, 0
  %v2120 = vsel %vm1992, 1, 0
  %v2121 = vsel %vm1993, 1, 0
  %v2122 = vsel %vm1994, 1, 0
  %v2123 = vsel %vm1995, 1, 0
  %v2124 = vsel %vm1996, 1, 0
  %v2125 = vsel %vm1997, 1, 0
  %v2126 = vsel %vm1998, 1, 0
  %v2127 = vsel %vm1999, 1, 0
  %v2128 = vsel %vm2000, 1, 0
  %v2129 = vsel %vm2001, 1, 0
  %v2130 = vsel %vm2002, 1, 0
  %v2131 = vsel %vm2003, 1, 0
  %v2132 = vsel %vm2004, 1, 0
  %v2133 = vsel %vm2005, 1, 0
  %v2134 = vsel %vm2006, 1, 0
  %v2135 = vsel %vm2007, 1, 0
  %v2136 = vsel %vm2008, 1, 0
  %v2137 = vsel %vm2009, 1, 0
  %v2138 = vsel %vm2010, 1, 0
  %v2139 = vsel %vm2011, 1, 0
  %v2140 = vsel %vm2012, 1, 0
  %v2141 = vsel %vm2013, 1, 0
  %v2142 = vsel %vm2014, 1, 0
  %v2143 = vsel %vm2015, 1, 0
  %v2144 = vsel %vm2016, 1, 0
  %v2145 = vsel %vm2017, 1, 0
  %v2146 = vsel %vm2018, 1, 0
  %v2147 = vsel %vm2019, 1, 0
  %v2148 = vsel %vm2020, 1, 0
  %v2149 = vsel %vm2021, 1, 0
  %v2150 = vsel %vm2022, 1, 0
  %v2151 = vsel %vm2023, 1, 0
  %v2152 = vsel %vm2024, 1, 0
  %v2153 = vsel %vm2025, 1, 0
  %v2154 = vsel %vm2026, 1, 0
  %v2155 = vsel %vm2027, 1, 0
  %v2156 = vsel %vm2028, 1, 0
  %v2157 = vsel %vm2029, 1, 0
  %v2158 = vsel %vm2030, 1, 0
  %v2159 = vsel %vm2031, 1, 0
  %v2160 = vsel %vm2032, 1, 0
  %v2161 = vsel %vm2033, 1, 0
  %v2162 = vsel %vm2034, 1, 0
  %v2163 = vsel %vm2035, 1, 0
  %v2164 = vsel %vm2036, 1, 0
  %v2165 = vsel %vm2037, 1, 0
  %v2166 = vsel %vm2038, 1, 0
  %v2167 = vsel %vm2039, 1, 0
  %v2168 = vsel %vm2040, 1, 0
  %v2169 = vsel %vm2041, 1, 0
  %v2170 = vsel %vm2042, 1, 0
  %v2171 = vsel %vm2043, 1, 0
  %v2172 = vsel %vm2044, 1, 0
  %v2173 = vsel %vm2045, 1, 0
  %v2174 = vsel %vm2046, 1, 0
  %v2175 = vsel %vm2047, 1, 0
  %v2176 = vsel %vm2048, 1, 0
  %v2177 = vsel %vm2049, 1, 0
  %v2178 = vsel %vm2050, 1, 0
  %v2179 = vsel %vm2051, 1, 0
  %v2180 = vsel %vm2052, 1, 0
  %v2181 = vsel %vm2053, 1, 0
  %v2182 = vsel %vm2054, 1, 0
  %v2183 = vsel %vm2055, 1, 0
  %v2184 = vsel %vm2056, 1, 0
  %v2185 = vsel %vm2057, 1, 0
  %v2186 = vsel %vm2058, 1, 0
  %v2187 = vsel %vm2059, 1, 0
  %v2188 = vsel %vm2060, 1, 0
  %v2189 = vsel %vm2061, 1, 0
  %v2190 = vsel %vm2062, 1, 0
  %v2191 = vsel %vm2063, 1, 0
  %v2192 = vsel %vm2064, 1, 0
  %v2193 = vsel %vm2065, 1, 0
  %v2194 = vsel %vm2066, 1, 0
  %v2195 = vsel %vm2067, 1, 0
  %v2196 = vsel %vm2068, 1, 0
  %v2197 = vsel %vm2069, 1, 0
  %v2198 = vsel %vm2070, 1, 0
  %v2199 = vsel %vm2071, 1, 0
  %v2200 = vsel %vm2072, 1, 0
  %v2201 = vsel %vm2073, 1, 0
  %v2202 = vsel %vm2074, 1, 0
  %v2203 = vsel %vm2075, 1, 0
  %v2204 = vsel %vm2076, 1, 0
  %v2205 = vsel %vm2077, 1, 0
  %v2206 = vcvt.s32.f32 %v2078
  %v2207 = vcvt.s32.f32 %v2079
  %v2208 = vcvt.s32.f32 %v2080
  %v2209 = vcvt.s32.f32 %v2081
  %v2210 = vcvt.s32.f32 %v2082
  %v2211 = vcvt.s32.f32 %v2083
  %v2212 = vcvt.s32.f32 %v2084
  %v2213 = vcvt.s32.f32 %v2085
  %v2214 = vcvt.s32.f32 %v2086
  %v2215 = vcvt.s32.f32 %v2087
  %v2216 = vcvt.s32.f32 %v2088
  %v2217 = vcvt.s32.f32 %v2089
  %v2218 = vcvt.s32.f32 %v2090
  %v2219 = vcvt.s32.f32 %v2091
  %v2220 = vcvt.s32.f32 %v2092
  %v2221 = vcvt.s32.f32 %v2093
  %v2222 = vcvt.s32.f32 %v2094
  %v2223 = vcvt.s32.f32 %v2095
  %v2224 = vcvt.s32.f32 %v2096
  %v2225 = vcvt.s32.f32 %v2097
  %v2226 = vcvt.s32.f32 %v2098
  %v2227 = vcvt.s32.f32 %v2099
  %v2228 = vcvt.s32.f32 %v2100
  %v2229 = vcvt.s32.f32 %v2101
  %v2230 = vcvt.s32.f32 %v2102
  %v2231 = vcvt.s32.f32 %v2103
  %v2232 = vcvt.s32.f32 %v2104
  %v2233 = vcvt.s32.f32 %v2105
  %v2234 = vcvt.s32.f32 %v2106
  %v2235 = vcvt.s32.f32 %v2107
  %v2236 = vcvt.s32.f32 %v2108
  %v2237 = vcvt.s32.f32 %v2109
  %v2238 = vcvt.s32.f32 %v2110
  %v2239 = vcvt.s32.f32 %v2111
  %v2240 = vcvt.s32.f32 %v2112
  %v2241 = vcvt.s32.f32 %v2113
  %v2242 = vcvt.s32.f32 %v2114
  %v2243 = vcvt.s32.f32 %v2115
  %v2244 = vcvt.s32.f32 %v2116
  %v2245 = vcvt.s32.f32 %v2117
  %v2246 = vcvt.s32.f32 %v2118
  %v2247 = vcvt.s32.f32 %v2119
  %v2248 = vcvt.s32.f32 %v2120
  %v2249 = vcvt.s32.f32 %v2121
  %v2250 = vcvt.s32.f32 %v2122
  %v2251 = vcvt.s32.f32 %v2123
  %v2252 = vcvt.s32.f32 %v2124
  %v2253 = vcvt.s32.f32 %v2125
  %v2254 = vcvt.s32.f32 %v2126
  %v2255 = vcvt.s32.f32 %v2127
  %v2256 = vcvt.s32.f32 %v2128
  %v2257 = vcvt.s32.f32 %v2129
  %v2258 = vcvt.s32.f32 %v2130
  %v2259 = vcvt.s32.f32 %v2131
  %v2260 = vcvt.s32.f32 %v2132
  %v2261 = vcvt.s32.f32 %v2133
  %v2262 = vcvt.s32.f32 %v2134
  %v2263 = vcvt.s32.f32 %v2135
  %v2264 = vcvt.s32.f32 %v2136
  %v2265 = vcvt.s32.f32 %v2137
  %v2266 = vcvt.s32.f32 %v2138
  %v2267 = vcvt.s32.f32 %v2139
  %v2268 = vcvt.s32.f32 %v2140
  %v2269 = vcvt.s32.f32 %v2141
  %v2270 = vcvt.s32.f32 %v2142
  %v2271 = vcvt.s32.f32 %v2143
  %v2272 = vcvt.s32.f32 %v2144
  %v2273 = vcvt.s32.f32 %v2145
  %v2274 = vcvt.s32.f32 %v2146
  %v2275 = vcvt.s32.f32 %v2147
  %v2276 = vcvt.s32.f32 %v2148
  %v2277 = vcvt.s32.f32 %v2149
  %v2278 = vcvt.s32.f32 %v2150
  %v2279 = vcvt.s32.f32 %v2151
  %v2280 = vcvt.s32.f32 %v2152
  %v2281 = vcvt.s32.f32 %v2153
  %v2282 = vcvt.s32.f32 %v2154
  %v2283 = vcvt.s32.f32 %v2155
  %v2284 = vcvt.s32.f32 %v2156
  %v2285 = vcvt.s32.f32 %v2157
  %v2286 = vcvt.s32.f32 %v2158
  %v2287 = vcvt.s32.f32 %v2159
  %v2288 = vcvt.s32.f32 %v2160
  %v2289 = vcvt.s32.f32 %v2161
  %v2290 = vcvt.s32.f32 %v2162
  %v2291 = vcvt.s32.f32 %v2163
  %v2292 = vcvt.s32.f32 %v2164
  %v2293 = vcvt.s32.f32 %v2165
  %v2294 = vcvt.s32.f32 %v2166
  %v2295 = vcvt.s32.f32 %v2167
  %v2296 = vcvt.s32.f32 %v2168
  %v2297 = vcvt.s32.f32 %v2169
  %v2298 = vcvt.s32.f32 %v2170
  %v2299 = vcvt.s32.f32 %v2171
  %v2300 = vcvt.s32.f32 %v2172
  %v2301 = vcvt.s32.f32 %v2173
  %v2302 = vcvt.s32.f32 %v2174
  %v2303 = vcvt.s32.f32 %v2175
  %v2304 = vcvt.s32.f32 %v2176
  %v2305 = vcvt.s32.f32 %v2177
  %v2306 = vcvt.s32.f32 %v2178
  %v2307 = vcvt.s32.f32 %v2179
  %v2308 = vcvt.s32.f32 %v2180
  %v2309 = vcvt.s32.f32 %v2181
  %v2310 = vcvt.s32.f32 %v2182
  %v2311 = vcvt.s32.f32 %v2183
  %v2312 = vcvt.s32.f32 %v2184
  %v2313 = vcvt.s32.f32 %v2185
  %v2314 = vcvt.s32.f32 %v2186
  %v2315 = vcvt.s32.f32 %v2187
  %v2316 = vcvt.s32.f32 %v2188
  %v2317 = vcvt.s32.f32 %v2189
  %v2318 = vcvt.s32.f32 %v2190
  %v2319 = vcvt.s32.f32 %v2191
  %v2320 = vcvt.s32.f32 %v2192
  %v2321 = vcvt.s32.f32 %v2193
  %v2322 = vcvt.s32.f32 %v2194
  %v2323 = vcvt.s32.f32 %v2195
  %v2324 = vcvt.s32.f32 %v2196
  %v2325 = vcvt.s32.f32 %v2197
  %v2326 = vcvt.s32.f32 %v2198
  %v2327 = vcvt.s32.f32 %v2199
  %v2328 = vcvt.s32.f32 %v2200
  %v2329 = vcvt.s32.f32 %v2201
  %v2330 = vcvt.s32.f32 %v2202
  %v2331 = vcvt.s32.f32 %v2203
  %v2332 = vcvt.s32.f32 %v2204
  %v2333 = vcvt.s32.f32 %v2205
  %v2334 = vmul.f32 %v1095, %v1303
  %v2335 = vmul.f32 %v1096, %v1304
  %v2336 = vmul.f32 %v1097, %v1305
  %v2337 = vmul.f32 %v1098, %v1306
  %v2338 = vmul.f32 %v1099, %v1307
  %v2339 = vmul.f32 %v1100, %v1308
  %v2340 = vmul.f32 %v1101, %v1309
  %v2341 = vmul.f32 %v1102, %v1310
  %v2342 = vmul.f32 %v1103, %v1311
  %v2343 = vmul.f32 %v1104, %v1312
  %v2344 = vmul.f32 %v1105, %v1313
  %v2345 = vmul.f32 %v1106, %v1314
  %v2346 = vmul.f32 %v1107, %v1315
  %v2347 = vmul.f32 %v1108, %v1316
  %v2348 = vmul.f32 %v1109, %v1317
  %v2349 = vmul.f32 %v1110, %v1318
  %v2350 = vperm.slane %v2334, 3
  %v2351 = vperm.slane %v2335, 3
  %v2352 = vperm.slane %v2336, 3
  %v2353 = vperm.slane %v2337, 3
  %v2354 = vperm.slane %v2338, 3
  %v2355 = vperm.slane %v2339, 3
  %v2356 = vperm.slane %v2340, 3
  %v2357 = vperm.slane %v2341, 3
  %v2358 = vperm.slane %v2342, 3
  %v2359 = vperm.slane %v2343, 3
  %v2360 = vperm.slane %v2344, 3
  %v2361 = vperm.slane %v2345, 3
  %v2362 = vperm.slane %v2346, 3
  %v2363 = vperm.slane %v2347, 3
  %v2364 = vperm.slane %v2348, 3
  %v2365 = vperm.slane %v2349, 3
  %v2366 = vmul.f32 %v2206, %v2350
  %v2367 = vmul.f32 %v2207, %v2351
  %v2368 = vmul.f32 %v2208, %v2352
  %v2369 = vmul.f32 %v2209, %v2353
  %v2370 = vmul.f32 %v2210, %v2354
  %v2371 = vmul.f32 %v2211, %v2355
  %v2372 = vmul.f32 %v2212, %v2356
  %v2373 = vmul.f32 %v2213, %v2357
  %v2374 = vmul.f32 %v2214, %v2358
  %v2375 = vmul.f32 %v2215, %v2359
  %v2376 = vmul.f32 %v2216, %v2360
  %v2377 = vmul.f32 %v2217, %v2361
  %v2378 = vmul.f32 %v2218, %v2362
  %v2379 = vmul.f32 %v2219, %v2363
  %v2380 = vmul.f32 %v2220, %v2364
  %v2381 = vmul.f32 %v2221, %v2365
  %v2382 = vmul.f32 %v2222, %v2350
  %v2383 = vmul.f32 %v2223, %v2351
  %v2384 = vmul.f32 %v2224, %v2352
  %v2385 = vmul.f32 %v2225, %v2353
  %v2386 = vmul.f32 %v2226, %v2354
  %v2387 = vmul.f32 %v2227, %v2355
  %v2388 = vmul.f32 %v2228, %v2356
  %v2389 = vmul.f32 %v2229, %v2357
  %v2390 = vmul.f32 %v2230, %v2358
  %v2391 = vmul.f32 %v2231, %v2359
  %v2392 = vmul.f32 %v2232, %v2360
  %v2393 = vmul.f32 %v2233, %v2361
  %v2394 = vmul.f32 %v2234, %v2362
  %v2395 = vmul.f32 %v2235, %v2363
  %v2396 = vmul.f32 %v2236, %v2364
  %v2397 = vmul.f32 %v2237, %v2365
  %v2398 = vmul.f32 %v2238, %v2350
  %v2399 = vmul.f32 %v2239, %v2351
  %v2400 = vmul.f32 %v2240, %v2352
  %v2401 = vmul.f32 %v2241, %v2353
  %v2402 = vmul.f32 %v2242, %v2354
  %v2403 = vmul.f32 %v2243, %v2355
  %v2404 = vmul.f32 %v2244, %v2356
  %v2405 = vmul.f32 %v2245, %v2357
  %v2406 = vmul.f32 %v2246, %v2358
  %v2407 = vmul.f32 %v2247, %v2359
  %v2408 = vmul.f32 %v2248, %v2360
  %v2409 = vmul.f32 %v2249, %v2361
  %v2410 = vmul.f32 %v2250, %v2362
  %v2411 = vmul.f32 %v2251, %v2363
  %v2412 = vmul.f32 %v2252, %v2364
  %v2413 = vmul.f32 %v2253, %v2365
  %v2414 = vmul.f32 %v2254, %v2350
  %v2415 = vmul.f32 %v2255, %v2351
  %v2416 = vmul.f32 %v2256, %v2352
  %v2417 = vmul.f32 %v2257, %v2353
  %v2418 = vmul.f32 %v2258, %v2354
  %v2419 = vmul.f32 %v2259, %v2355
  %v2420 = vmul.f32 %v2260, %v2356
  %v2421 = vmul.f32 %v2261, %v2357
  %v2422 = vmul.f32 %v2262, %v2358
  %v2423 = vmul.f32 %v2263, %v2359
  %v2424 = vmul.f32 %v2264, %v2360
  %v2425 = vmul.f32 %v2265, %v2361
  %v2426 = vmul.f32 %v2266, %v2362
  %v2427 = vmul.f32 %v2267, %v2363
  %v2428 = vmul.f32 %v2268, %v2364
  %v2429 = vmul.f32 %v2269, %v2365
  %v2430 = vmul.f32 %v2270, %v2350
  %v2431 = vmul.f32 %v2271, %v2351
  %v2432 = vmul.f32 %v2272, %v2352
  %v2433 = vmul.f32 %v2273, %v2353
  %v2434 = vmul.f32 %v2274, %v2354
  %v2435 = vmul.f32 %v2275, %v2355
  %v2436 = vmul.f32 %v2276, %v2356
  %v2437 = vmul.f32 %v2277, %v2357
  %v2438 = vmul.f32 %v2278, %v2358
  %v2439 = vmul.f32 %v2279, %v2359
  %v2440 = vmul.f32 %v2280, %v2360
  %v2441 = vmul.f32 %v2281, %v2361
  %v2442 = vmul.f32 %v2282, %v2362
  %v2443 = vmul.f32 %v2283, %v2363
  %v2444 = vmul.f32 %v2284, %v2364
  %v2445 = vmul.f32 %v2285, %v2365
  %v2446 = vmul.f32 %v2286, %v2350
  %v2447 = vmul.f32 %v2287, %v2351
  %v2448 = vmul.f32 %v2288, %v2352
  %v2449 = vmul.f32 %v2289, %v2353
  %v2450 = vmul.f32 %v2290, %v2354
  %v2451 = vmul.f32 %v2291, %v2355
  %v2452 = vmul.f32 %v2292, %v2356
  %v2453 = vmul.f32 %v2293, %v2357
  %v2454 = vmul.f32 %v2294, %v2358
  %v2455 = vmul.f32 %v2295, %v2359
  %v2456 = vmul.f32 %v2296, %v2360
  %v2457 = vmul.f32 %v2297, %v2361
  %v2458 = vmul.f32 %v2298, %v2362
  %v2459 = vmul.f32 %v2299, %v2363
  %v2460 = vmul.f32 %v2300, %v2364
  %v2461 = vmul.f32 %v2301, %v2365
  %v2462 = vmul.f32 %v2302, %v2350
  %v2463 = vmul.f32 %v2303, %v2351
  %v2464 = vmul.f32 %v2304, %v2352
  %v2465 = vmul.f32 %v2305, %v2353
  %v2466 = vmul.f32 %v2306, %v2354
  %v2467 = vmul.f32 %v2307, %v2355
  %v2468 = vmul.f32 %v2308, %v2356
  %v2469 = vmul.f32 %v2309, %v2357
  %v2470 = vmul.f32 %v2310, %v2358
  %v2471 = vmul.f32 %v2311, %v2359
  %v2472 = vmul.f32 %v2312, %v2360
  %v2473 = vmul.f32 %v2313, %v2361
  %v2474 = vmul.f32 %v2314, %v2362
  %v2475 = vmul.f32 %v2315, %v2363
  %v2476 = vmul.f32 %v2316, %v2364
  %v2477 = vmul.f32 %v2317, %v2365
  %v2478 = vmul.f32 %v2318, %v2350
  %v2479 = vmul.f32 %v2319, %v2351
  %v2480 = vmul.f32 %v2320, %v2352
  %v2481 = vmul.f32 %v2321, %v2353
  %v2482 = vmul.f32 %v2322, %v2354
  %v2483 = vmul.f32 %v2323, %v2355
  %v2484 = vmul.f32 %v2324, %v2356
  %v2485 = vmul.f32 %v2325, %v2357
  %v2486 = vmul.f32 %v2326, %v2358
  %v2487 = vmul.f32 %v2327, %v2359
  %v2488 = vmul.f32 %v2328, %v2360
  %v2489 = vmul.f32 %v2329, %v2361
  %v2490 = vmul.f32 %v2330, %v2362
  %v2491 = vmul.f32 %v2331, %v2363
  %v2492 = vmul.f32 %v2332, %v2364
  %v2493 = vmul.f32 %v2333, %v2365
  %v2494 = vadd.f32 %v1806, %v2366
  %v2495 = vadd.f32 %v1807, %v2367
  %v2496 = vadd.f32 %v1808, %v2368
  %v2497 = vadd.f32 %v1809, %v2369
  %v2498 = vadd.f32 %v1810, %v2370
  %v2499 = vadd.f32 %v1811, %v2371
  %v2500 = vadd.f32 %v1812, %v2372
  %v2501 = vadd.f32 %v1813, %v2373
  %v2502 = vadd.f32 %v1814, %v2374
  %v2503 = vadd.f32 %v1815, %v2375
  %v2504 = vadd.f32 %v1816, %v2376
  %v2505 = vadd.f32 %v1817, %v2377
  %v2506 = vadd.f32 %v1818, %v2378
  %v2507 = vadd.f32 %v1819, %v2379
  %v2508 = vadd.f32 %v1820, %v2380
  %v2509 = vadd.f32 %v1821, %v2381
  %v2510 = vadd.f32 %v1822, %v2382
  %v2511 = vadd.f32 %v1823, %v2383
  %v2512 = vadd.f32 %v1824, %v2384
  %v2513 = vadd.f32 %v1825, %v2385
  %v2514 = vadd.f32 %v1826, %v2386
  %v2515 = vadd.f32 %v1827, %v2387
  %v2516 = vadd.f32 %v1828, %v2388
  %v2517 = vadd.f32 %v1829, %v2389
  %v2518 = vadd.f32 %v1830, %v2390
  %v2519 = vadd.f32 %v1831, %v2391
  %v2520 = vadd.f32 %v1832, %v2392
  %v2521 = vadd.f32 %v1833, %v2393
  %v2522 = vadd.f32 %v1834, %v2394
  %v2523 = vadd.f32 %v1835, %v2395
  %v2524 = vadd.f32 %v1836, %v2396
  %v2525 = vadd.f32 %v1837, %v2397
  %v2526 = vadd.f32 %v1838, %v2398
  %v2527 = vadd.f32 %v1839, %v2399
  %v2528 = vadd.f32 %v1840, %v2400
  %v2529 = vadd.f32 %v1841, %v2401
  %v2530 = vadd.f32 %v1842, %v2402
  %v2531 = vadd.f32 %v1843, %v2403
  %v2532 = vadd.f32 %v1844, %v2404
  %v2533 = vadd.f32 %v1845, %v2405
  %v2534 = vadd.f32 %v1846, %v2406
  %v2535 = vadd.f32 %v1847, %v2407
  %v2536 = vadd.f32 %v1848, %v2408
  %v2537 = vadd.f32 %v1849, %v2409
  %v2538 = vadd.f32 %v1850, %v2410
  %v2539 = vadd.f32 %v1851, %v2411
  %v2540 = vadd.f32 %v1852, %v2412
  %v2541 = vadd.f32 %v1853, %v2413
  %v2542 = vadd.f32 %v1854, %v2414
  %v2543 = vadd.f32 %v1855, %v2415
  %v2544 = vadd.f32 %v1856, %v2416
  %v2545 = vadd.f32 %v1857, %v2417
  %v2546 = vadd.f32 %v1858, %v2418
  %v2547 = vadd.f32 %v1859, %v2419
  %v2548 = vadd.f32 %v1860, %v2420
  %v2549 = vadd.f32 %v1861, %v2421
  %v2550 = vadd.f32 %v1862, %v2422
  %v2551 = vadd.f32 %v1863, %v2423
  %v2552 = vadd.f32 %v1864, %v2424
  %v2553 = vadd.f32 %v1865, %v2425
  %v2554 = vadd.f32 %v1866, %v2426
  %v2555 = vadd.f32 %v1867, %v2427
  %v2556 = vadd.f32 %v1868, %v2428
  %v2557 = vadd.f32 %v1869, %v2429
  %v2558 = vadd.f32 %v1870, %v2430
  %v2559 = vadd.f32 %v1871, %v2431
  %v2560 = vadd.f32 %v1872, %v2432
  %v2561 = vadd.f32 %v1873, %v2433
  %v2562 = vadd.f32 %v1874, %v2434
  %v2563 = vadd.f32 %v1875, %v2435
  %v2564 = vadd.f32 %v1876, %v2436
  %v2565 = vadd.f32 %v1877, %v2437
  %v2566 = vadd.f32 %v1878, %v2438
  %v2567 = vadd.f32 %v1879, %v2439
  %v2568 = vadd.f32 %v1880, %v2440
  %v2569 = vadd.f32 %v1881, %v2441
  %v2570 = vadd.f32 %v1882, %v2442
  %v2571 = vadd.f32 %v1883, %v2443
  %v2572 = vadd.f32 %v1884, %v2444
  %v2573 = vadd.f32 %v1885, %v2445
  %v2574 = vadd.f32 %v1886, %v2446
  %v2575 = vadd.f32 %v1887, %v2447
  %v2576 = vadd.f32 %v1888, %v2448
  %v2577 = vadd.f32 %v1889, %v2449
  %v2578 = vadd.f32 %v1890, %v2450
  %v2579 = vadd.f32 %v1891, %v2451
  %v2580 = vadd.f32 %v1892, %v2452
  %v2581 = vadd.f32 %v1893, %v2453
  %v2582 = vadd.f32 %v1894, %v2454
  %v2583 = vadd.f32 %v1895, %v2455
  %v2584 = vadd.f32 %v1896, %v2456
  %v2585 = vadd.f32 %v1897, %v2457
  %v2586 = vadd.f32 %v1898, %v2458
  %v2587 = vadd.f32 %v1899, %v2459
  %v2588 = vadd.f32 %v1900, %v2460
  %v2589 = vadd.f32 %v1901, %v2461
  %v2590 = vadd.f32 %v1902, %v2462
  %v2591 = vadd.f32 %v1903, %v2463
  %v2592 = vadd.f32 %v1904, %v2464
  %v2593 = vadd.f32 %v1905, %v2465
  %v2594 = vadd.f32 %v1906, %v2466
  %v2595 = vadd.f32 %v1907, %v2467
  %v2596 = vadd.f32 %v1908, %v2468
  %v2597 = vadd.f32 %v1909, %v2469
  %v2598 = vadd.f32 %v1910, %v2470
  %v2599 = vadd.f32 %v1911, %v2471
  %v2600 = vadd.f32 %v1912, %v2472
  %v2601 = vadd.f32 %v1913, %v2473
  %v2602 = vadd.f32 %v1914, %v2474
  %v2603 = vadd.f32 %v1915, %v2475
  %v2604 = vadd.f32 %v1916, %v2476
  %v2605 = vadd.f32 %v1917, %v2477
  %v2606 = vadd.f32 %v1918, %v2478
  %v2607 = vadd.f32 %v1919, %v2479
  %v2608 = vadd.f32 %v1920, %v2480
  %v2609 = vadd.f32 %v1921, %v2481
  %v2610 = vadd.f32 %v1922, %v2482
  %v2611 = vadd.f32 %v1923, %v2483
  %v2612 = vadd.f32 %v1924, %v2484
  %v2613 = vadd.f32 %v1925, %v2485
  %v2614 = vadd.f32 %v1926, %v2486
  %v2615 = vadd.f32 %v1927, %v2487
  %v2616 = vadd.f32 %v1928, %v2488
  %v2617 = vadd.f32 %v1929, %v2489
  %v2618 = vadd.f32 %v1930, %v2490
  %v2619 = vadd.f32 %v1931, %v2491
  %v2620 = vadd.f32 %v1932, %v2492
  %v2621 = vadd.f32 %v1933, %v2493
  %v2622 = vperm.slane %v1127, 0
  %v2623 = vperm.slane %v1128, 0
  %v2624 = vperm.slane %v1129, 0
  %v2625 = vperm.slane %v1130, 0
  %v2626 = vperm.slane %v1131, 0
  %v2627 = vperm.slane %v1132, 0
  %v2628 = vperm.slane %v1133, 0
  %v2629 = vperm.slane %v1134, 0
  %v2630 = vperm.slane %v1135, 0
  %v2631 = vperm.slane %v1136, 0
  %v2632 = vperm.slane %v1137, 0
  %v2633 = vperm.slane %v1138, 0
  %v2634 = vperm.slane %v1139, 0
  %v2635 = vperm.slane %v1140, 0
  %v2636 = vperm.slane %v1141, 0
  %v2637 = vperm.slane %v1142, 0
  %vm2638 = vcmp.eq.s32.totalorder %v433, %v2622
  %vm2639 = vcmp.eq.s32.totalorder %v433, %v2623
  %vm2640 = vcmp.eq.s32.totalorder %v433, %v2624
  %vm2641 = vcmp.eq.s32.totalorder %v433, %v2625
  %vm2642 = vcmp.eq.s32.totalorder %v433, %v2626
  %vm2643 = vcmp.eq.s32.totalorder %v433, %v2627
  %vm2644 = vcmp.eq.s32.totalorder %v433, %v2628
  %vm2645 = vcmp.eq.s32.totalorder %v433, %v2629
  %vm2646 = vcmp.eq.s32.totalorder %v433, %v2630
  %vm2647 = vcmp.eq.s32.totalorder %v433, %v2631
  %vm2648 = vcmp.eq.s32.totalorder %v433, %v2632
  %vm2649 = vcmp.eq.s32.totalorder %v433, %v2633
  %vm2650 = vcmp.eq.s32.totalorder %v433, %v2634
  %vm2651 = vcmp.eq.s32.totalorder %v433, %v2635
  %vm2652 = vcmp.eq.s32.totalorder %v433, %v2636
  %vm2653 = vcmp.eq.s32.totalorder %v433, %v2637
  %vm2654 = vcmp.eq.s32.totalorder %v1319, %v2622
  %vm2655 = vcmp.eq.s32.totalorder %v1319, %v2623
  %vm2656 = vcmp.eq.s32.totalorder %v1319, %v2624
  %vm2657 = vcmp.eq.s32.totalorder %v1319, %v2625
  %vm2658 = vcmp.eq.s32.totalorder %v1319, %v2626
  %vm2659 = vcmp.eq.s32.totalorder %v1319, %v2627
  %vm2660 = vcmp.eq.s32.totalorder %v1319, %v2628
  %vm2661 = vcmp.eq.s32.totalorder %v1319, %v2629
  %vm2662 = vcmp.eq.s32.totalorder %v1319, %v2630
  %vm2663 = vcmp.eq.s32.totalorder %v1319, %v2631
  %vm2664 = vcmp.eq.s32.totalorder %v1319, %v2632
  %vm2665 = vcmp.eq.s32.totalorder %v1319, %v2633
  %vm2666 = vcmp.eq.s32.totalorder %v1319, %v2634
  %vm2667 = vcmp.eq.s32.totalorder %v1319, %v2635
  %vm2668 = vcmp.eq.s32.totalorder %v1319, %v2636
  %vm2669 = vcmp.eq.s32.totalorder %v1319, %v2637
  %vm2670 = vcmp.eq.s32.totalorder %v1320, %v2622
  %vm2671 = vcmp.eq.s32.totalorder %v1320, %v2623
  %vm2672 = vcmp.eq.s32.totalorder %v1320, %v2624
  %vm2673 = vcmp.eq.s32.totalorder %v1320, %v2625
  %vm2674 = vcmp.eq.s32.totalorder %v1320, %v2626
  %vm2675 = vcmp.eq.s32.totalorder %v1320, %v2627
  %vm2676 = vcmp.eq.s32.totalorder %v1320, %v2628
  %vm2677 = vcmp.eq.s32.totalorder %v1320, %v2629
  %vm2678 = vcmp.eq.s32.totalorder %v1320, %v2630
  %vm2679 = vcmp.eq.s32.totalorder %v1320, %v2631
  %vm2680 = vcmp.eq.s32.totalorder %v1320, %v2632
  %vm2681 = vcmp.eq.s32.totalorder %v1320, %v2633
  %vm2682 = vcmp.eq.s32.totalorder %v1320, %v2634
  %vm2683 = vcmp.eq.s32.totalorder %v1320, %v2635
  %vm2684 = vcmp.eq.s32.totalorder %v1320, %v2636
  %vm2685 = vcmp.eq.s32.totalorder %v1320, %v2637
  %vm2686 = vcmp.eq.s32.totalorder %v1321, %v2622
  %vm2687 = vcmp.eq.s32.totalorder %v1321, %v2623
  %vm2688 = vcmp.eq.s32.totalorder %v1321, %v2624
  %vm2689 = vcmp.eq.s32.totalorder %v1321, %v2625
  %vm2690 = vcmp.eq.s32.totalorder %v1321, %v2626
  %vm2691 = vcmp.eq.s32.totalorder %v1321, %v2627
  %vm2692 = vcmp.eq.s32.totalorder %v1321, %v2628
  %vm2693 = vcmp.eq.s32.totalorder %v1321, %v2629
  %vm2694 = vcmp.eq.s32.totalorder %v1321, %v2630
  %vm2695 = vcmp.eq.s32.totalorder %v1321, %v2631
  %vm2696 = vcmp.eq.s32.totalorder %v1321, %v2632
  %vm2697 = vcmp.eq.s32.totalorder %v1321, %v2633
  %vm2698 = vcmp.eq.s32.totalorder %v1321, %v2634
  %vm2699 = vcmp.eq.s32.totalorder %v1321, %v2635
  %vm2700 = vcmp.eq.s32.totalorder %v1321, %v2636
  %vm2701 = vcmp.eq.s32.totalorder %v1321, %v2637
  %v2702 = vsel %vm2638, 1, 0
  %v2703 = vsel %vm2639, 1, 0
  %v2704 = vsel %vm2640, 1, 0
  %v2705 = vsel %vm2641, 1, 0
  %v2706 = vsel %vm2642, 1, 0
  %v2707 = vsel %vm2643, 1, 0
  %v2708 = vsel %vm2644, 1, 0
  %v2709 = vsel %vm2645, 1, 0
  %v2710 = vsel %vm2646, 1, 0
  %v2711 = vsel %vm2647, 1, 0
  %v2712 = vsel %vm2648, 1, 0
  %v2713 = vsel %vm2649, 1, 0
  %v2714 = vsel %vm2650, 1, 0
  %v2715 = vsel %vm2651, 1, 0
  %v2716 = vsel %vm2652, 1, 0
  %v2717 = vsel %vm2653, 1, 0
  %v2718 = vsel %vm2654, 1, 0
  %v2719 = vsel %vm2655, 1, 0
  %v2720 = vsel %vm2656, 1, 0
  %v2721 = vsel %vm2657, 1, 0
  %v2722 = vsel %vm2658, 1, 0
  %v2723 = vsel %vm2659, 1, 0
  %v2724 = vsel %vm2660, 1, 0
  %v2725 = vsel %vm2661, 1, 0
  %v2726 = vsel %vm2662, 1, 0
  %v2727 = vsel %vm2663, 1, 0
  %v2728 = vsel %vm2664, 1, 0
  %v2729 = vsel %vm2665, 1, 0
  %v2730 = vsel %vm2666, 1, 0
  %v2731 = vsel %vm2667, 1, 0
  %v2732 = vsel %vm2668, 1, 0
  %v2733 = vsel %vm2669, 1, 0
  %v2734 = vsel %vm2670, 1, 0
  %v2735 = vsel %vm2671, 1, 0
  %v2736 = vsel %vm2672, 1, 0
  %v2737 = vsel %vm2673, 1, 0
  %v2738 = vsel %vm2674, 1, 0
  %v2739 = vsel %vm2675, 1, 0
  %v2740 = vsel %vm2676, 1, 0
  %v2741 = vsel %vm2677, 1, 0
  %v2742 = vsel %vm2678, 1, 0
  %v2743 = vsel %vm2679, 1, 0
  %v2744 = vsel %vm2680, 1, 0
  %v2745 = vsel %vm2681, 1, 0
  %v2746 = vsel %vm2682, 1, 0
  %v2747 = vsel %vm2683, 1, 0
  %v2748 = vsel %vm2684, 1, 0
  %v2749 = vsel %vm2685, 1, 0
  %v2750 = vsel %vm2686, 1, 0
  %v2751 = vsel %vm2687, 1, 0
  %v2752 = vsel %vm2688, 1, 0
  %v2753 = vsel %vm2689, 1, 0
  %v2754 = vsel %vm2690, 1, 0
  %v2755 = vsel %vm2691, 1, 0
  %v2756 = vsel %vm2692, 1, 0
  %v2757 = vsel %vm2693, 1, 0
  %v2758 = vsel %vm2694, 1, 0
  %v2759 = vsel %vm2695, 1, 0
  %v2760 = vsel %vm2696, 1, 0
  %v2761 = vsel %vm2697, 1, 0
  %v2762 = vsel %vm2698, 1, 0
  %v2763 = vsel %vm2699, 1, 0
  %v2764 = vsel %vm2700, 1, 0
  %v2765 = vsel %vm2701, 1, 0
  %v2766 = vcvt.s32.f32 %v2702
  %v2767 = vcvt.s32.f32 %v2703
  %v2768 = vcvt.s32.f32 %v2704
  %v2769 = vcvt.s32.f32 %v2705
  %v2770 = vcvt.s32.f32 %v2706
  %v2771 = vcvt.s32.f32 %v2707
  %v2772 = vcvt.s32.f32 %v2708
  %v2773 = vcvt.s32.f32 %v2709
  %v2774 = vcvt.s32.f32 %v2710
  %v2775 = vcvt.s32.f32 %v2711
  %v2776 = vcvt.s32.f32 %v2712
  %v2777 = vcvt.s32.f32 %v2713
  %v2778 = vcvt.s32.f32 %v2714
  %v2779 = vcvt.s32.f32 %v2715
  %v2780 = vcvt.s32.f32 %v2716
  %v2781 = vcvt.s32.f32 %v2717
  %v2782 = vcvt.s32.f32 %v2718
  %v2783 = vcvt.s32.f32 %v2719
  %v2784 = vcvt.s32.f32 %v2720
  %v2785 = vcvt.s32.f32 %v2721
  %v2786 = vcvt.s32.f32 %v2722
  %v2787 = vcvt.s32.f32 %v2723
  %v2788 = vcvt.s32.f32 %v2724
  %v2789 = vcvt.s32.f32 %v2725
  %v2790 = vcvt.s32.f32 %v2726
  %v2791 = vcvt.s32.f32 %v2727
  %v2792 = vcvt.s32.f32 %v2728
  %v2793 = vcvt.s32.f32 %v2729
  %v2794 = vcvt.s32.f32 %v2730
  %v2795 = vcvt.s32.f32 %v2731
  %v2796 = vcvt.s32.f32 %v2732
  %v2797 = vcvt.s32.f32 %v2733
  %v2798 = vcvt.s32.f32 %v2734
  %v2799 = vcvt.s32.f32 %v2735
  %v2800 = vcvt.s32.f32 %v2736
  %v2801 = vcvt.s32.f32 %v2737
  %v2802 = vcvt.s32.f32 %v2738
  %v2803 = vcvt.s32.f32 %v2739
  %v2804 = vcvt.s32.f32 %v2740
  %v2805 = vcvt.s32.f32 %v2741
  %v2806 = vcvt.s32.f32 %v2742
  %v2807 = vcvt.s32.f32 %v2743
  %v2808 = vcvt.s32.f32 %v2744
  %v2809 = vcvt.s32.f32 %v2745
  %v2810 = vcvt.s32.f32 %v2746
  %v2811 = vcvt.s32.f32 %v2747
  %v2812 = vcvt.s32.f32 %v2748
  %v2813 = vcvt.s32.f32 %v2749
  %v2814 = vcvt.s32.f32 %v2750
  %v2815 = vcvt.s32.f32 %v2751
  %v2816 = vcvt.s32.f32 %v2752
  %v2817 = vcvt.s32.f32 %v2753
  %v2818 = vcvt.s32.f32 %v2754
  %v2819 = vcvt.s32.f32 %v2755
  %v2820 = vcvt.s32.f32 %v2756
  %v2821 = vcvt.s32.f32 %v2757
  %v2822 = vcvt.s32.f32 %v2758
  %v2823 = vcvt.s32.f32 %v2759
  %v2824 = vcvt.s32.f32 %v2760
  %v2825 = vcvt.s32.f32 %v2761
  %v2826 = vcvt.s32.f32 %v2762
  %v2827 = vcvt.s32.f32 %v2763
  %v2828 = vcvt.s32.f32 %v2764
  %v2829 = vcvt.s32.f32 %v2765
  %v2830 = vperm.slane %v1774, 0
  %v2831 = vperm.slane %v1775, 0
  %v2832 = vperm.slane %v1776, 0
  %v2833 = vperm.slane %v1777, 0
  %v2834 = vperm.slane %v1778, 0
  %v2835 = vperm.slane %v1779, 0
  %v2836 = vperm.slane %v1780, 0
  %v2837 = vperm.slane %v1781, 0
  %v2838 = vperm.slane %v1782, 0
  %v2839 = vperm.slane %v1783, 0
  %v2840 = vperm.slane %v1784, 0
  %v2841 = vperm.slane %v1785, 0
  %v2842 = vperm.slane %v1786, 0
  %v2843 = vperm.slane %v1787, 0
  %v2844 = vperm.slane %v1788, 0
  %v2845 = vperm.slane %v1789, 0
  %v2846 = vmul.f32 %v2766, %v2830
  %v2847 = vmul.f32 %v2767, %v2831
  %v2848 = vmul.f32 %v2768, %v2832
  %v2849 = vmul.f32 %v2769, %v2833
  %v2850 = vmul.f32 %v2770, %v2834
  %v2851 = vmul.f32 %v2771, %v2835
  %v2852 = vmul.f32 %v2772, %v2836
  %v2853 = vmul.f32 %v2773, %v2837
  %v2854 = vmul.f32 %v2774, %v2838
  %v2855 = vmul.f32 %v2775, %v2839
  %v2856 = vmul.f32 %v2776, %v2840
  %v2857 = vmul.f32 %v2777, %v2841
  %v2858 = vmul.f32 %v2778, %v2842
  %v2859 = vmul.f32 %v2779, %v2843
  %v2860 = vmul.f32 %v2780, %v2844
  %v2861 = vmul.f32 %v2781, %v2845
  %v2862 = vmul.f32 %v2782, %v2830
  %v2863 = vmul.f32 %v2783, %v2831
  %v2864 = vmul.f32 %v2784, %v2832
  %v2865 = vmul.f32 %v2785, %v2833
  %v2866 = vmul.f32 %v2786, %v2834
  %v2867 = vmul.f32 %v2787, %v2835
  %v2868 = vmul.f32 %v2788, %v2836
  %v2869 = vmul.f32 %v2789, %v2837
  %v2870 = vmul.f32 %v2790, %v2838
  %v2871 = vmul.f32 %v2791, %v2839
  %v2872 = vmul.f32 %v2792, %v2840
  %v2873 = vmul.f32 %v2793, %v2841
  %v2874 = vmul.f32 %v2794, %v2842
  %v2875 = vmul.f32 %v2795, %v2843
  %v2876 = vmul.f32 %v2796, %v2844
  %v2877 = vmul.f32 %v2797, %v2845
  %v2878 = vmul.f32 %v2798, %v2830
  %v2879 = vmul.f32 %v2799, %v2831
  %v2880 = vmul.f32 %v2800, %v2832
  %v2881 = vmul.f32 %v2801, %v2833
  %v2882 = vmul.f32 %v2802, %v2834
  %v2883 = vmul.f32 %v2803, %v2835
  %v2884 = vmul.f32 %v2804, %v2836
  %v2885 = vmul.f32 %v2805, %v2837
  %v2886 = vmul.f32 %v2806, %v2838
  %v2887 = vmul.f32 %v2807, %v2839
  %v2888 = vmul.f32 %v2808, %v2840
  %v2889 = vmul.f32 %v2809, %v2841
  %v2890 = vmul.f32 %v2810, %v2842
  %v2891 = vmul.f32 %v2811, %v2843
  %v2892 = vmul.f32 %v2812, %v2844
  %v2893 = vmul.f32 %v2813, %v2845
  %v2894 = vmul.f32 %v2814, %v2830
  %v2895 = vmul.f32 %v2815, %v2831
  %v2896 = vmul.f32 %v2816, %v2832
  %v2897 = vmul.f32 %v2817, %v2833
  %v2898 = vmul.f32 %v2818, %v2834
  %v2899 = vmul.f32 %v2819, %v2835
  %v2900 = vmul.f32 %v2820, %v2836
  %v2901 = vmul.f32 %v2821, %v2837
  %v2902 = vmul.f32 %v2822, %v2838
  %v2903 = vmul.f32 %v2823, %v2839
  %v2904 = vmul.f32 %v2824, %v2840
  %v2905 = vmul.f32 %v2825, %v2841
  %v2906 = vmul.f32 %v2826, %v2842
  %v2907 = vmul.f32 %v2827, %v2843
  %v2908 = vmul.f32 %v2828, %v2844
  %v2909 = vmul.f32 %v2829, %v2845
  %v2910 = vperm.slane %v1143, 0
  %v2911 = vperm.slane %v1144, 0
  %v2912 = vperm.slane %v1145, 0
  %v2913 = vperm.slane %v1146, 0
  %v2914 = vperm.slane %v1147, 0
  %v2915 = vperm.slane %v1148, 0
  %v2916 = vperm.slane %v1149, 0
  %v2917 = vperm.slane %v1150, 0
  %v2918 = vperm.slane %v1151, 0
  %v2919 = vperm.slane %v1152, 0
  %v2920 = vperm.slane %v1153, 0
  %v2921 = vperm.slane %v1154, 0
  %v2922 = vperm.slane %v1155, 0
  %v2923 = vperm.slane %v1156, 0
  %v2924 = vperm.slane %v1157, 0
  %v2925 = vperm.slane %v1158, 0
  %vm2926 = vcmp.eq.s32.totalorder %v433, %v2910
  %vm2927 = vcmp.eq.s32.totalorder %v433, %v2911
  %vm2928 = vcmp.eq.s32.totalorder %v433, %v2912
  %vm2929 = vcmp.eq.s32.totalorder %v433, %v2913
  %vm2930 = vcmp.eq.s32.totalorder %v433, %v2914
  %vm2931 = vcmp.eq.s32.totalorder %v433, %v2915
  %vm2932 = vcmp.eq.s32.totalorder %v433, %v2916
  %vm2933 = vcmp.eq.s32.totalorder %v433, %v2917
  %vm2934 = vcmp.eq.s32.totalorder %v433, %v2918
  %vm2935 = vcmp.eq.s32.totalorder %v433, %v2919
  %vm2936 = vcmp.eq.s32.totalorder %v433, %v2920
  %vm2937 = vcmp.eq.s32.totalorder %v433, %v2921
  %vm2938 = vcmp.eq.s32.totalorder %v433, %v2922
  %vm2939 = vcmp.eq.s32.totalorder %v433, %v2923
  %vm2940 = vcmp.eq.s32.totalorder %v433, %v2924
  %vm2941 = vcmp.eq.s32.totalorder %v433, %v2925
  %vm2942 = vcmp.eq.s32.totalorder %v1319, %v2910
  %vm2943 = vcmp.eq.s32.totalorder %v1319, %v2911
  %vm2944 = vcmp.eq.s32.totalorder %v1319, %v2912
  %vm2945 = vcmp.eq.s32.totalorder %v1319, %v2913
  %vm2946 = vcmp.eq.s32.totalorder %v1319, %v2914
  %vm2947 = vcmp.eq.s32.totalorder %v1319, %v2915
  %vm2948 = vcmp.eq.s32.totalorder %v1319, %v2916
  %vm2949 = vcmp.eq.s32.totalorder %v1319, %v2917
  %vm2950 = vcmp.eq.s32.totalorder %v1319, %v2918
  %vm2951 = vcmp.eq.s32.totalorder %v1319, %v2919
  %vm2952 = vcmp.eq.s32.totalorder %v1319, %v2920
  %vm2953 = vcmp.eq.s32.totalorder %v1319, %v2921
  %vm2954 = vcmp.eq.s32.totalorder %v1319, %v2922
  %vm2955 = vcmp.eq.s32.totalorder %v1319, %v2923
  %vm2956 = vcmp.eq.s32.totalorder %v1319, %v2924
  %vm2957 = vcmp.eq.s32.totalorder %v1319, %v2925
  %vm2958 = vcmp.eq.s32.totalorder %v1320, %v2910
  %vm2959 = vcmp.eq.s32.totalorder %v1320, %v2911
  %vm2960 = vcmp.eq.s32.totalorder %v1320, %v2912
  %vm2961 = vcmp.eq.s32.totalorder %v1320, %v2913
  %vm2962 = vcmp.eq.s32.totalorder %v1320, %v2914
  %vm2963 = vcmp.eq.s32.totalorder %v1320, %v2915
  %vm2964 = vcmp.eq.s32.totalorder %v1320, %v2916
  %vm2965 = vcmp.eq.s32.totalorder %v1320, %v2917
  %vm2966 = vcmp.eq.s32.totalorder %v1320, %v2918
  %vm2967 = vcmp.eq.s32.totalorder %v1320, %v2919
  %vm2968 = vcmp.eq.s32.totalorder %v1320, %v2920
  %vm2969 = vcmp.eq.s32.totalorder %v1320, %v2921
  %vm2970 = vcmp.eq.s32.totalorder %v1320, %v2922
  %vm2971 = vcmp.eq.s32.totalorder %v1320, %v2923
  %vm2972 = vcmp.eq.s32.totalorder %v1320, %v2924
  %vm2973 = vcmp.eq.s32.totalorder %v1320, %v2925
  %vm2974 = vcmp.eq.s32.totalorder %v1321, %v2910
  %vm2975 = vcmp.eq.s32.totalorder %v1321, %v2911
  %vm2976 = vcmp.eq.s32.totalorder %v1321, %v2912
  %vm2977 = vcmp.eq.s32.totalorder %v1321, %v2913
  %vm2978 = vcmp.eq.s32.totalorder %v1321, %v2914
  %vm2979 = vcmp.eq.s32.totalorder %v1321, %v2915
  %vm2980 = vcmp.eq.s32.totalorder %v1321, %v2916
  %vm2981 = vcmp.eq.s32.totalorder %v1321, %v2917
  %vm2982 = vcmp.eq.s32.totalorder %v1321, %v2918
  %vm2983 = vcmp.eq.s32.totalorder %v1321, %v2919
  %vm2984 = vcmp.eq.s32.totalorder %v1321, %v2920
  %vm2985 = vcmp.eq.s32.totalorder %v1321, %v2921
  %vm2986 = vcmp.eq.s32.totalorder %v1321, %v2922
  %vm2987 = vcmp.eq.s32.totalorder %v1321, %v2923
  %vm2988 = vcmp.eq.s32.totalorder %v1321, %v2924
  %vm2989 = vcmp.eq.s32.totalorder %v1321, %v2925
  %v2990 = vsel %vm2926, 1, 0
  %v2991 = vsel %vm2927, 1, 0
  %v2992 = vsel %vm2928, 1, 0
  %v2993 = vsel %vm2929, 1, 0
  %v2994 = vsel %vm2930, 1, 0
  %v2995 = vsel %vm2931, 1, 0
  %v2996 = vsel %vm2932, 1, 0
  %v2997 = vsel %vm2933, 1, 0
  %v2998 = vsel %vm2934, 1, 0
  %v2999 = vsel %vm2935, 1, 0
  %v3000 = vsel %vm2936, 1, 0
  %v3001 = vsel %vm2937, 1, 0
  %v3002 = vsel %vm2938, 1, 0
  %v3003 = vsel %vm2939, 1, 0
  %v3004 = vsel %vm2940, 1, 0
  %v3005 = vsel %vm2941, 1, 0
  %v3006 = vsel %vm2942, 1, 0
  %v3007 = vsel %vm2943, 1, 0
  %v3008 = vsel %vm2944, 1, 0
  %v3009 = vsel %vm2945, 1, 0
  %v3010 = vsel %vm2946, 1, 0
  %v3011 = vsel %vm2947, 1, 0
  %v3012 = vsel %vm2948, 1, 0
  %v3013 = vsel %vm2949, 1, 0
  %v3014 = vsel %vm2950, 1, 0
  %v3015 = vsel %vm2951, 1, 0
  %v3016 = vsel %vm2952, 1, 0
  %v3017 = vsel %vm2953, 1, 0
  %v3018 = vsel %vm2954, 1, 0
  %v3019 = vsel %vm2955, 1, 0
  %v3020 = vsel %vm2956, 1, 0
  %v3021 = vsel %vm2957, 1, 0
  %v3022 = vsel %vm2958, 1, 0
  %v3023 = vsel %vm2959, 1, 0
  %v3024 = vsel %vm2960, 1, 0
  %v3025 = vsel %vm2961, 1, 0
  %v3026 = vsel %vm2962, 1, 0
  %v3027 = vsel %vm2963, 1, 0
  %v3028 = vsel %vm2964, 1, 0
  %v3029 = vsel %vm2965, 1, 0
  %v3030 = vsel %vm2966, 1, 0
  %v3031 = vsel %vm2967, 1, 0
  %v3032 = vsel %vm2968, 1, 0
  %v3033 = vsel %vm2969, 1, 0
  %v3034 = vsel %vm2970, 1, 0
  %v3035 = vsel %vm2971, 1, 0
  %v3036 = vsel %vm2972, 1, 0
  %v3037 = vsel %vm2973, 1, 0
  %v3038 = vsel %vm2974, 1, 0
  %v3039 = vsel %vm2975, 1, 0
  %v3040 = vsel %vm2976, 1, 0
  %v3041 = vsel %vm2977, 1, 0
  %v3042 = vsel %vm2978, 1, 0
  %v3043 = vsel %vm2979, 1, 0
  %v3044 = vsel %vm2980, 1, 0
  %v3045 = vsel %vm2981, 1, 0
  %v3046 = vsel %vm2982, 1, 0
  %v3047 = vsel %vm2983, 1, 0
  %v3048 = vsel %vm2984, 1, 0
  %v3049 = vsel %vm2985, 1, 0
  %v3050 = vsel %vm2986, 1, 0
  %v3051 = vsel %vm2987, 1, 0
  %v3052 = vsel %vm2988, 1, 0
  %v3053 = vsel %vm2989, 1, 0
  %v3054 = vcvt.s32.f32 %v2990
  %v3055 = vcvt.s32.f32 %v2991
  %v3056 = vcvt.s32.f32 %v2992
  %v3057 = vcvt.s32.f32 %v2993
  %v3058 = vcvt.s32.f32 %v2994
  %v3059 = vcvt.s32.f32 %v2995
  %v3060 = vcvt.s32.f32 %v2996
  %v3061 = vcvt.s32.f32 %v2997
  %v3062 = vcvt.s32.f32 %v2998
  %v3063 = vcvt.s32.f32 %v2999
  %v3064 = vcvt.s32.f32 %v3000
  %v3065 = vcvt.s32.f32 %v3001
  %v3066 = vcvt.s32.f32 %v3002
  %v3067 = vcvt.s32.f32 %v3003
  %v3068 = vcvt.s32.f32 %v3004
  %v3069 = vcvt.s32.f32 %v3005
  %v3070 = vcvt.s32.f32 %v3006
  %v3071 = vcvt.s32.f32 %v3007
  %v3072 = vcvt.s32.f32 %v3008
  %v3073 = vcvt.s32.f32 %v3009
  %v3074 = vcvt.s32.f32 %v3010
  %v3075 = vcvt.s32.f32 %v3011
  %v3076 = vcvt.s32.f32 %v3012
  %v3077 = vcvt.s32.f32 %v3013
  %v3078 = vcvt.s32.f32 %v3014
  %v3079 = vcvt.s32.f32 %v3015
  %v3080 = vcvt.s32.f32 %v3016
  %v3081 = vcvt.s32.f32 %v3017
  %v3082 = vcvt.s32.f32 %v3018
  %v3083 = vcvt.s32.f32 %v3019
  %v3084 = vcvt.s32.f32 %v3020
  %v3085 = vcvt.s32.f32 %v3021
  %v3086 = vcvt.s32.f32 %v3022
  %v3087 = vcvt.s32.f32 %v3023
  %v3088 = vcvt.s32.f32 %v3024
  %v3089 = vcvt.s32.f32 %v3025
  %v3090 = vcvt.s32.f32 %v3026
  %v3091 = vcvt.s32.f32 %v3027
  %v3092 = vcvt.s32.f32 %v3028
  %v3093 = vcvt.s32.f32 %v3029
  %v3094 = vcvt.s32.f32 %v3030
  %v3095 = vcvt.s32.f32 %v3031
  %v3096 = vcvt.s32.f32 %v3032
  %v3097 = vcvt.s32.f32 %v3033
  %v3098 = vcvt.s32.f32 %v3034
  %v3099 = vcvt.s32.f32 %v3035
  %v3100 = vcvt.s32.f32 %v3036
  %v3101 = vcvt.s32.f32 %v3037
  %v3102 = vcvt.s32.f32 %v3038
  %v3103 = vcvt.s32.f32 %v3039
  %v3104 = vcvt.s32.f32 %v3040
  %v3105 = vcvt.s32.f32 %v3041
  %v3106 = vcvt.s32.f32 %v3042
  %v3107 = vcvt.s32.f32 %v3043
  %v3108 = vcvt.s32.f32 %v3044
  %v3109 = vcvt.s32.f32 %v3045
  %v3110 = vcvt.s32.f32 %v3046
  %v3111 = vcvt.s32.f32 %v3047
  %v3112 = vcvt.s32.f32 %v3048
  %v3113 = vcvt.s32.f32 %v3049
  %v3114 = vcvt.s32.f32 %v3050
  %v3115 = vcvt.s32.f32 %v3051
  %v3116 = vcvt.s32.f32 %v3052
  %v3117 = vcvt.s32.f32 %v3053
  %v3118 = vperm.slane %v2334, 0
  %v3119 = vperm.slane %v2335, 0
  %v3120 = vperm.slane %v2336, 0
  %v3121 = vperm.slane %v2337, 0
  %v3122 = vperm.slane %v2338, 0
  %v3123 = vperm.slane %v2339, 0
  %v3124 = vperm.slane %v2340, 0
  %v3125 = vperm.slane %v2341, 0
  %v3126 = vperm.slane %v2342, 0
  %v3127 = vperm.slane %v2343, 0
  %v3128 = vperm.slane %v2344, 0
  %v3129 = vperm.slane %v2345, 0
  %v3130 = vperm.slane %v2346, 0
  %v3131 = vperm.slane %v2347, 0
  %v3132 = vperm.slane %v2348, 0
  %v3133 = vperm.slane %v2349, 0
  %v3134 = vmul.f32 %v3054, %v3118
  %v3135 = vmul.f32 %v3055, %v3119
  %v3136 = vmul.f32 %v3056, %v3120
  %v3137 = vmul.f32 %v3057, %v3121
  %v3138 = vmul.f32 %v3058, %v3122
  %v3139 = vmul.f32 %v3059, %v3123
  %v3140 = vmul.f32 %v3060, %v3124
  %v3141 = vmul.f32 %v3061, %v3125
  %v3142 = vmul.f32 %v3062, %v3126
  %v3143 = vmul.f32 %v3063, %v3127
  %v3144 = vmul.f32 %v3064, %v3128
  %v3145 = vmul.f32 %v3065, %v3129
  %v3146 = vmul.f32 %v3066, %v3130
  %v3147 = vmul.f32 %v3067, %v3131
  %v3148 = vmul.f32 %v3068, %v3132
  %v3149 = vmul.f32 %v3069, %v3133
  %v3150 = vmul.f32 %v3070, %v3118
  %v3151 = vmul.f32 %v3071, %v3119
  %v3152 = vmul.f32 %v3072, %v3120
  %v3153 = vmul.f32 %v3073, %v3121
  %v3154 = vmul.f32 %v3074, %v3122
  %v3155 = vmul.f32 %v3075, %v3123
  %v3156 = vmul.f32 %v3076, %v3124
  %v3157 = vmul.f32 %v3077, %v3125
  %v3158 = vmul.f32 %v3078, %v3126
  %v3159 = vmul.f32 %v3079, %v3127
  %v3160 = vmul.f32 %v3080, %v3128
  %v3161 = vmul.f32 %v3081, %v3129
  %v3162 = vmul.f32 %v3082, %v3130
  %v3163 = vmul.f32 %v3083, %v3131
  %v3164 = vmul.f32 %v3084, %v3132
  %v3165 = vmul.f32 %v3085, %v3133
  %v3166 = vmul.f32 %v3086, %v3118
  %v3167 = vmul.f32 %v3087, %v3119
  %v3168 = vmul.f32 %v3088, %v3120
  %v3169 = vmul.f32 %v3089, %v3121
  %v3170 = vmul.f32 %v3090, %v3122
  %v3171 = vmul.f32 %v3091, %v3123
  %v3172 = vmul.f32 %v3092, %v3124
  %v3173 = vmul.f32 %v3093, %v3125
  %v3174 = vmul.f32 %v3094, %v3126
  %v3175 = vmul.f32 %v3095, %v3127
  %v3176 = vmul.f32 %v3096, %v3128
  %v3177 = vmul.f32 %v3097, %v3129
  %v3178 = vmul.f32 %v3098, %v3130
  %v3179 = vmul.f32 %v3099, %v3131
  %v3180 = vmul.f32 %v3100, %v3132
  %v3181 = vmul.f32 %v3101, %v3133
  %v3182 = vmul.f32 %v3102, %v3118
  %v3183 = vmul.f32 %v3103, %v3119
  %v3184 = vmul.f32 %v3104, %v3120
  %v3185 = vmul.f32 %v3105, %v3121
  %v3186 = vmul.f32 %v3106, %v3122
  %v3187 = vmul.f32 %v3107, %v3123
  %v3188 = vmul.f32 %v3108, %v3124
  %v3189 = vmul.f32 %v3109, %v3125
  %v3190 = vmul.f32 %v3110, %v3126
  %v3191 = vmul.f32 %v3111, %v3127
  %v3192 = vmul.f32 %v3112, %v3128
  %v3193 = vmul.f32 %v3113, %v3129
  %v3194 = vmul.f32 %v3114, %v3130
  %v3195 = vmul.f32 %v3115, %v3131
  %v3196 = vmul.f32 %v3116, %v3132
  %v3197 = vmul.f32 %v3117, %v3133
  %v3198 = vadd.f32 %v2846, %v3134
  %v3199 = vadd.f32 %v2847, %v3135
  %v3200 = vadd.f32 %v2848, %v3136
  %v3201 = vadd.f32 %v2849, %v3137
  %v3202 = vadd.f32 %v2850, %v3138
  %v3203 = vadd.f32 %v2851, %v3139
  %v3204 = vadd.f32 %v2852, %v3140
  %v3205 = vadd.f32 %v2853, %v3141
  %v3206 = vadd.f32 %v2854, %v3142
  %v3207 = vadd.f32 %v2855, %v3143
  %v3208 = vadd.f32 %v2856, %v3144
  %v3209 = vadd.f32 %v2857, %v3145
  %v3210 = vadd.f32 %v2858, %v3146
  %v3211 = vadd.f32 %v2859, %v3147
  %v3212 = vadd.f32 %v2860, %v3148
  %v3213 = vadd.f32 %v2861, %v3149
  %v3214 = vadd.f32 %v2862, %v3150
  %v3215 = vadd.f32 %v2863, %v3151
  %v3216 = vadd.f32 %v2864, %v3152
  %v3217 = vadd.f32 %v2865, %v3153
  %v3218 = vadd.f32 %v2866, %v3154
  %v3219 = vadd.f32 %v2867, %v3155
  %v3220 = vadd.f32 %v2868, %v3156
  %v3221 = vadd.f32 %v2869, %v3157
  %v3222 = vadd.f32 %v2870, %v3158
  %v3223 = vadd.f32 %v2871, %v3159
  %v3224 = vadd.f32 %v2872, %v3160
  %v3225 = vadd.f32 %v2873, %v3161
  %v3226 = vadd.f32 %v2874, %v3162
  %v3227 = vadd.f32 %v2875, %v3163
  %v3228 = vadd.f32 %v2876, %v3164
  %v3229 = vadd.f32 %v2877, %v3165
  %v3230 = vadd.f32 %v2878, %v3166
  %v3231 = vadd.f32 %v2879, %v3167
  %v3232 = vadd.f32 %v2880, %v3168
  %v3233 = vadd.f32 %v2881, %v3169
  %v3234 = vadd.f32 %v2882, %v3170
  %v3235 = vadd.f32 %v2883, %v3171
  %v3236 = vadd.f32 %v2884, %v3172
  %v3237 = vadd.f32 %v2885, %v3173
  %v3238 = vadd.f32 %v2886, %v3174
  %v3239 = vadd.f32 %v2887, %v3175
  %v3240 = vadd.f32 %v2888, %v3176
  %v3241 = vadd.f32 %v2889, %v3177
  %v3242 = vadd.f32 %v2890, %v3178
  %v3243 = vadd.f32 %v2891, %v3179
  %v3244 = vadd.f32 %v2892, %v3180
  %v3245 = vadd.f32 %v2893, %v3181
  %v3246 = vadd.f32 %v2894, %v3182
  %v3247 = vadd.f32 %v2895, %v3183
  %v3248 = vadd.f32 %v2896, %v3184
  %v3249 = vadd.f32 %v2897, %v3185
  %v3250 = vadd.f32 %v2898, %v3186
  %v3251 = vadd.f32 %v2899, %v3187
  %v3252 = vadd.f32 %v2900, %v3188
  %v3253 = vadd.f32 %v2901, %v3189
  %v3254 = vadd.f32 %v2902, %v3190
  %v3255 = vadd.f32 %v2903, %v3191
  %v3256 = vadd.f32 %v2904, %v3192
  %v3257 = vadd.f32 %v2905, %v3193
  %v3258 = vadd.f32 %v2906, %v3194
  %v3259 = vadd.f32 %v2907, %v3195
  %v3260 = vadd.f32 %v2908, %v3196
  %v3261 = vadd.f32 %v2909, %v3197
  %v3262 = vld [vmem:[%s5] sm:$0xff]
  %v3263 = vld [vmem:[%s5 + $0x8] sm:$0xff]
  %v3264 = vld [vmem:[%s5 + $0x10] sm:$0xff]
  %v3265 = vld [vmem:[%s5 + $0x18] sm:$0xff]
  %vm3266 = vcmask 523264
  %v3268 = vsel %vm3266, %v3262, 0
  %v3271 = vsel %vm3266, %v3263, 0
  %v3274 = vsel %vm3266, %v3264, 0
  %v3277 = vsel %vm3266, %v3265, 0
  %3279 = vmatpush.msra.mxu0 0.0
  %3280 = vmatpush.msra.mxu0 0.0
  %3281 = vmatpush.msra.mxu0 0.0
  %3282 = vmatpush.msra.mxu0 0.0
  %3283 = vmatpush.msra.mxu0 0.0
  %3284 = vmatpush.msra.mxu0 0.0
  %3285 = vmatpush.msra.mxu0 0.0
  %3286 = vmatpush.msra.mxu0 0.0
  %3287 = vmatpush.msra.mxu0 %v2606
  %3288 = vmatpush.msra.mxu0 %v2590
  %3289 = vmatpush.msra.mxu0 %v2574
  %3290 = vmatpush.msra.mxu0 %v2558
  %3291 = vmatpush.msra.mxu0 %v2542
  %3292 = vmatpush.msra.mxu0 %v2526
  %3293 = vmatpush.msra.mxu0 %v2510
  %3294 = vmatpush.msra.mxu0 %v2494
  %3295 = vmatmul.f32.gmra.mxu0 %v3268
  %v3296 = vpop.f32.mrf.mxu0
  %v3297 = vadd.f32 0.0, %v3296
  %3298 = vmatmul.f32.gmra.mxu0 %v3271
  %v3299 = vpop.f32.mrf.mxu0
  %v3300 = vadd.f32 0.0, %v3299
  %3301 = vmatmul.f32.gmra.mxu0 %v3274
  %v3302 = vpop.f32.mrf.mxu0
  %v3303 = vadd.f32 0.0, %v3302
  %3304 = vmatmul.f32.gmra.mxu0 %v3277
  %v3305 = vpop.f32.mrf.mxu0
  %v3306 = vadd.f32 0.0, %v3305
  %3307 = vdwg.mxu0
  %3308 = vmatpush.msra.mxu0 0.0
  %3309 = vmatpush.msra.mxu0 0.0
  %3310 = vmatpush.msra.mxu0 0.0
  %3311 = vmatpush.msra.mxu0 0.0
  %3312 = vmatpush.msra.mxu0 0.0
  %3313 = vmatpush.msra.mxu0 0.0
  %3314 = vmatpush.msra.mxu0 0.0
  %3315 = vmatpush.msra.mxu0 0.0
  %3316 = vmatpush.msra.mxu0 %v2607
  %3317 = vmatpush.msra.mxu0 %v2591
  %3318 = vmatpush.msra.mxu0 %v2575
  %3319 = vmatpush.msra.mxu0 %v2559
  %3320 = vmatpush.msra.mxu0 %v2543
  %3321 = vmatpush.msra.mxu0 %v2527
  %3322 = vmatpush.msra.mxu0 %v2511
  %3323 = vmatpush.msra.mxu0 %v2495
  %3324 = vmatmul.f32.gmra.mxu0 %v3268
  %v3325 = vpop.f32.mrf.mxu0
  %v3326 = vadd.f32 0.0, %v3325
  %3327 = vmatmul.f32.gmra.mxu0 %v3271
  %v3328 = vpop.f32.mrf.mxu0
  %v3329 = vadd.f32 0.0, %v3328
  %3330 = vmatmul.f32.gmra.mxu0 %v3274
  %v3331 = vpop.f32.mrf.mxu0
  %v3332 = vadd.f32 0.0, %v3331
  %3333 = vmatmul.f32.gmra.mxu0 %v3277
  %v3334 = vpop.f32.mrf.mxu0
  %v3335 = vadd.f32 0.0, %v3334
  %3336 = vdwg.mxu0
  %3337 = vmatpush.msra.mxu0 0.0
  %3338 = vmatpush.msra.mxu0 0.0
  %3339 = vmatpush.msra.mxu0 0.0
  %3340 = vmatpush.msra.mxu0 0.0
  %3341 = vmatpush.msra.mxu0 0.0
  %3342 = vmatpush.msra.mxu0 0.0
  %3343 = vmatpush.msra.mxu0 0.0
  %3344 = vmatpush.msra.mxu0 0.0
  %3345 = vmatpush.msra.mxu0 %v2608
  %3346 = vmatpush.msra.mxu0 %v2592
  %3347 = vmatpush.msra.mxu0 %v2576
  %3348 = vmatpush.msra.mxu0 %v2560
  %3349 = vmatpush.msra.mxu0 %v2544
  %3350 = vmatpush.msra.mxu0 %v2528
  %3351 = vmatpush.msra.mxu0 %v2512
  %3352 = vmatpush.msra.mxu0 %v2496
  %3353 = vmatmul.f32.gmra.mxu0 %v3268
  %v3354 = vpop.f32.mrf.mxu0
  %v3355 = vadd.f32 0.0, %v3354
  %3356 = vmatmul.f32.gmra.mxu0 %v3271
  %v3357 = vpop.f32.mrf.mxu0
  %v3358 = vadd.f32 0.0, %v3357
  %3359 = vmatmul.f32.gmra.mxu0 %v3274
  %v3360 = vpop.f32.mrf.mxu0
  %v3361 = vadd.f32 0.0, %v3360
  %3362 = vmatmul.f32.gmra.mxu0 %v3277
  %v3363 = vpop.f32.mrf.mxu0
  %v3364 = vadd.f32 0.0, %v3363
  %3365 = vdwg.mxu0
  %3366 = vmatpush.msra.mxu0 0.0
  %3367 = vmatpush.msra.mxu0 0.0
  %3368 = vmatpush.msra.mxu0 0.0
  %3369 = vmatpush.msra.mxu0 0.0
  %3370 = vmatpush.msra.mxu0 0.0
  %3371 = vmatpush.msra.mxu0 0.0
  %3372 = vmatpush.msra.mxu0 0.0
  %3373 = vmatpush.msra.mxu0 0.0
  %3374 = vmatpush.msra.mxu0 %v2609
  %3375 = vmatpush.msra.mxu0 %v2593
  %3376 = vmatpush.msra.mxu0 %v2577
  %3377 = vmatpush.msra.mxu0 %v2561
  %3378 = vmatpush.msra.mxu0 %v2545
  %3379 = vmatpush.msra.mxu0 %v2529
  %3380 = vmatpush.msra.mxu0 %v2513
  %3381 = vmatpush.msra.mxu0 %v2497
  %3382 = vmatmul.f32.gmra.mxu0 %v3268
  %v3383 = vpop.f32.mrf.mxu0
  %v3384 = vadd.f32 0.0, %v3383
  %3385 = vmatmul.f32.gmra.mxu0 %v3271
  %v3386 = vpop.f32.mrf.mxu0
  %v3387 = vadd.f32 0.0, %v3386
  %3388 = vmatmul.f32.gmra.mxu0 %v3274
  %v3389 = vpop.f32.mrf.mxu0
  %v3390 = vadd.f32 0.0, %v3389
  %3391 = vmatmul.f32.gmra.mxu0 %v3277
  %v3392 = vpop.f32.mrf.mxu0
  %v3393 = vadd.f32 0.0, %v3392
  %3394 = vdwg.mxu0
  %3395 = vmatpush.msra.mxu0 0.0
  %3396 = vmatpush.msra.mxu0 0.0
  %3397 = vmatpush.msra.mxu0 0.0
  %3398 = vmatpush.msra.mxu0 0.0
  %3399 = vmatpush.msra.mxu0 0.0
  %3400 = vmatpush.msra.mxu0 0.0
  %3401 = vmatpush.msra.mxu0 0.0
  %3402 = vmatpush.msra.mxu0 0.0
  %3403 = vmatpush.msra.mxu0 %v2610
  %3404 = vmatpush.msra.mxu0 %v2594
  %3405 = vmatpush.msra.mxu0 %v2578
  %3406 = vmatpush.msra.mxu0 %v2562
  %3407 = vmatpush.msra.mxu0 %v2546
  %3408 = vmatpush.msra.mxu0 %v2530
  %3409 = vmatpush.msra.mxu0 %v2514
  %3410 = vmatpush.msra.mxu0 %v2498
  %3411 = vmatmul.f32.gmra.mxu0 %v3268
  %v3412 = vpop.f32.mrf.mxu0
  %v3413 = vadd.f32 0.0, %v3412
  %3414 = vmatmul.f32.gmra.mxu0 %v3271
  %v3415 = vpop.f32.mrf.mxu0
  %v3416 = vadd.f32 0.0, %v3415
  %3417 = vmatmul.f32.gmra.mxu0 %v3274
  %v3418 = vpop.f32.mrf.mxu0
  %v3419 = vadd.f32 0.0, %v3418
  %3420 = vmatmul.f32.gmra.mxu0 %v3277
  %v3421 = vpop.f32.mrf.mxu0
  %v3422 = vadd.f32 0.0, %v3421
  %3423 = vdwg.mxu0
  %3424 = vmatpush.msra.mxu0 0.0
  %3425 = vmatpush.msra.mxu0 0.0
  %3426 = vmatpush.msra.mxu0 0.0
  %3427 = vmatpush.msra.mxu0 0.0
  %3428 = vmatpush.msra.mxu0 0.0
  %3429 = vmatpush.msra.mxu0 0.0
  %3430 = vmatpush.msra.mxu0 0.0
  %3431 = vmatpush.msra.mxu0 0.0
  %3432 = vmatpush.msra.mxu0 %v2611
  %3433 = vmatpush.msra.mxu0 %v2595
  %3434 = vmatpush.msra.mxu0 %v2579
  %3435 = vmatpush.msra.mxu0 %v2563
  %3436 = vmatpush.msra.mxu0 %v2547
  %3437 = vmatpush.msra.mxu0 %v2531
  %3438 = vmatpush.msra.mxu0 %v2515
  %3439 = vmatpush.msra.mxu0 %v2499
  %3440 = vmatmul.f32.gmra.mxu0 %v3268
  %v3441 = vpop.f32.mrf.mxu0
  %v3442 = vadd.f32 0.0, %v3441
  %3443 = vmatmul.f32.gmra.mxu0 %v3271
  %v3444 = vpop.f32.mrf.mxu0
  %v3445 = vadd.f32 0.0, %v3444
  %3446 = vmatmul.f32.gmra.mxu0 %v3274
  %v3447 = vpop.f32.mrf.mxu0
  %v3448 = vadd.f32 0.0, %v3447
  %3449 = vmatmul.f32.gmra.mxu0 %v3277
  %v3450 = vpop.f32.mrf.mxu0
  %v3451 = vadd.f32 0.0, %v3450
  %3452 = vdwg.mxu0
  %3453 = vmatpush.msra.mxu0 0.0
  %3454 = vmatpush.msra.mxu0 0.0
  %3455 = vmatpush.msra.mxu0 0.0
  %3456 = vmatpush.msra.mxu0 0.0
  %3457 = vmatpush.msra.mxu0 0.0
  %3458 = vmatpush.msra.mxu0 0.0
  %3459 = vmatpush.msra.mxu0 0.0
  %3460 = vmatpush.msra.mxu0 0.0
  %3461 = vmatpush.msra.mxu0 %v2612
  %3462 = vmatpush.msra.mxu0 %v2596
  %3463 = vmatpush.msra.mxu0 %v2580
  %3464 = vmatpush.msra.mxu0 %v2564
  %3465 = vmatpush.msra.mxu0 %v2548
  %3466 = vmatpush.msra.mxu0 %v2532
  %3467 = vmatpush.msra.mxu0 %v2516
  %3468 = vmatpush.msra.mxu0 %v2500
  %3469 = vmatmul.f32.gmra.mxu0 %v3268
  %v3470 = vpop.f32.mrf.mxu0
  %v3471 = vadd.f32 0.0, %v3470
  %3472 = vmatmul.f32.gmra.mxu0 %v3271
  %v3473 = vpop.f32.mrf.mxu0
  %v3474 = vadd.f32 0.0, %v3473
  %3475 = vmatmul.f32.gmra.mxu0 %v3274
  %v3476 = vpop.f32.mrf.mxu0
  %v3477 = vadd.f32 0.0, %v3476
  %3478 = vmatmul.f32.gmra.mxu0 %v3277
  %v3479 = vpop.f32.mrf.mxu0
  %v3480 = vadd.f32 0.0, %v3479
  %3481 = vdwg.mxu0
  %3482 = vmatpush.msra.mxu0 0.0
  %3483 = vmatpush.msra.mxu0 0.0
  %3484 = vmatpush.msra.mxu0 0.0
  %3485 = vmatpush.msra.mxu0 0.0
  %3486 = vmatpush.msra.mxu0 0.0
  %3487 = vmatpush.msra.mxu0 0.0
  %3488 = vmatpush.msra.mxu0 0.0
  %3489 = vmatpush.msra.mxu0 0.0
  %3490 = vmatpush.msra.mxu0 %v2613
  %3491 = vmatpush.msra.mxu0 %v2597
  %3492 = vmatpush.msra.mxu0 %v2581
  %3493 = vmatpush.msra.mxu0 %v2565
  %3494 = vmatpush.msra.mxu0 %v2549
  %3495 = vmatpush.msra.mxu0 %v2533
  %3496 = vmatpush.msra.mxu0 %v2517
  %3497 = vmatpush.msra.mxu0 %v2501
  %3498 = vmatmul.f32.gmra.mxu0 %v3268
  %v3499 = vpop.f32.mrf.mxu0
  %v3500 = vadd.f32 0.0, %v3499
  %3501 = vmatmul.f32.gmra.mxu0 %v3271
  %v3502 = vpop.f32.mrf.mxu0
  %v3503 = vadd.f32 0.0, %v3502
  %3504 = vmatmul.f32.gmra.mxu0 %v3274
  %v3505 = vpop.f32.mrf.mxu0
  %v3506 = vadd.f32 0.0, %v3505
  %3507 = vmatmul.f32.gmra.mxu0 %v3277
  %v3508 = vpop.f32.mrf.mxu0
  %v3509 = vadd.f32 0.0, %v3508
  %3510 = vdwg.mxu0
  %3511 = vmatpush.msra.mxu0 0.0
  %3512 = vmatpush.msra.mxu0 0.0
  %3513 = vmatpush.msra.mxu0 0.0
  %3514 = vmatpush.msra.mxu0 0.0
  %3515 = vmatpush.msra.mxu0 0.0
  %3516 = vmatpush.msra.mxu0 0.0
  %3517 = vmatpush.msra.mxu0 0.0
  %3518 = vmatpush.msra.mxu0 0.0
  %3519 = vmatpush.msra.mxu0 %v2614
  %3520 = vmatpush.msra.mxu0 %v2598
  %3521 = vmatpush.msra.mxu0 %v2582
  %3522 = vmatpush.msra.mxu0 %v2566
  %3523 = vmatpush.msra.mxu0 %v2550
  %3524 = vmatpush.msra.mxu0 %v2534
  %3525 = vmatpush.msra.mxu0 %v2518
  %3526 = vmatpush.msra.mxu0 %v2502
  %3527 = vmatmul.f32.gmra.mxu0 %v3268
  %v3528 = vpop.f32.mrf.mxu0
  %v3529 = vadd.f32 0.0, %v3528
  %3530 = vmatmul.f32.gmra.mxu0 %v3271
  %v3531 = vpop.f32.mrf.mxu0
  %v3532 = vadd.f32 0.0, %v3531
  %3533 = vmatmul.f32.gmra.mxu0 %v3274
  %v3534 = vpop.f32.mrf.mxu0
  %v3535 = vadd.f32 0.0, %v3534
  %3536 = vmatmul.f32.gmra.mxu0 %v3277
  %v3537 = vpop.f32.mrf.mxu0
  %v3538 = vadd.f32 0.0, %v3537
  %3539 = vdwg.mxu0
  %3540 = vmatpush.msra.mxu0 0.0
  %3541 = vmatpush.msra.mxu0 0.0
  %3542 = vmatpush.msra.mxu0 0.0
  %3543 = vmatpush.msra.mxu0 0.0
  %3544 = vmatpush.msra.mxu0 0.0
  %3545 = vmatpush.msra.mxu0 0.0
  %3546 = vmatpush.msra.mxu0 0.0
  %3547 = vmatpush.msra.mxu0 0.0
  %3548 = vmatpush.msra.mxu0 %v2615
  %3549 = vmatpush.msra.mxu0 %v2599
  %3550 = vmatpush.msra.mxu0 %v2583
  %3551 = vmatpush.msra.mxu0 %v2567
  %3552 = vmatpush.msra.mxu0 %v2551
  %3553 = vmatpush.msra.mxu0 %v2535
  %3554 = vmatpush.msra.mxu0 %v2519
  %3555 = vmatpush.msra.mxu0 %v2503
  %3556 = vmatmul.f32.gmra.mxu0 %v3268
  %v3557 = vpop.f32.mrf.mxu0
  %v3558 = vadd.f32 0.0, %v3557
  %3559 = vmatmul.f32.gmra.mxu0 %v3271
  %v3560 = vpop.f32.mrf.mxu0
  %v3561 = vadd.f32 0.0, %v3560
  %3562 = vmatmul.f32.gmra.mxu0 %v3274
  %v3563 = vpop.f32.mrf.mxu0
  %v3564 = vadd.f32 0.0, %v3563
  %3565 = vmatmul.f32.gmra.mxu0 %v3277
  %v3566 = vpop.f32.mrf.mxu0
  %v3567 = vadd.f32 0.0, %v3566
  %3568 = vdwg.mxu0
  %3569 = vmatpush.msra.mxu0 0.0
  %3570 = vmatpush.msra.mxu0 0.0
  %3571 = vmatpush.msra.mxu0 0.0
  %3572 = vmatpush.msra.mxu0 0.0
  %3573 = vmatpush.msra.mxu0 0.0
  %3574 = vmatpush.msra.mxu0 0.0
  %3575 = vmatpush.msra.mxu0 0.0
  %3576 = vmatpush.msra.mxu0 0.0
  %3577 = vmatpush.msra.mxu0 %v2616
  %3578 = vmatpush.msra.mxu0 %v2600
  %3579 = vmatpush.msra.mxu0 %v2584
  %3580 = vmatpush.msra.mxu0 %v2568
  %3581 = vmatpush.msra.mxu0 %v2552
  %3582 = vmatpush.msra.mxu0 %v2536
  %3583 = vmatpush.msra.mxu0 %v2520
  %3584 = vmatpush.msra.mxu0 %v2504
  %3585 = vmatmul.f32.gmra.mxu0 %v3268
  %v3586 = vpop.f32.mrf.mxu0
  %v3587 = vadd.f32 0.0, %v3586
  %3588 = vmatmul.f32.gmra.mxu0 %v3271
  %v3589 = vpop.f32.mrf.mxu0
  %v3590 = vadd.f32 0.0, %v3589
  %3591 = vmatmul.f32.gmra.mxu0 %v3274
  %v3592 = vpop.f32.mrf.mxu0
  %v3593 = vadd.f32 0.0, %v3592
  %3594 = vmatmul.f32.gmra.mxu0 %v3277
  %v3595 = vpop.f32.mrf.mxu0
  %v3596 = vadd.f32 0.0, %v3595
  %3597 = vdwg.mxu0
  %3598 = vmatpush.msra.mxu0 0.0
  %3599 = vmatpush.msra.mxu0 0.0
  %3600 = vmatpush.msra.mxu0 0.0
  %3601 = vmatpush.msra.mxu0 0.0
  %3602 = vmatpush.msra.mxu0 0.0
  %3603 = vmatpush.msra.mxu0 0.0
  %3604 = vmatpush.msra.mxu0 0.0
  %3605 = vmatpush.msra.mxu0 0.0
  %3606 = vmatpush.msra.mxu0 %v2617
  %3607 = vmatpush.msra.mxu0 %v2601
  %3608 = vmatpush.msra.mxu0 %v2585
  %3609 = vmatpush.msra.mxu0 %v2569
  %3610 = vmatpush.msra.mxu0 %v2553
  %3611 = vmatpush.msra.mxu0 %v2537
  %3612 = vmatpush.msra.mxu0 %v2521
  %3613 = vmatpush.msra.mxu0 %v2505
  %3614 = vmatmul.f32.gmra.mxu0 %v3268
  %v3615 = vpop.f32.mrf.mxu0
  %v3616 = vadd.f32 0.0, %v3615
  %3617 = vmatmul.f32.gmra.mxu0 %v3271
  %v3618 = vpop.f32.mrf.mxu0
  %v3619 = vadd.f32 0.0, %v3618
  %3620 = vmatmul.f32.gmra.mxu0 %v3274
  %v3621 = vpop.f32.mrf.mxu0
  %v3622 = vadd.f32 0.0, %v3621
  %3623 = vmatmul.f32.gmra.mxu0 %v3277
  %v3624 = vpop.f32.mrf.mxu0
  %v3625 = vadd.f32 0.0, %v3624
  %3626 = vdwg.mxu0
  %3627 = vmatpush.msra.mxu0 0.0
  %3628 = vmatpush.msra.mxu0 0.0
  %3629 = vmatpush.msra.mxu0 0.0
  %3630 = vmatpush.msra.mxu0 0.0
  %3631 = vmatpush.msra.mxu0 0.0
  %3632 = vmatpush.msra.mxu0 0.0
  %3633 = vmatpush.msra.mxu0 0.0
  %3634 = vmatpush.msra.mxu0 0.0
  %3635 = vmatpush.msra.mxu0 %v2618
  %3636 = vmatpush.msra.mxu0 %v2602
  %3637 = vmatpush.msra.mxu0 %v2586
  %3638 = vmatpush.msra.mxu0 %v2570
  %3639 = vmatpush.msra.mxu0 %v2554
  %3640 = vmatpush.msra.mxu0 %v2538
  %3641 = vmatpush.msra.mxu0 %v2522
  %3642 = vmatpush.msra.mxu0 %v2506
  %3643 = vmatmul.f32.gmra.mxu0 %v3268
  %v3644 = vpop.f32.mrf.mxu0
  %v3645 = vadd.f32 0.0, %v3644
  %3646 = vmatmul.f32.gmra.mxu0 %v3271
  %v3647 = vpop.f32.mrf.mxu0
  %v3648 = vadd.f32 0.0, %v3647
  %3649 = vmatmul.f32.gmra.mxu0 %v3274
  %v3650 = vpop.f32.mrf.mxu0
  %v3651 = vadd.f32 0.0, %v3650
  %3652 = vmatmul.f32.gmra.mxu0 %v3277
  %v3653 = vpop.f32.mrf.mxu0
  %v3654 = vadd.f32 0.0, %v3653
  %3655 = vdwg.mxu0
  %3656 = vmatpush.msra.mxu0 0.0
  %3657 = vmatpush.msra.mxu0 0.0
  %3658 = vmatpush.msra.mxu0 0.0
  %3659 = vmatpush.msra.mxu0 0.0
  %3660 = vmatpush.msra.mxu0 0.0
  %3661 = vmatpush.msra.mxu0 0.0
  %3662 = vmatpush.msra.mxu0 0.0
  %3663 = vmatpush.msra.mxu0 0.0
  %3664 = vmatpush.msra.mxu0 %v2619
  %3665 = vmatpush.msra.mxu0 %v2603
  %3666 = vmatpush.msra.mxu0 %v2587
  %3667 = vmatpush.msra.mxu0 %v2571
  %3668 = vmatpush.msra.mxu0 %v2555
  %3669 = vmatpush.msra.mxu0 %v2539
  %3670 = vmatpush.msra.mxu0 %v2523
  %3671 = vmatpush.msra.mxu0 %v2507
  %3672 = vmatmul.f32.gmra.mxu0 %v3268
  %v3673 = vpop.f32.mrf.mxu0
  %v3674 = vadd.f32 0.0, %v3673
  %3675 = vmatmul.f32.gmra.mxu0 %v3271
  %v3676 = vpop.f32.mrf.mxu0
  %v3677 = vadd.f32 0.0, %v3676
  %3678 = vmatmul.f32.gmra.mxu0 %v3274
  %v3679 = vpop.f32.mrf.mxu0
  %v3680 = vadd.f32 0.0, %v3679
  %3681 = vmatmul.f32.gmra.mxu0 %v3277
  %v3682 = vpop.f32.mrf.mxu0
  %v3683 = vadd.f32 0.0, %v3682
  %3684 = vdwg.mxu0
  %3685 = vmatpush.msra.mxu0 0.0
  %3686 = vmatpush.msra.mxu0 0.0
  %3687 = vmatpush.msra.mxu0 0.0
  %3688 = vmatpush.msra.mxu0 0.0
  %3689 = vmatpush.msra.mxu0 0.0
  %3690 = vmatpush.msra.mxu0 0.0
  %3691 = vmatpush.msra.mxu0 0.0
  %3692 = vmatpush.msra.mxu0 0.0
  %3693 = vmatpush.msra.mxu0 %v2620
  %3694 = vmatpush.msra.mxu0 %v2604
  %3695 = vmatpush.msra.mxu0 %v2588
  %3696 = vmatpush.msra.mxu0 %v2572
  %3697 = vmatpush.msra.mxu0 %v2556
  %3698 = vmatpush.msra.mxu0 %v2540
  %3699 = vmatpush.msra.mxu0 %v2524
  %3700 = vmatpush.msra.mxu0 %v2508
  %3701 = vmatmul.f32.gmra.mxu0 %v3268
  %v3702 = vpop.f32.mrf.mxu0
  %v3703 = vadd.f32 0.0, %v3702
  %3704 = vmatmul.f32.gmra.mxu0 %v3271
  %v3705 = vpop.f32.mrf.mxu0
  %v3706 = vadd.f32 0.0, %v3705
  %3707 = vmatmul.f32.gmra.mxu0 %v3274
  %v3708 = vpop.f32.mrf.mxu0
  %v3709 = vadd.f32 0.0, %v3708
  %3710 = vmatmul.f32.gmra.mxu0 %v3277
  %v3711 = vpop.f32.mrf.mxu0
  %v3712 = vadd.f32 0.0, %v3711
  %3713 = vdwg.mxu0
  %3714 = vmatpush.msra.mxu0 0.0
  %3715 = vmatpush.msra.mxu0 0.0
  %3716 = vmatpush.msra.mxu0 0.0
  %3717 = vmatpush.msra.mxu0 0.0
  %3718 = vmatpush.msra.mxu0 0.0
  %3719 = vmatpush.msra.mxu0 0.0
  %3720 = vmatpush.msra.mxu0 0.0
  %3721 = vmatpush.msra.mxu0 0.0
  %3722 = vmatpush.msra.mxu0 %v2621
  %3723 = vmatpush.msra.mxu0 %v2605
  %3724 = vmatpush.msra.mxu0 %v2589
  %3725 = vmatpush.msra.mxu0 %v2573
  %3726 = vmatpush.msra.mxu0 %v2557
  %3727 = vmatpush.msra.mxu0 %v2541
  %3728 = vmatpush.msra.mxu0 %v2525
  %3729 = vmatpush.msra.mxu0 %v2509
  %3730 = vmatmul.f32.gmra.mxu0 %v3268
  %v3731 = vpop.f32.mrf.mxu0
  %v3732 = vadd.f32 0.0, %v3731
  %3733 = vmatmul.f32.gmra.mxu0 %v3271
  %v3734 = vpop.f32.mrf.mxu0
  %v3735 = vadd.f32 0.0, %v3734
  %3736 = vmatmul.f32.gmra.mxu0 %v3274
  %v3737 = vpop.f32.mrf.mxu0
  %v3738 = vadd.f32 0.0, %v3737
  %3739 = vmatmul.f32.gmra.mxu0 %v3277
  %v3740 = vpop.f32.mrf.mxu0
  %v3741 = vadd.f32 0.0, %v3740
  %3742 = vdwg.mxu0
  %v3743 = vmul.f32 %v3297, %v3198
  %v3744 = vmul.f32 %v3326, %v3199
  %v3745 = vmul.f32 %v3355, %v3200
  %v3746 = vmul.f32 %v3384, %v3201
  %v3747 = vmul.f32 %v3413, %v3202
  %v3748 = vmul.f32 %v3442, %v3203
  %v3749 = vmul.f32 %v3471, %v3204
  %v3750 = vmul.f32 %v3500, %v3205
  %v3751 = vmul.f32 %v3529, %v3206
  %v3752 = vmul.f32 %v3558, %v3207
  %v3753 = vmul.f32 %v3587, %v3208
  %v3754 = vmul.f32 %v3616, %v3209
  %v3755 = vmul.f32 %v3645, %v3210
  %v3756 = vmul.f32 %v3674, %v3211
  %v3757 = vmul.f32 %v3703, %v3212
  %v3758 = vmul.f32 %v3732, %v3213
  %v3759 = vmul.f32 %v3300, %v3214
  %v3760 = vmul.f32 %v3329, %v3215
  %v3761 = vmul.f32 %v3358, %v3216
  %v3762 = vmul.f32 %v3387, %v3217
  %v3763 = vmul.f32 %v3416, %v3218
  %v3764 = vmul.f32 %v3445, %v3219
  %v3765 = vmul.f32 %v3474, %v3220
  %v3766 = vmul.f32 %v3503, %v3221
  %v3767 = vmul.f32 %v3532, %v3222
  %v3768 = vmul.f32 %v3561, %v3223
  %v3769 = vmul.f32 %v3590, %v3224
  %v3770 = vmul.f32 %v3619, %v3225
  %v3771 = vmul.f32 %v3648, %v3226
  %v3772 = vmul.f32 %v3677, %v3227
  %v3773 = vmul.f32 %v3706, %v3228
  %v3774 = vmul.f32 %v3735, %v3229
  %v3775 = vmul.f32 %v3303, %v3230
  %v3776 = vmul.f32 %v3332, %v3231
  %v3777 = vmul.f32 %v3361, %v3232
  %v3778 = vmul.f32 %v3390, %v3233
  %v3779 = vmul.f32 %v3419, %v3234
  %v3780 = vmul.f32 %v3448, %v3235
  %v3781 = vmul.f32 %v3477, %v3236
  %v3782 = vmul.f32 %v3506, %v3237
  %v3783 = vmul.f32 %v3535, %v3238
  %v3784 = vmul.f32 %v3564, %v3239
  %v3785 = vmul.f32 %v3593, %v3240
  %v3786 = vmul.f32 %v3622, %v3241
  %v3787 = vmul.f32 %v3651, %v3242
  %v3788 = vmul.f32 %v3680, %v3243
  %v3789 = vmul.f32 %v3709, %v3244
  %v3790 = vmul.f32 %v3738, %v3245
  %v3791 = vmul.f32 %v3306, %v3246
  %v3792 = vmul.f32 %v3335, %v3247
  %v3793 = vmul.f32 %v3364, %v3248
  %v3794 = vmul.f32 %v3393, %v3249
  %v3795 = vmul.f32 %v3422, %v3250
  %v3796 = vmul.f32 %v3451, %v3251
  %v3797 = vmul.f32 %v3480, %v3252
  %v3798 = vmul.f32 %v3509, %v3253
  %v3799 = vmul.f32 %v3538, %v3254
  %v3800 = vmul.f32 %v3567, %v3255
  %v3801 = vmul.f32 %v3596, %v3256
  %v3802 = vmul.f32 %v3625, %v3257
  %v3803 = vmul.f32 %v3654, %v3258
  %v3804 = vmul.f32 %v3683, %v3259
  %v3805 = vmul.f32 %v3712, %v3260
  %v3806 = vmul.f32 %v3741, %v3261
  %v3808 = vsel %vm77, 1.0, 0
  %3810 = vmatpush.msra.mxu0 0.0
  %3811 = vmatpush.msra.mxu0 0.0
  %3812 = vmatpush.msra.mxu0 0.0
  %3813 = vmatpush.msra.mxu0 0.0
  %3814 = vmatpush.msra.mxu0 0.0
  %3815 = vmatpush.msra.mxu0 0.0
  %3816 = vmatpush.msra.mxu0 0.0
  %3817 = vmatpush.msra.mxu0 0.0
  %3818 = vmatpush.msra.mxu0 0.0
  %3819 = vmatpush.msra.mxu0 0.0
  %3820 = vmatpush.msra.mxu0 0.0
  %3821 = vmatpush.msra.mxu0 0.0
  %3822 = vmatpush.msra.mxu0 %v3791
  %3823 = vmatpush.msra.mxu0 %v3775
  %3824 = vmatpush.msra.mxu0 %v3759
  %3825 = vmatpush.msra.mxu0 %v3743
  %3826 = vmatmul.f32.gmra.mxu0 %v3808
  %v3827 = vpop.f32.mrf.mxu0
  %v3828 = vadd.f32 0.0, %v3827
  %3829 = vdwg.mxu0
  %3830 = vmatpush.msra.mxu0 0.0
  %3831 = vmatpush.msra.mxu0 0.0
  %3832 = vmatpush.msra.mxu0 0.0
  %3833 = vmatpush.msra.mxu0 0.0
  %3834 = vmatpush.msra.mxu0 0.0
  %3835 = vmatpush.msra.mxu0 0.0
  %3836 = vmatpush.msra.mxu0 0.0
  %3837 = vmatpush.msra.mxu0 0.0
  %3838 = vmatpush.msra.mxu0 0.0
  %3839 = vmatpush.msra.mxu0 0.0
  %3840 = vmatpush.msra.mxu0 0.0
  %3841 = vmatpush.msra.mxu0 0.0
  %3842 = vmatpush.msra.mxu0 %v3792
  %3843 = vmatpush.msra.mxu0 %v3776
  %3844 = vmatpush.msra.mxu0 %v3760
  %3845 = vmatpush.msra.mxu0 %v3744
  %3846 = vmatmul.f32.gmra.mxu0 %v3808
  %v3847 = vpop.f32.mrf.mxu0
  %v3848 = vadd.f32 0.0, %v3847
  %3849 = vdwg.mxu0
  %3850 = vmatpush.msra.mxu0 0.0
  %3851 = vmatpush.msra.mxu0 0.0
  %3852 = vmatpush.msra.mxu0 0.0
  %3853 = vmatpush.msra.mxu0 0.0
  %3854 = vmatpush.msra.mxu0 0.0
  %3855 = vmatpush.msra.mxu0 0.0
  %3856 = vmatpush.msra.mxu0 0.0
  %3857 = vmatpush.msra.mxu0 0.0
  %3858 = vmatpush.msra.mxu0 0.0
  %3859 = vmatpush.msra.mxu0 0.0
  %3860 = vmatpush.msra.mxu0 0.0
  %3861 = vmatpush.msra.mxu0 0.0
  %3862 = vmatpush.msra.mxu0 %v3793
  %3863 = vmatpush.msra.mxu0 %v3777
  %3864 = vmatpush.msra.mxu0 %v3761
  %3865 = vmatpush.msra.mxu0 %v3745
  %3866 = vmatmul.f32.gmra.mxu0 %v3808
  %v3867 = vpop.f32.mrf.mxu0
  %v3868 = vadd.f32 0.0, %v3867
  %3869 = vdwg.mxu0
  %3870 = vmatpush.msra.mxu0 0.0
  %3871 = vmatpush.msra.mxu0 0.0
  %3872 = vmatpush.msra.mxu0 0.0
  %3873 = vmatpush.msra.mxu0 0.0
  %3874 = vmatpush.msra.mxu0 0.0
  %3875 = vmatpush.msra.mxu0 0.0
  %3876 = vmatpush.msra.mxu0 0.0
  %3877 = vmatpush.msra.mxu0 0.0
  %3878 = vmatpush.msra.mxu0 0.0
  %3879 = vmatpush.msra.mxu0 0.0
  %3880 = vmatpush.msra.mxu0 0.0
  %3881 = vmatpush.msra.mxu0 0.0
  %3882 = vmatpush.msra.mxu0 %v3794
  %3883 = vmatpush.msra.mxu0 %v3778
  %3884 = vmatpush.msra.mxu0 %v3762
  %3885 = vmatpush.msra.mxu0 %v3746
  %3886 = vmatmul.f32.gmra.mxu0 %v3808
  %v3887 = vpop.f32.mrf.mxu0
  %v3888 = vadd.f32 0.0, %v3887
  %3889 = vdwg.mxu0
  %3890 = vmatpush.msra.mxu0 0.0
  %3891 = vmatpush.msra.mxu0 0.0
  %3892 = vmatpush.msra.mxu0 0.0
  %3893 = vmatpush.msra.mxu0 0.0
  %3894 = vmatpush.msra.mxu0 0.0
  %3895 = vmatpush.msra.mxu0 0.0
  %3896 = vmatpush.msra.mxu0 0.0
  %3897 = vmatpush.msra.mxu0 0.0
  %3898 = vmatpush.msra.mxu0 0.0
  %3899 = vmatpush.msra.mxu0 0.0
  %3900 = vmatpush.msra.mxu0 0.0
  %3901 = vmatpush.msra.mxu0 0.0
  %3902 = vmatpush.msra.mxu0 %v3795
  %3903 = vmatpush.msra.mxu0 %v3779
  %3904 = vmatpush.msra.mxu0 %v3763
  %3905 = vmatpush.msra.mxu0 %v3747
  %3906 = vmatmul.f32.gmra.mxu0 %v3808
  %v3907 = vpop.f32.mrf.mxu0
  %v3908 = vadd.f32 0.0, %v3907
  %3909 = vdwg.mxu0
  %3910 = vmatpush.msra.mxu0 0.0
  %3911 = vmatpush.msra.mxu0 0.0
  %3912 = vmatpush.msra.mxu0 0.0
  %3913 = vmatpush.msra.mxu0 0.0
  %3914 = vmatpush.msra.mxu0 0.0
  %3915 = vmatpush.msra.mxu0 0.0
  %3916 = vmatpush.msra.mxu0 0.0
  %3917 = vmatpush.msra.mxu0 0.0
  %3918 = vmatpush.msra.mxu0 0.0
  %3919 = vmatpush.msra.mxu0 0.0
  %3920 = vmatpush.msra.mxu0 0.0
  %3921 = vmatpush.msra.mxu0 0.0
  %3922 = vmatpush.msra.mxu0 %v3796
  %3923 = vmatpush.msra.mxu0 %v3780
  %3924 = vmatpush.msra.mxu0 %v3764
  %3925 = vmatpush.msra.mxu0 %v3748
  %3926 = vmatmul.f32.gmra.mxu0 %v3808
  %v3927 = vpop.f32.mrf.mxu0
  %v3928 = vadd.f32 0.0, %v3927
  %3929 = vdwg.mxu0
  %3930 = vmatpush.msra.mxu0 0.0
  %3931 = vmatpush.msra.mxu0 0.0
  %3932 = vmatpush.msra.mxu0 0.0
  %3933 = vmatpush.msra.mxu0 0.0
  %3934 = vmatpush.msra.mxu0 0.0
  %3935 = vmatpush.msra.mxu0 0.0
  %3936 = vmatpush.msra.mxu0 0.0
  %3937 = vmatpush.msra.mxu0 0.0
  %3938 = vmatpush.msra.mxu0 0.0
  %3939 = vmatpush.msra.mxu0 0.0
  %3940 = vmatpush.msra.mxu0 0.0
  %3941 = vmatpush.msra.mxu0 0.0
  %3942 = vmatpush.msra.mxu0 %v3797
  %3943 = vmatpush.msra.mxu0 %v3781
  %3944 = vmatpush.msra.mxu0 %v3765
  %3945 = vmatpush.msra.mxu0 %v3749
  %3946 = vmatmul.f32.gmra.mxu0 %v3808
  %v3947 = vpop.f32.mrf.mxu0
  %v3948 = vadd.f32 0.0, %v3947
  %3949 = vdwg.mxu0
  %3950 = vmatpush.msra.mxu0 0.0
  %3951 = vmatpush.msra.mxu0 0.0
  %3952 = vmatpush.msra.mxu0 0.0
  %3953 = vmatpush.msra.mxu0 0.0
  %3954 = vmatpush.msra.mxu0 0.0
  %3955 = vmatpush.msra.mxu0 0.0
  %3956 = vmatpush.msra.mxu0 0.0
  %3957 = vmatpush.msra.mxu0 0.0
  %3958 = vmatpush.msra.mxu0 0.0
  %3959 = vmatpush.msra.mxu0 0.0
  %3960 = vmatpush.msra.mxu0 0.0
  %3961 = vmatpush.msra.mxu0 0.0
  %3962 = vmatpush.msra.mxu0 %v3798
  %3963 = vmatpush.msra.mxu0 %v3782
  %3964 = vmatpush.msra.mxu0 %v3766
  %3965 = vmatpush.msra.mxu0 %v3750
  %3966 = vmatmul.f32.gmra.mxu0 %v3808
  %v3967 = vpop.f32.mrf.mxu0
  %v3968 = vadd.f32 0.0, %v3967
  %3969 = vdwg.mxu0
  %3970 = vmatpush.msra.mxu0 0.0
  %3971 = vmatpush.msra.mxu0 0.0
  %3972 = vmatpush.msra.mxu0 0.0
  %3973 = vmatpush.msra.mxu0 0.0
  %3974 = vmatpush.msra.mxu0 0.0
  %3975 = vmatpush.msra.mxu0 0.0
  %3976 = vmatpush.msra.mxu0 0.0
  %3977 = vmatpush.msra.mxu0 0.0
  %3978 = vmatpush.msra.mxu0 0.0
  %3979 = vmatpush.msra.mxu0 0.0
  %3980 = vmatpush.msra.mxu0 0.0
  %3981 = vmatpush.msra.mxu0 0.0
  %3982 = vmatpush.msra.mxu0 %v3799
  %3983 = vmatpush.msra.mxu0 %v3783
  %3984 = vmatpush.msra.mxu0 %v3767
  %3985 = vmatpush.msra.mxu0 %v3751
  %3986 = vmatmul.f32.gmra.mxu0 %v3808
  %v3987 = vpop.f32.mrf.mxu0
  %v3988 = vadd.f32 0.0, %v3987
  %3989 = vdwg.mxu0
  %3990 = vmatpush.msra.mxu0 0.0
  %3991 = vmatpush.msra.mxu0 0.0
  %3992 = vmatpush.msra.mxu0 0.0
  %3993 = vmatpush.msra.mxu0 0.0
  %3994 = vmatpush.msra.mxu0 0.0
  %3995 = vmatpush.msra.mxu0 0.0
  %3996 = vmatpush.msra.mxu0 0.0
  %3997 = vmatpush.msra.mxu0 0.0
  %3998 = vmatpush.msra.mxu0 0.0
  %3999 = vmatpush.msra.mxu0 0.0
  %4000 = vmatpush.msra.mxu0 0.0
  %4001 = vmatpush.msra.mxu0 0.0
  %4002 = vmatpush.msra.mxu0 %v3800
  %4003 = vmatpush.msra.mxu0 %v3784
  %4004 = vmatpush.msra.mxu0 %v3768
  %4005 = vmatpush.msra.mxu0 %v3752
  %4006 = vmatmul.f32.gmra.mxu0 %v3808
  %v4007 = vpop.f32.mrf.mxu0
  %v4008 = vadd.f32 0.0, %v4007
  %4009 = vdwg.mxu0
  %4010 = vmatpush.msra.mxu0 0.0
  %4011 = vmatpush.msra.mxu0 0.0
  %4012 = vmatpush.msra.mxu0 0.0
  %4013 = vmatpush.msra.mxu0 0.0
  %4014 = vmatpush.msra.mxu0 0.0
  %4015 = vmatpush.msra.mxu0 0.0
  %4016 = vmatpush.msra.mxu0 0.0
  %4017 = vmatpush.msra.mxu0 0.0
  %4018 = vmatpush.msra.mxu0 0.0
  %4019 = vmatpush.msra.mxu0 0.0
  %4020 = vmatpush.msra.mxu0 0.0
  %4021 = vmatpush.msra.mxu0 0.0
  %4022 = vmatpush.msra.mxu0 %v3801
  %4023 = vmatpush.msra.mxu0 %v3785
  %4024 = vmatpush.msra.mxu0 %v3769
  %4025 = vmatpush.msra.mxu0 %v3753
  %4026 = vmatmul.f32.gmra.mxu0 %v3808
  %v4027 = vpop.f32.mrf.mxu0
  %v4028 = vadd.f32 0.0, %v4027
  %4029 = vdwg.mxu0
  %4030 = vmatpush.msra.mxu0 0.0
  %4031 = vmatpush.msra.mxu0 0.0
  %4032 = vmatpush.msra.mxu0 0.0
  %4033 = vmatpush.msra.mxu0 0.0
  %4034 = vmatpush.msra.mxu0 0.0
  %4035 = vmatpush.msra.mxu0 0.0
  %4036 = vmatpush.msra.mxu0 0.0
  %4037 = vmatpush.msra.mxu0 0.0
  %4038 = vmatpush.msra.mxu0 0.0
  %4039 = vmatpush.msra.mxu0 0.0
  %4040 = vmatpush.msra.mxu0 0.0
  %4041 = vmatpush.msra.mxu0 0.0
  %4042 = vmatpush.msra.mxu0 %v3802
  %4043 = vmatpush.msra.mxu0 %v3786
  %4044 = vmatpush.msra.mxu0 %v3770
  %4045 = vmatpush.msra.mxu0 %v3754
  %4046 = vmatmul.f32.gmra.mxu0 %v3808
  %v4047 = vpop.f32.mrf.mxu0
  %v4048 = vadd.f32 0.0, %v4047
  %4049 = vdwg.mxu0
  %4050 = vmatpush.msra.mxu0 0.0
  %4051 = vmatpush.msra.mxu0 0.0
  %4052 = vmatpush.msra.mxu0 0.0
  %4053 = vmatpush.msra.mxu0 0.0
  %4054 = vmatpush.msra.mxu0 0.0
  %4055 = vmatpush.msra.mxu0 0.0
  %4056 = vmatpush.msra.mxu0 0.0
  %4057 = vmatpush.msra.mxu0 0.0
  %4058 = vmatpush.msra.mxu0 0.0
  %4059 = vmatpush.msra.mxu0 0.0
  %4060 = vmatpush.msra.mxu0 0.0
  %4061 = vmatpush.msra.mxu0 0.0
  %4062 = vmatpush.msra.mxu0 %v3803
  %4063 = vmatpush.msra.mxu0 %v3787
  %4064 = vmatpush.msra.mxu0 %v3771
  %4065 = vmatpush.msra.mxu0 %v3755
  %4066 = vmatmul.f32.gmra.mxu0 %v3808
  %v4067 = vpop.f32.mrf.mxu0
  %v4068 = vadd.f32 0.0, %v4067
  %4069 = vdwg.mxu0
  %4070 = vmatpush.msra.mxu0 0.0
  %4071 = vmatpush.msra.mxu0 0.0
  %4072 = vmatpush.msra.mxu0 0.0
  %4073 = vmatpush.msra.mxu0 0.0
  %4074 = vmatpush.msra.mxu0 0.0
  %4075 = vmatpush.msra.mxu0 0.0
  %4076 = vmatpush.msra.mxu0 0.0
  %4077 = vmatpush.msra.mxu0 0.0
  %4078 = vmatpush.msra.mxu0 0.0
  %4079 = vmatpush.msra.mxu0 0.0
  %4080 = vmatpush.msra.mxu0 0.0
  %4081 = vmatpush.msra.mxu0 0.0
  %4082 = vmatpush.msra.mxu0 %v3804
  %4083 = vmatpush.msra.mxu0 %v3788
  %4084 = vmatpush.msra.mxu0 %v3772
  %4085 = vmatpush.msra.mxu0 %v3756
  %4086 = vmatmul.f32.gmra.mxu0 %v3808
  %v4087 = vpop.f32.mrf.mxu0
  %v4088 = vadd.f32 0.0, %v4087
  %4089 = vdwg.mxu0
  %4090 = vmatpush.msra.mxu0 0.0
  %4091 = vmatpush.msra.mxu0 0.0
  %4092 = vmatpush.msra.mxu0 0.0
  %4093 = vmatpush.msra.mxu0 0.0
  %4094 = vmatpush.msra.mxu0 0.0
  %4095 = vmatpush.msra.mxu0 0.0
  %4096 = vmatpush.msra.mxu0 0.0
  %4097 = vmatpush.msra.mxu0 0.0
  %4098 = vmatpush.msra.mxu0 0.0
  %4099 = vmatpush.msra.mxu0 0.0
  %4100 = vmatpush.msra.mxu0 0.0
  %4101 = vmatpush.msra.mxu0 0.0
  %4102 = vmatpush.msra.mxu0 %v3805
  %4103 = vmatpush.msra.mxu0 %v3789
  %4104 = vmatpush.msra.mxu0 %v3773
  %4105 = vmatpush.msra.mxu0 %v3757
  %4106 = vmatmul.f32.gmra.mxu0 %v3808
  %v4107 = vpop.f32.mrf.mxu0
  %v4108 = vadd.f32 0.0, %v4107
  %4109 = vdwg.mxu0
  %4110 = vmatpush.msra.mxu0 0.0
  %4111 = vmatpush.msra.mxu0 0.0
  %4112 = vmatpush.msra.mxu0 0.0
  %4113 = vmatpush.msra.mxu0 0.0
  %4114 = vmatpush.msra.mxu0 0.0
  %4115 = vmatpush.msra.mxu0 0.0
  %4116 = vmatpush.msra.mxu0 0.0
  %4117 = vmatpush.msra.mxu0 0.0
  %4118 = vmatpush.msra.mxu0 0.0
  %4119 = vmatpush.msra.mxu0 0.0
  %4120 = vmatpush.msra.mxu0 0.0
  %4121 = vmatpush.msra.mxu0 0.0
  %4122 = vmatpush.msra.mxu0 %v3806
  %4123 = vmatpush.msra.mxu0 %v3790
  %4124 = vmatpush.msra.mxu0 %v3774
  %4125 = vmatpush.msra.mxu0 %v3758
  %4126 = vmatmul.f32.gmra.mxu0 %v3808
  %v4127 = vpop.f32.mrf.mxu0
  %v4128 = vadd.f32 0.0, %v4127
  %4129 = vdwg.mxu0
  %v4146 = vrot.slane %v3848, 7
  %v4147 = vrot.slane %v3868, 6
  %v4148 = vrot.slane %v3888, 5
  %v4149 = vrot.slane %v3908, 4
  %v4150 = vrot.slane %v3928, 3
  %v4151 = vrot.slane %v3948, 2
  %v4152 = vrot.slane %v3968, 1
  %v4153 = vrot.slane %v4008, 7
  %v4154 = vrot.slane %v4028, 6
  %v4155 = vrot.slane %v4048, 5
  %v4156 = vrot.slane %v4068, 4
  %v4157 = vrot.slane %v4088, 3
  %v4158 = vrot.slane %v4108, 2
  %v4159 = vrot.slane %v4128, 1
  %vm4160 = vcmask 1040384
  %v4161 = vsel %vm4160, %v3828, %v4146
  %vm4162 = vcmask 1042434
  %v4163 = vsel %vm4162, %v4147, %v4148
  %v4164 = vsel %vm486, %v4161, %v4163
  %vm4165 = vcmask 1044484
  %v4166 = vsel %vm4165, %v4149, %v4150
  %vm4167 = vcmask 1046534
  %v4168 = vsel %vm4167, %v4151, %v4152
  %vm4169 = vcmask 1045508
  %v4170 = vsel %vm4169, %v4166, %v4168
  %vm4171 = vcmask 1043456
  %v4172 = vsel %vm4171, %v4164, %v4170
  %v4173 = vsel %vm4160, %v3988, %v4153
  %v4174 = vsel %vm4162, %v4154, %v4155
  %v4175 = vsel %vm486, %v4173, %v4174
  %v4176 = vsel %vm4165, %v4156, %v4157
  %v4177 = vsel %vm4167, %v4158, %v4159
  %v4178 = vsel %vm4169, %v4176, %v4177
  %v4179 = vsel %vm4171, %v4175, %v4178
  %4182 = vst [vmem:[%s6] sm:$0xff] %v4172
  %4183 = vst [vmem:[%s6 + $0x8] sm:$0xff] %v4179
  // Predicated region
  $region26: #{spatial_transformer_forward.5} parent=0 // pred_check
    _
  $region27: #{spatial_transformer_forward.5} parent=0 // pred_check_branch
    %4185 = sbr.rel (0) target = $region29
  $region28: #{spatial_transformer_forward.5} parent=0 // pred_region
    _
  $region29: #{spatial_transformer_forward.5} parent=0 // pred_fallthru
    _
  // Predicated region
  $region30: #{spatial_transformer_forward.5} parent=0 // pred_check
    _
  $region31: #{spatial_transformer_forward.5} parent=0 // pred_check_branch
    %4187 = sbr.rel (0) target = $region33
  $region32: #{spatial_transformer_forward.5} parent=0 // pred_region
    _
  $region33: #{spatial_transformer_forward.5} parent=0 // pred_fallthru
    _
  // Predicated region
  $region34: #{spatial_transformer_forward.5} parent=0 // pred_check
    _
  $region35: #{spatial_transformer_forward.5} parent=0 // pred_check_branch
    %4189 = sbr.rel (0) target = $region37
  $region36: #{spatial_transformer_forward.5} parent=0 // pred_region
    _
  $region37: #{spatial_transformer_forward.5} parent=0 // pred_fallthru
    _
  // Predicated region
  $region38: #{spatial_transformer_forward.5} parent=0 // pred_check
    _
  $region39: #{spatial_transformer_forward.5} parent=0 // pred_check_branch
    %4191 = sbr.rel (0) target = $region41
  $region40: #{spatial_transformer_forward.5} parent=0 // pred_region
    _
  $region41: #{spatial_transformer_forward.5} parent=0 // pred_fallthru
    _

</llo_original>
